<compile_context>
chip_gen: v6e
topology: v6e:2x2x1
jax: 0.10.0
libtpu: 0.0.40
codegen_flags: <defaults>
</compile_context>

<pallas_src>
import functools

import jax
import jax.numpy as jnp
from jax import lax
from jax.experimental import pallas as pl
from jax.experimental.pallas import tpu as pltpu


def _round_up(a: int, b: int) -> int:
    return ((a + b - 1) // b) * b


# ---------------------------------------------------------------------------
# Prologue: sigma_sq = softplus(rho)**2 (numerically stable), one shot.
# VCL weight matrices are MLP-sized (a few MB at most) so a single block fits
# comfortably in VMEM.
# TODO(synk): tile this prologue if the weights ever exceed VMEM.
# ---------------------------------------------------------------------------
def _sigma_sq_kernel(rho_main_ref, rho_bias_ref, ssq_main_ref, ssq_bias_ref):
    def softplus_sq(rho):
        sp = jnp.maximum(rho, 0.0) + jnp.log1p(jnp.exp(-jnp.abs(rho)))
        return sp * sp

    ssq_main_ref[...] = softplus_sq(rho_main_ref[...])
    ssq_bias_ref[...] = softplus_sq(rho_bias_ref[...])


def _compute_sigma_sq(rho_main, rho_bias):
    return pl.pallas_call(
        _sigma_sq_kernel,
        out_shape=(
            jax.ShapeDtypeStruct(rho_main.shape, jnp.float32),
            jax.ShapeDtypeStruct(rho_bias.shape, jnp.float32),
        ),
        in_specs=[
            pl.BlockSpec(rho_main.shape, lambda: (0, 0)),
            pl.BlockSpec(rho_bias.shape, lambda: (0, 0)),
        ],
        out_specs=(
            pl.BlockSpec(rho_main.shape, lambda: (0, 0)),
            pl.BlockSpec(rho_bias.shape, lambda: (0, 0)),
        ),
        compiler_params=pltpu.CompilerParams(vmem_limit_bytes=48 << 20),
    )(rho_main, rho_bias)


# ---------------------------------------------------------------------------
# Main kernels: tiled (B, O, K) matmuls with f32 accumulators.
# ---------------------------------------------------------------------------
def _vl_train_kernel(x_ref, wmu_ref, ssq_ref, mub_ref, ssqb_ref, eps_ref,
                     out_ref, acc_mean, acc_var):
    k = pl.program_id(2)

    @pl.when(k == 0)
    def _():
        acc_mean[...] = jnp.zeros_like(acc_mean)
        acc_var[...] = jnp.zeros_like(acc_var)

    x = x_ref[...]                                     # (tm, tk), shared load
    contract = (((1,), (1,)), ((), ()))                # 'bf,of->bo'
    acc_mean[...] += lax.dot_general(
        x, wmu_ref[...], contract, preferred_element_type=jnp.float32)
    acc_var[...] += lax.dot_general(
        x * x, ssq_ref[...], contract, preferred_element_type=jnp.float32)

    @pl.when(k == pl.num_programs(2) - 1)
    def _():
        mean = acc_mean[...] + mub_ref[...]            # + bias column of W_mu
        var = acc_var[...] + ssqb_ref[...] + 1e-16     # + bias column of sigma^2
        out_ref[...] = (mean + jnp.sqrt(var) * eps_ref[...]).astype(out_ref.dtype)


def _vl_eval_kernel(x_ref, wmu_ref, mub_ref, out_ref, acc_mean):
    k = pl.program_id(2)

    @pl.when(k == 0)
    def _():
        acc_mean[...] = jnp.zeros_like(acc_mean)

    acc_mean[...] += lax.dot_general(
        x_ref[...], wmu_ref[...], (((1,), (1,)), ((), ())),
        preferred_element_type=jnp.float32)

    @pl.when(k == pl.num_programs(2) - 1)
    def _():
        out_ref[...] = (acc_mean[...] + mub_ref[...]).astype(out_ref.dtype)


# ---------------------------------------------------------------------------
# Wrapper: padding, bias-column split, tile selection, pallas_call.
# ---------------------------------------------------------------------------
@functools.partial(jax.jit, static_argnames=("training",))
def variational_linear_forward(x, w_mu, w_rho, eps=None, *, training=True):
    """x: (B, F) f32; w_mu/w_rho: (O, F+1) f32; eps: (B, O) f32 (training only)."""
    B, F = x.shape
    O, fp1 = w_mu.shape
    assert fp1 == F + 1
    if training and eps is None:
        raise ValueError("eps must be provided when training=True")

    # --- tile / padding selection (sized to fit v7x's 64 MiB VMEM too) ------
    tm = min(256, _round_up(B, 8))
    B_p = _round_up(B, tm)
    O_p = _round_up(O, 128)                       # lane-dense output slab
    tn = 256 if O_p % 256 == 0 else 128
    K_p = _round_up(F, 128)
    if K_p % 512 == 0:
        tk = 512
    elif K_p % 256 == 0:
        tk = 256
    else:
        tk = 128
    grid = (B_p // tm, O_p // tn, K_p // tk)

    # --- split off the bias column, pad to aligned shapes --------------------
    x_p = jnp.pad(x.astype(jnp.float32), ((0, B_p - B), (0, K_p - F)))
    w_mu_main = jnp.pad(w_mu[:, :F].astype(jnp.float32),
                        ((0, O_p - O), (0, K_p - F)))
    w_mu_bias = jnp.pad(w_mu[:, F].astype(jnp.float32),
                        (0, O_p - O)).reshape(1, O_p)

    cparams = pltpu.CompilerParams(
        dimension_semantics=("parallel", "parallel", "arbitrary"),
        vmem_limit_bytes=48 << 20,
    )

    if not training:
        # Inference: mean matmul only (no sigma, sqrt or eps work / DMA).
        out_p = pl.pallas_call(
            _vl_eval_kernel,
            out_shape=jax.ShapeDtypeStruct((B_p, O_p), jnp.float32),
            grid_spec=pltpu.PrefetchScalarGridSpec(
                num_scalar_prefetch=0,
                grid=grid,
                in_specs=[
                    pl.BlockSpec((tm, tk), lambda i, j, k: (i, k)),   # x
                    pl.BlockSpec((tn, tk), lambda i, j, k: (j, k)),   # W_mu main
                    pl.BlockSpec((1, tn), lambda i, j, k: (0, j)),    # W_mu bias
                ],
                out_specs=pl.BlockSpec((tm, tn), lambda i, j, k: (i, j)),
                scratch_shapes=[pltpu.VMEM((tm, tn), jnp.float32)],
            ),
            compiler_params=cparams,
        )(x_p, w_mu_main, w_mu_bias)
        return out_p[:B, :O]

    w_rho_main = jnp.pad(w_rho[:, :F].astype(jnp.float32),
                         ((0, O_p - O), (0, K_p - F)))
    w_rho_bias = jnp.pad(w_rho[:, F].astype(jnp.float32),
                         (0, O_p - O)).reshape(1, O_p)
    ssq_main, ssq_bias = _compute_sigma_sq(w_rho_main, w_rho_bias)

    eps_p = jnp.pad(eps.astype(jnp.float32), ((0, B_p - B), (0, O_p - O)))

    out_p = pl.pallas_call(
        _vl_train_kernel,
        out_shape=jax.ShapeDtypeStruct((B_p, O_p), jnp.float32),
        grid_spec=pltpu.PrefetchScalarGridSpec(
            num_scalar_prefetch=0,
            grid=grid,
            in_specs=[
                pl.BlockSpec((tm, tk), lambda i, j, k: (i, k)),   # x
                pl.BlockSpec((tn, tk), lambda i, j, k: (j, k)),   # W_mu main
                pl.BlockSpec((tn, tk), lambda i, j, k: (j, k)),   # sigma^2 main
                pl.BlockSpec((1, tn), lambda i, j, k: (0, j)),    # W_mu bias
                pl.BlockSpec((1, tn), lambda i, j, k: (0, j)),    # sigma^2 bias
                pl.BlockSpec((tm, tn), lambda i, j, k: (i, j)),   # eps
            ],
            out_specs=pl.BlockSpec((tm, tn), lambda i, j, k: (i, j)),
            scratch_shapes=[pltpu.VMEM((tm, tn), jnp.float32),
                            pltpu.VMEM((tm, tn), jnp.float32)],
        ),
        compiler_params=cparams,
    )(x_p, w_mu_main, ssq_main, w_mu_bias, ssq_bias, eps_p)
    return out_p[:B, :O]


# ---------------------------------------------------------------------------
# Pure-JAX reference (mirrors the PyTorch forward exactly).
# ---------------------------------------------------------------------------
def _reference_forward(x, w_mu, w_rho, eps):
    ones = jnp.ones((x.shape[0], 1), dtype=x.dtype)
    x_aug = jnp.concatenate([x, ones], axis=1)
    w_sigma = jnp.log1p(jnp.exp(w_rho))
    mean_act = x_aug @ w_mu.T
    var_act = (x_aug ** 2) @ (w_sigma ** 2).T + 1e-16
    return mean_act + jnp.sqrt(var_act) * eps


if __name__ == "__main__":
    # MNIST-sized VCL layer (784 -> 100), small batch; exercises a K-grid of 7.
    B, IN_FEATS, OUT_FEATS = 64, 784, 100

    key = jax.random.PRNGKey(0)
    k_x, k_mu, k_eps = jax.random.split(key, 3)

    # Matches module init: weights_mu ~ N(0, 0.1), weights_rho filled with -3.0
    x = jax.random.normal(k_x, (B, IN_FEATS), dtype=jnp.float32)
    w_mu = 0.1 * jax.random.normal(k_mu, (OUT_FEATS, IN_FEATS + 1), dtype=jnp.float32)
    w_rho = jnp.full((OUT_FEATS, IN_FEATS + 1), -3.0, dtype=jnp.float32)
    # torch used .normal_(0,1); here eps is sampled with a fixed JAX key.
    eps = jax.random.normal(k_eps, (B, OUT_FEATS), dtype=jnp.float32)

    # Training path (reparameterized sample).
    out_train = variational_linear_forward(x, w_mu, w_rho, eps, training=True)
    out_train = jax.block_until_ready(out_train)
    ref_train = _reference_forward(x, w_mu, w_rho, eps)
    assert out_train.shape == (B, OUT_FEATS)
    assert jnp.allclose(out_train, ref_train, atol=1e-4, rtol=1e-4), "train mismatch"

    # Eval path (mean only).
    out_eval = variational_linear_forward(x, w_mu, w_rho, None, training=False)
    out_eval = jax.block_until_ready(out_eval)
    ref_eval = _reference_forward(x, w_mu, w_rho, jnp.zeros_like(eps))
    assert out_eval.shape == (B, OUT_FEATS)
    assert jnp.allclose(out_eval, ref_eval, atol=1e-4, rtol=1e-4), "eval mismatch"

    print("KERNEL_OK")
</pallas_src>

<mosaic_0001>
module attributes {stable_mosaic.version = 11 : i64} {
  func.func @_sigma_sq_kernel(%arg0: memref<128x896xf32, #tpu.memory_space<vmem>>, %arg1: memref<1x128xf32, #tpu.memory_space<vmem>>, %arg2: memref<128x896xf32, #tpu.memory_space<vmem>>, %arg3: memref<1x128xf32, #tpu.memory_space<vmem>>) attributes {dimension_semantics = [], scalar_prefetch = 0 : i64, scratch_operands = 0 : i64, tpu.core_type = #tpu.core_type<tc>} {
    %c0 = arith.constant 0 : index
    %c0_0 = arith.constant 0 : index
    %0 = vector.load %arg0[%c0, %c0_0] : memref<128x896xf32, #tpu.memory_space<vmem>>, vector<128x896xf32>
    %cst = arith.constant 0.000000e+00 : f32
    %1 = vector.broadcast %cst : f32 to vector<128x896xf32>
    %2 = arith.maximumf %0, %1 : vector<128x896xf32>
    %3 = math.absf %0 : vector<128x896xf32>
    %cst_1 = arith.constant 0.000000e+00 : f32
    %4 = vector.broadcast %cst_1 : f32 to vector<128x896xf32>
    %5 = arith.subf %4, %3 : vector<128x896xf32>
    %6 = math.exp %5 : vector<128x896xf32>
    %7 = math.log1p %6 : vector<128x896xf32>
    %8 = arith.addf %2, %7 : vector<128x896xf32>
    %9 = arith.mulf %8, %8 : vector<128x896xf32>
    %c0_2 = arith.constant 0 : index
    %c0_3 = arith.constant 0 : index
    %10 = vector.load %arg2[%c0_2, %c0_3] : memref<128x896xf32, #tpu.memory_space<vmem>>, vector<128x896xf32>
    tpu.vector_store %arg2[%c0_2, %c0_3], %9 {strides = array<i32>} : memref<128x896xf32, #tpu.memory_space<vmem>>, vector<128x896xf32>,
    %c0_4 = arith.constant 0 : index
    %c0_5 = arith.constant 0 : index
    %11 = vector.load %arg1[%c0_4, %c0_5] : memref<1x128xf32, #tpu.memory_space<vmem>>, vector<1x128xf32>
    %cst_6 = arith.constant 0.000000e+00 : f32
    %12 = vector.broadcast %cst_6 : f32 to vector<1x128xf32>
    %13 = arith.maximumf %11, %12 : vector<1x128xf32>
    %14 = math.absf %11 : vector<1x128xf32>
    %cst_7 = arith.constant 0.000000e+00 : f32
    %15 = vector.broadcast %cst_7 : f32 to vector<1x128xf32>
    %16 = arith.subf %15, %14 : vector<1x128xf32>
    %17 = math.exp %16 : vector<1x128xf32>
    %18 = math.log1p %17 : vector<1x128xf32>
    %19 = arith.addf %13, %18 : vector<1x128xf32>
    %20 = arith.mulf %19, %19 : vector<1x128xf32>
    %c0_8 = arith.constant 0 : index
    %c0_9 = arith.constant 0 : index
    %21 = vector.load %arg3[%c0_8, %c0_9] : memref<1x128xf32, #tpu.memory_space<vmem>>, vector<1x128xf32>
    tpu.vector_store %arg3[%c0_8, %c0_9], %20 {strides = array<i32>} : memref<1x128xf32, #tpu.memory_space<vmem>>, vector<1x128xf32>,
    return
  }
}

module attributes {stable_mosaic.version = 11 : i64} {
  func.func @_vl_train_kernel(%arg0: i32, %arg1: i32, %arg2: i32, %arg3: memref<64x128xf32, #tpu.memory_space<vmem>>, %arg4: memref<128x128xf32, #tpu.memory_space<vmem>>, %arg5: memref<128x128xf32, #tpu.memory_space<vmem>>, %arg6: memref<1x128xf32, #tpu.memory_space<vmem>>, %arg7: memref<1x128xf32, #tpu.memory_space<vmem>>, %arg8: memref<64x128xf32, #tpu.memory_space<vmem>>, %arg9: memref<64x128xf32, #tpu.memory_space<vmem>>, %arg10: memref<64x128xf32, #tpu.memory_space<vmem>>, %arg11: memref<64x128xf32, #tpu.memory_space<vmem>>) attributes {dimension_semantics = [#tpu.dimension_semantics<parallel>, #tpu.dimension_semantics<parallel>, #tpu.dimension_semantics<arbitrary>], iteration_bounds = array<i64: 1, 1, 7>, scalar_prefetch = 0 : i64, scratch_operands = 2 : i64, tpu.core_type = #tpu.core_type<tc>, window_params = [{transform_indices = @transform_0, window_bounds = array<i64: 64, 128>}, {transform_indices = @transform_1, window_bounds = array<i64: 128, 128>}, {transform_indices = @transform_2, window_bounds = array<i64: 128, 128>}, {transform_indices = @transform_3, window_bounds = array<i64: 1, 128>}, {transform_indices = @transform_4, window_bounds = array<i64: 1, 128>}, {transform_indices = @transform_5, window_bounds = array<i64: 64, 128>}, {transform_indices = @transform_6, window_bounds = array<i64: 64, 128>}]} {
    %c0_i32 = arith.constant 0 : i32
    %0 = arith.cmpi eq, %arg2, %c0_i32 : i32
    %1 = arith.extui %0 : i1 to i32
    %c0_i32_0 = arith.constant 0 : i32
    %2 = arith.cmpi ne, %1, %c0_i32_0 : i32
    scf.if %2 {
      %cst_16 = arith.constant 0.000000e+00 : f32
      %18 = vector.broadcast %cst_16 : f32 to vector<64x128xf32>
      %c0_17 = arith.constant 0 : index
      %c0_18 = arith.constant 0 : index
      %19 = vector.load %arg10[%c0_17, %c0_18] : memref<64x128xf32, #tpu.memory_space<vmem>>, vector<64x128xf32>
      tpu.vector_store %arg10[%c0_17, %c0_18], %18 {strides = array<i32>} : memref<64x128xf32, #tpu.memory_space<vmem>>, vector<64x128xf32>,
      %cst_19 = arith.constant 0.000000e+00 : f32
      %20 = vector.broadcast %cst_19 : f32 to vector<64x128xf32>
      %c0_20 = arith.constant 0 : index
      %c0_21 = arith.constant 0 : index
      %21 = vector.load %arg11[%c0_20, %c0_21] : memref<64x128xf32, #tpu.memory_space<vmem>>, vector<64x128xf32>
      tpu.vector_store %arg11[%c0_20, %c0_21], %20 {strides = array<i32>} : memref<64x128xf32, #tpu.memory_space<vmem>>, vector<64x128xf32>,
    } else {
    }
    %c0 = arith.constant 0 : index
    %c0_1 = arith.constant 0 : index
    %3 = vector.load %arg3[%c0, %c0_1] : memref<64x128xf32, #tpu.memory_space<vmem>>, vector<64x128xf32>
    %c0_2 = arith.constant 0 : index
    %c0_3 = arith.constant 0 : index
    %4 = vector.load %arg10[%c0_2, %c0_3] : memref<64x128xf32, #tpu.memory_space<vmem>>, vector<64x128xf32>
    %c0_4 = arith.constant 0 : index
    %c0_5 = arith.constant 0 : index
    %5 = vector.load %arg4[%c0_4, %c0_5] : memref<128x128xf32, #tpu.memory_space<vmem>>, vector<128x128xf32>
    %cst = arith.constant dense<0.000000e+00> : vector<64x128xf32>
    %6 = tpu.matmul %3, %5, %cst {dimension_numbers = #tpu.dot_dimension_numbers<[1], [1], [0], [0], [0, 0, 1, 0], [], []>} : vector<64x128xf32>, vector<128x128xf32>, vector<64x128xf32> -> vector<64x128xf32>
    %7 = arith.addf %4, %6 : vector<64x128xf32>
    %c0_6 = arith.constant 0 : index
    %c0_7 = arith.constant 0 : index
    %8 = vector.load %arg10[%c0_6, %c0_7] : memref<64x128xf32, #tpu.memory_space<vmem>>, vector<64x128xf32>
    tpu.vector_store %arg10[%c0_6, %c0_7], %7 {strides = array<i32>} : memref<64x128xf32, #tpu.memory_space<vmem>>, vector<64x128xf32>,
    %c0_8 = arith.constant 0 : index
    %c0_9 = arith.constant 0 : index
    %9 = vector.load %arg11[%c0_8, %c0_9] : memref<64x128xf32, #tpu.memory_space<vmem>>, vector<64x128xf32>
    %10 = arith.mulf %3, %3 : vector<64x128xf32>
    %c0_10 = arith.constant 0 : index
    %c0_11 = arith.constant 0 : index
    %11 = vector.load %arg5[%c0_10, %c0_11] : memref<128x128xf32, #tpu.memory_space<vmem>>, vector<128x128xf32>
    %cst_12 = arith.constant dense<0.000000e+00> : vector<64x128xf32>
    %12 = tpu.matmul %10, %11, %cst_12 {dimension_numbers = #tpu.dot_dimension_numbers<[1], [1], [0], [0], [0, 0, 1, 0], [], []>} : vector<64x128xf32>, vector<128x128xf32>, vector<64x128xf32> -> vector<64x128xf32>
    %13 = arith.addf %9, %12 : vector<64x128xf32>
    %c0_13 = arith.constant 0 : index
    %c0_14 = arith.constant 0 : index
    %14 = vector.load %arg11[%c0_13, %c0_14] : memref<64x128xf32, #tpu.memory_space<vmem>>, vector<64x128xf32>
    tpu.vector_store %arg11[%c0_13, %c0_14], %13 {strides = array<i32>} : memref<64x128xf32, #tpu.memory_space<vmem>>, vector<64x128xf32>,
    %c6_i32 = arith.constant 6 : i32
    %15 = arith.cmpi eq, %arg2, %c6_i32 : i32
    %16 = arith.extui %15 : i1 to i32
    %c0_i32_15 = arith.constant 0 : i32
    %17 = arith.cmpi ne, %16, %c0_i32_15 : i32
    scf.if %17 {
      %c0_16 = arith.constant 0 : index
      %c0_17 = arith.constant 0 : index
      %18 = vector.load %arg10[%c0_16, %c0_17] : memref<64x128xf32, #tpu.memory_space<vmem>>, vector<64x128xf32>
      %c0_18 = arith.constant 0 : index
      %c0_19 = arith.constant 0 : index
      %19 = vector.load %arg6[%c0_18, %c0_19] : memref<1x128xf32, #tpu.memory_space<vmem>>, vector<1x128xf32>
      %20 = vector.broadcast %19 : vector<1x128xf32> to vector<64x128xf32>
      %21 = arith.addf %18, %20 : vector<64x128xf32>
      %c0_20 = arith.constant 0 : index
      %c0_21 = arith.constant 0 : index
      %22 = vector.load %arg11[%c0_20, %c0_21] : memref<64x128xf32, #tpu.memory_space<vmem>>, vector<64x128xf32>
      %c0_22 = arith.constant 0 : index
      %c0_23 = arith.constant 0 : index
      %23 = vector.load %arg7[%c0_22, %c0_23] : memref<1x128xf32, #tpu.memory_space<vmem>>, vector<1x128xf32>
      %24 = vector.broadcast %23 : vector<1x128xf32> to vector<64x128xf32>
      %25 = arith.addf %22, %24 : vector<64x128xf32>
      %cst_24 = arith.constant 1.000000e-16 : f32
      %26 = vector.broadcast %cst_24 : f32 to vector<64x128xf32>
      %27 = arith.addf %25, %26 : vector<64x128xf32>
      %28 = math.sqrt %27 : vector<64x128xf32>
      %c0_25 = arith.constant 0 : index
      %c0_26 = arith.constant 0 : index
      %29 = vector.load %arg8[%c0_25, %c0_26] : memref<64x128xf32, #tpu.memory_space<vmem>>, vector<64x128xf32>
      %30 = arith.mulf %28, %29 : vector<64x128xf32>
      %31 = arith.addf %21, %30 : vector<64x128xf32>
      %c0_27 = arith.constant 0 : index
      %c0_28 = arith.constant 0 : index
      %32 = vector.load %arg9[%c0_27, %c0_28] : memref<64x128xf32, #tpu.memory_space<vmem>>, vector<64x128xf32>
      tpu.vector_store %arg9[%c0_27, %c0_28], %31 {strides = array<i32>} : memref<64x128xf32, #tpu.memory_space<vmem>>, vector<64x128xf32>,
    } else {
    }
    return
  }
  func.func @transform_0(%arg0: i32, %arg1: i32, %arg2: i32) -> (i32, i32) {
    %c0_i32 = arith.constant 0 : i32
    return %arg0, %arg2 : i32, i32
  }
  func.func @transform_1(%arg0: i32, %arg1: i32, %arg2: i32) -> (i32, i32) {
    %c0_i32 = arith.constant 0 : i32
    return %arg1, %arg2 : i32, i32
  }
  func.func @transform_2(%arg0: i32, %arg1: i32, %arg2: i32) -> (i32, i32) {
    %c0_i32 = arith.constant 0 : i32
    return %arg1, %arg2 : i32, i32
  }
  func.func @transform_3(%arg0: i32, %arg1: i32, %arg2: i32) -> (i32, i32) {
    %c0_i32 = arith.constant 0 : i32
    %c0_i32_0 = arith.constant 0 : i32
    return %c0_i32, %arg1 : i32, i32
  }
  func.func @transform_4(%arg0: i32, %arg1: i32, %arg2: i32) -> (i32, i32) {
    %c0_i32 = arith.constant 0 : i32
    %c0_i32_0 = arith.constant 0 : i32
    return %c0_i32, %arg1 : i32, i32
  }
  func.func @transform_5(%arg0: i32, %arg1: i32, %arg2: i32) -> (i32, i32) {
    %c0_i32 = arith.constant 0 : i32
    return %arg0, %arg1 : i32, i32
  }
  func.func @transform_6(%arg0: i32, %arg1: i32, %arg2: i32) -> (i32, i32) {
    %c0_i32 = arith.constant 0 : i32
    return %arg0, %arg1 : i32, i32
  }
}

</mosaic_0001>

<llo_original>
// kernel: variational_linear_forward.3
$region0: #{variational_linear_forward.3}
  #allocation0 [shape = 'u32[]', space=smem, size = 0x4, offset = 0x4, fixed_abs, tag = 'smem constant byte address 0x4 - core index']
  #allocation1 [shape = 'u32[144,128]{1,0:T(1,128)}', space=vmem, size = 0x12000, scoped, tag = 'internal scratch']
  #allocation2 [shape = 'f32[64,128]{1,0:T(8,128)}', space=vmem, size = 0x8000, scoped, tag = 'scratch operand']
  #allocation3 [shape = 'f32[64,128]{1,0:T(8,128)}', space=vmem, size = 0x8000, scoped, tag = 'scratch operand']
  %s0 = inlined_call_operand.vmem [shape: f32[64,896], index: 0, kind: input, shape index: {}]
  %s1 = inlined_call_operand.vmem [shape: f32[128,896], index: 1, kind: input, shape index: {}]
  %s2 = inlined_call_operand.vmem [shape: f32[128,896], index: 2, kind: input, shape index: {}]
  %s3 = inlined_call_operand.vmem [shape: f32[1,128], index: 3, kind: input, shape index: {}]
  %s4 = inlined_call_operand.vmem [shape: f32[1,128], index: 4, kind: input, shape index: {}]
  %s5 = inlined_call_operand.vmem [shape: f32[64,128], index: 5, kind: input, shape index: {}]
  %s6 = inlined_call_operand.hbm [shape: f32[64,128], index: 6, kind: output, shape index: {}]
  %s7 = sld [smem:[#allocation0]]
  $region179: #{variational_linear_forward.3} parent=0
    _
  %s9 = ssub.s32 1, %s7
  %s10 = scalar_select 0, %s9, %s7
  $region1: #{variational_linear_forward.3} parent=0
    #allocation4 [shape = 'u8[65536]{0}', space=vmem, size = 0x10000, scoped, tag = 'input window, operand 0']
    #allocation5 [shape = 'u8[131072]{0}', space=vmem, size = 0x20000, scoped, tag = 'input window, operand 1']
    #allocation6 [shape = 'u8[131072]{0}', space=vmem, size = 0x20000, scoped, tag = 'input window, operand 2']
    #allocation7 [shape = 'u8[32768]{0}', space=vmem, size = 0x8000, scoped, tag = 'output window, operand 0, single buffered']
    #allocation8 [shape = 's32[2]{0}', space=sflag, size = 0x8, scoped, tag = 'scoped memory for variational_linear_forward.3']
    %11 = vsyncpa [#allocation8], 0
    loop: start=0, step=1, limit=9
    $region2: #{variational_linear_forward.3} parent=1 // loop_pre_header
      _
    $region3: #{variational_linear_forward.3} parent=1 // loop_header
      %s13 = sphi 0, %s17
      %p14 = scmp.ge.s32.totalorder %s13, 9
      %s20 = sphi 0, %s39
      %s21 = sphi 0, %s35
      %s22 = sphi 0, %s31
      %s23 = sphi 0, %s20
      %s24 = sphi 0, %s21
      %s25 = sphi 0, %s22
      %s26 = sphi 0, %s23
      %s27 = sphi 0, %s24
      %s28 = sphi 0, %s25
      %s44 = sphi 0, %s46
      %s47 = sphi 0, %s44
      %s48 = sphi 0, %s47
      %s64 = sphi 0, %s48
      %s72 = sphi 0, %s74
      %s75 = sphi 0, %s72
      %s76 = sphi 0, %s75
      %s92 = sphi 0, %s76
      %s100 = sphi 0, %s102
      %s103 = sphi 0, %s100
      %s104 = sphi 0, %s103
      %s120 = sphi 0, %s104
      %s126 = sphi 0, %s128
      %s129 = sphi 0, %s126
      %s130 = sphi 0, %s129
      %s146 = sphi 0, %s130
      %s152 = sphi 0, %s154
      %s155 = sphi 0, %s152
      %s156 = sphi 0, %s155
      %s172 = sphi 0, %s156
      %s180 = sphi 0, %s182
      %s183 = sphi 0, %s180
      %s184 = sphi 0, %s183
      %s200 = sphi 0, %s184
      %s208 = sphi 0, %s210
      %s211 = sphi 0, %s208
      %s212 = sphi 0, %s211
      %s228 = sphi 0, %s212
    $region4: #{variational_linear_forward.3} parent=1 // loop_header_branch
      %16 = sbr.rel (%p14) target = $region8
    $region5: #{variational_linear_forward.3} parent=1 // loop_body
      %s18 = ssub.s32 %s13, 1
      %s19 = ssub.s32 %s13, 2
      %s29 = sadd.s32 1, %s22
      %p30 = scmp.ge.s32.totalorder %s29, 7
      %s31 = scalar_select %p30, 0, %s29
      %s32 = sadd.s32 1, %s21
      %s33 = scalar_select %p30, %s32, %s21
      %p34 = scmp.ge.s32.totalorder %s33, 1
      %s35 = scalar_select %p34, 0, %s33
      %s36 = sadd.s32 1, %s20
      %s37 = scalar_select %p34, %s36, %s20
      %p38 = scmp.ge.s32.totalorder %s37, 1
      %s39 = scalar_select %p38, 0, %s37
      %s40 = ssub.s32 %s20, %s39
      %s41 = ssub.s32 %s22, %s31
      %s42 = sor.u32 %s40, %s41
      %p43 = scmp.eq.s32.totalorder %s42, 0
      %s45 = sadd.s32 %s44, 1
      %s46 = scalar_select %p43, %s44, %s45
      %p49 = pneg %p43
      %p50 = scmp.eq.s32.totalorder %s13, 6
      %p51 = por %p49, %p50
      %p52 = scmp.ne.s32.totalorder %s44, %s47
      %p53 = scmp.eq.s32.totalorder %s13, 0
      %p54 = por %p52, %p53
      %p55 = scmp.ne.s32.totalorder %s44, %s47
      %p56 = scmp.eq.s32.totalorder %s18, 6
      %p57 = por %p55, %p56
      %p58 = scmp.ne.s32.totalorder %s47, %s48
      %p59 = scmp.eq.s32.totalorder %s18, 0
      %p60 = por %p58, %p59
      %p61 = scmp.ne.s32.totalorder %s47, %s48
      %p62 = scmp.eq.s32.totalorder %s19, 6
      %p63 = por %p61, %p62
      %p65 = scmp.ne.s32.totalorder %s48, %s64
      %p66 = scmp.eq.s32.totalorder %s19, 0
      %p67 = por %p65, %p66
      %s68 = ssub.s32 %s21, %s35
      %s69 = ssub.s32 %s22, %s31
      %s70 = sor.u32 %s68, %s69
      %p71 = scmp.eq.s32.totalorder %s70, 0
      %s73 = sadd.s32 %s72, 1
      %s74 = scalar_select %p71, %s72, %s73
      %p77 = pneg %p71
      %p78 = scmp.eq.s32.totalorder %s13, 6
      %p79 = por %p77, %p78
      %p80 = scmp.ne.s32.totalorder %s72, %s75
      %p81 = scmp.eq.s32.totalorder %s13, 0
      %p82 = por %p80, %p81
      %p83 = scmp.ne.s32.totalorder %s72, %s75
      %p84 = scmp.eq.s32.totalorder %s18, 6
      %p85 = por %p83, %p84
      %p86 = scmp.ne.s32.totalorder %s75, %s76
      %p87 = scmp.eq.s32.totalorder %s18, 0
      %p88 = por %p86, %p87
      %p89 = scmp.ne.s32.totalorder %s75, %s76
      %p90 = scmp.eq.s32.totalorder %s19, 6
      %p91 = por %p89, %p90
      %p93 = scmp.ne.s32.totalorder %s76, %s92
      %p94 = scmp.eq.s32.totalorder %s19, 0
      %p95 = por %p93, %p94
      %s96 = ssub.s32 %s21, %s35
      %s97 = ssub.s32 %s22, %s31
      %s98 = sor.u32 %s96, %s97
      %p99 = scmp.eq.s32.totalorder %s98, 0
      %s101 = sadd.s32 %s100, 1
      %s102 = scalar_select %p99, %s100, %s101
      %p105 = pneg %p99
      %p106 = scmp.eq.s32.totalorder %s13, 6
      %p107 = por %p105, %p106
      %p108 = scmp.ne.s32.totalorder %s100, %s103
      %p109 = scmp.eq.s32.totalorder %s13, 0
      %p110 = por %p108, %p109
      %p111 = scmp.ne.s32.totalorder %s100, %s103
      %p112 = scmp.eq.s32.totalorder %s18, 6
      %p113 = por %p111, %p112
      %p114 = scmp.ne.s32.totalorder %s103, %s104
      %p115 = scmp.eq.s32.totalorder %s18, 0
      %p116 = por %p114, %p115
      %p117 = scmp.ne.s32.totalorder %s103, %s104
      %p118 = scmp.eq.s32.totalorder %s19, 6
      %p119 = por %p117, %p118
      %p121 = scmp.ne.s32.totalorder %s104, %s120
      %p122 = scmp.eq.s32.totalorder %s19, 0
      %p123 = por %p121, %p122
      %s124 = ssub.s32 %s21, %s35
      %p125 = scmp.eq.s32.totalorder %s124, 0
      %s127 = sadd.s32 %s126, 1
      %s128 = scalar_select %p125, %s126, %s127
      %p131 = pneg %p125
      %p132 = scmp.eq.s32.totalorder %s13, 6
      %p133 = por %p131, %p132
      %p134 = scmp.ne.s32.totalorder %s126, %s129
      %p135 = scmp.eq.s32.totalorder %s13, 0
      %p136 = por %p134, %p135
      %p137 = scmp.ne.s32.totalorder %s126, %s129
      %p138 = scmp.eq.s32.totalorder %s18, 6
      %p139 = por %p137, %p138
      %p140 = scmp.ne.s32.totalorder %s129, %s130
      %p141 = scmp.eq.s32.totalorder %s18, 0
      %p142 = por %p140, %p141
      %p143 = scmp.ne.s32.totalorder %s129, %s130
      %p144 = scmp.eq.s32.totalorder %s19, 6
      %p145 = por %p143, %p144
      %p147 = scmp.ne.s32.totalorder %s130, %s146
      %p148 = scmp.eq.s32.totalorder %s19, 0
      %p149 = por %p147, %p148
      %s150 = ssub.s32 %s21, %s35
      %p151 = scmp.eq.s32.totalorder %s150, 0
      %s153 = sadd.s32 %s152, 1
      %s154 = scalar_select %p151, %s152, %s153
      %p157 = pneg %p151
      %p158 = scmp.eq.s32.totalorder %s13, 6
      %p159 = por %p157, %p158
      %p160 = scmp.ne.s32.totalorder %s152, %s155
      %p161 = scmp.eq.s32.totalorder %s13, 0
      %p162 = por %p160, %p161
      %p163 = scmp.ne.s32.totalorder %s152, %s155
      %p164 = scmp.eq.s32.totalorder %s18, 6
      %p165 = por %p163, %p164
      %p166 = scmp.ne.s32.totalorder %s155, %s156
      %p167 = scmp.eq.s32.totalorder %s18, 0
      %p168 = por %p166, %p167
      %p169 = scmp.ne.s32.totalorder %s155, %s156
      %p170 = scmp.eq.s32.totalorder %s19, 6
      %p171 = por %p169, %p170
      %p173 = scmp.ne.s32.totalorder %s156, %s172
      %p174 = scmp.eq.s32.totalorder %s19, 0
      %p175 = por %p173, %p174
      %s176 = ssub.s32 %s20, %s39
      %s177 = ssub.s32 %s21, %s35
      %s178 = sor.u32 %s176, %s177
      %p179 = scmp.eq.s32.totalorder %s178, 0
      %s181 = sadd.s32 %s180, 1
      %s182 = scalar_select %p179, %s180, %s181
      %p185 = pneg %p179
      %p186 = scmp.eq.s32.totalorder %s13, 6
      %p187 = por %p185, %p186
      %p188 = scmp.ne.s32.totalorder %s180, %s183
      %p189 = scmp.eq.s32.totalorder %s13, 0
      %p190 = por %p188, %p189
      %p191 = scmp.ne.s32.totalorder %s180, %s183
      %p192 = scmp.eq.s32.totalorder %s18, 6
      %p193 = por %p191, %p192
      %p194 = scmp.ne.s32.totalorder %s183, %s184
      %p195 = scmp.eq.s32.totalorder %s18, 0
      %p196 = por %p194, %p195
      %p197 = scmp.ne.s32.totalorder %s183, %s184
      %p198 = scmp.eq.s32.totalorder %s19, 6
      %p199 = por %p197, %p198
      %p201 = scmp.ne.s32.totalorder %s184, %s200
      %p202 = scmp.eq.s32.totalorder %s19, 0
      %p203 = por %p201, %p202
      %s204 = ssub.s32 %s20, %s39
      %s205 = ssub.s32 %s21, %s35
      %s206 = sor.u32 %s204, %s205
      %p207 = scmp.eq.s32.totalorder %s206, 0
      %s209 = sadd.s32 %s208, 1
      %s210 = scalar_select %p207, %s208, %s209
      %p213 = pneg %p207
      %p214 = scmp.eq.s32.totalorder %s13, 6
      %p215 = por %p213, %p214
      %p216 = scmp.ne.s32.totalorder %s208, %s211
      %p217 = scmp.eq.s32.totalorder %s13, 0
      %p218 = por %p216, %p217
      %p219 = scmp.ne.s32.totalorder %s208, %s211
      %p220 = scmp.eq.s32.totalorder %s18, 6
      %p221 = por %p219, %p220
      %p222 = scmp.ne.s32.totalorder %s211, %s212
      %p223 = scmp.eq.s32.totalorder %s18, 0
      %p224 = por %p222, %p223
      %p225 = scmp.ne.s32.totalorder %s211, %s212
      %p226 = scmp.eq.s32.totalorder %s19, 6
      %p227 = por %p225, %p226
      %p229 = scmp.ne.s32.totalorder %s212, %s228
      %p230 = scmp.eq.s32.totalorder %s19, 0
      %p231 = por %p229, %p230
      %p232 = scmp.le.s32.totalorder 1, %s13
      %p233 = scmp.lt.s32.totalorder %s13, 8
      %p234 = pnand %p232, %p233
      %p235 = pneg %p234
      // Predicated region
      $region9: #{variational_linear_forward.3} parent=5 // pred_check
        _
      $region10: #{variational_linear_forward.3} parent=5 // pred_check_branch
        %237 = sbr.rel (%p234) target = $region12
      $region11: #{variational_linear_forward.3} parent=5 // pred_region
        %s238 = ssub.s32 %s13, 1
        // Predicated region
        $region13: #{variational_linear_forward.3} parent=11 // pred_check
          %p239 = pneg %p142
        $region14: #{variational_linear_forward.3} parent=11 // pred_check_branch
          %241 = sbr.rel (%p239) target = $region16
        $region15: #{variational_linear_forward.3} parent=11 // pred_region
          %p242 = scmp.lt.s32.totalorder %s24, 0
          %s243 = scalar_select %p242, %s24, 0
          %s244 = scalar_lea.vmem %s3, %s243
        $region16: #{variational_linear_forward.3} parent=11 // pred_fallthru
          _
        // Predicated region
        $region17: #{variational_linear_forward.3} parent=11 // pred_check
          %p245 = pneg %p168
        $region18: #{variational_linear_forward.3} parent=11 // pred_check_branch
          %247 = sbr.rel (%p245) target = $region20
        $region19: #{variational_linear_forward.3} parent=11 // pred_region
          %p248 = scmp.lt.s32.totalorder %s24, 0
          %s249 = scalar_select %p248, %s24, 0
          %s250 = scalar_lea.vmem %s4, %s249
        $region20: #{variational_linear_forward.3} parent=11 // pred_fallthru
          _
        // Predicated region
        $region21: #{variational_linear_forward.3} parent=11 // pred_check
          %p251 = pneg %p196
        $region22: #{variational_linear_forward.3} parent=11 // pred_check_branch
          %253 = sbr.rel (%p251) target = $region24
        $region23: #{variational_linear_forward.3} parent=11 // pred_region
          %s254 = smul.u32 8, %s23
          %p255 = scmp.lt.s32.totalorder %s254, 7
          %s256 = scalar_select %p255, %s254, 7
          %p257 = scmp.lt.s32.totalorder %s24, 0
          %s258 = scalar_select %p257, %s24, 0
          %s259 = sadd.s32 %s258, %s256
          %s260 = smul.addr %s259, 8
          %s261 = scalar_lea.vmem %s5, %s260
          %s262 = smul.u32 8, %s23
        $region24: #{variational_linear_forward.3} parent=11 // pred_fallthru
          _
      $region12: #{variational_linear_forward.3} parent=5 // pred_fallthru
        _
      %p263 = scmp.lt.s32.totalorder %s13, 7
      // Predicated region
      $region25: #{variational_linear_forward.3} parent=5 // pred_check
        %p264 = pneg %p263
      $region26: #{variational_linear_forward.3} parent=5 // pred_check_branch
        %266 = sbr.rel (%p264) target = $region28
      $region27: #{variational_linear_forward.3} parent=5 // pred_region
        // Predicated region
        $region29: #{variational_linear_forward.3} parent=27 // pred_check
          %p267 = pneg %p54
        $region30: #{variational_linear_forward.3} parent=27 // pred_check_branch
          %269 = sbr.rel (%p267) target = $region32
        $region31: #{variational_linear_forward.3} parent=27 // pred_region
          %s270 = sand.u32 %s44, 1
          %s271 = sand.u32 %s44, 1
          %s272 = smul.addr %s271, 64
          %s273 = scalar_lea.vmem [#allocation4], %s272
          %s274 = smul.u32 8, %s20
          %s275 = smul.addr %s274, 7
          %s276 = sadd.s32 %s22, %s275
          %s277 = smul.addr %s276, 8
          %s278 = scalar_lea.vmem %s0, %s277
          // Predicated region
          $region33: #{variational_linear_forward.3} parent=31 // pred_check
            _
          $region34: #{variational_linear_forward.3} parent=31 // pred_check_branch
            %280 = sbr.rel (0) target = $region36
          $region35: #{variational_linear_forward.3} parent=31 // pred_region
            // Predicated region
            $region37: #{variational_linear_forward.3} parent=35 // pred_check
              _
            $region38: #{variational_linear_forward.3} parent=35 // pred_check_branch
              %282 = sbr.rel (0) target = $region40
            $region39: #{variational_linear_forward.3} parent=35 // pred_region
              // Predicated region
              $region52: #{variational_linear_forward.3} parent=39 // pred_check
                _
              $region53: #{variational_linear_forward.3} parent=39 // pred_check_branch
                %312 = sbr.rel (0) target = $region55
              $region54: #{variational_linear_forward.3} parent=39 // pred_region
                loop: start=0, step=1, limit=1
                $region56: #{variational_linear_forward.3} parent=54 // loop_pre_header
                  _
                $region57: #{variational_linear_forward.3} parent=54 // loop_header
                  %s314 = sphi 0, %s318
                  %p315 = scmp.ge.s32.totalorder %s314, 1
                  %s319 = sphi %s278, %s278
                  %s320 = sphi %s273, %s273
                $region58: #{variational_linear_forward.3} parent=54 // loop_header_branch
                  %317 = sbr.rel (%p315) target = $region62
                $region59: #{variational_linear_forward.3} parent=54 // loop_body
                  %v321 = vld [vmem:[%s319] sm:$0xff]
                  %322 = vst [vmem:[%s320] sm:$0xff] %v321
                  %v323 = vld [vmem:[%s319 + $0x38] sm:$0xff]
                  %324 = vst [vmem:[%s320 + $0x8] sm:$0xff] %v323
                  %v325 = vld [vmem:[%s319 + $0x70] sm:$0xff]
                  %326 = vst [vmem:[%s320 + $0x10] sm:$0xff] %v325
                  %v327 = vld [vmem:[%s319 + $0xa8] sm:$0xff]
                  %328 = vst [vmem:[%s320 + $0x18] sm:$0xff] %v327
                  %v329 = vld [vmem:[%s319 + $0xe0] sm:$0xff]
                  %330 = vst [vmem:[%s320 + $0x20] sm:$0xff] %v329
                  %v331 = vld [vmem:[%s319 + $0x118] sm:$0xff]
                  %332 = vst [vmem:[%s320 + $0x28] sm:$0xff] %v331
                  %v333 = vld [vmem:[%s319 + $0x150] sm:$0xff]
                  %334 = vst [vmem:[%s320 + $0x30] sm:$0xff] %v333
                  %v335 = vld [vmem:[%s319 + $0x188] sm:$0xff]
                  %336 = vst [vmem:[%s320 + $0x38] sm:$0xff] %v335
                $region60: #{variational_linear_forward.3} parent=54 // loop_footer
                  %s318 = sadd.s32 1, %s314
                $region61: #{variational_linear_forward.3} parent=54 // loop_footer_branch
                  %313 = sbr.rel target = $region57
                $region62: #{variational_linear_forward.3} parent=54 // loop_exit
                  _
              $region55: #{variational_linear_forward.3} parent=39 // pred_fallthru
                _
              // Predicated region
              $region63: #{variational_linear_forward.3} parent=39 // pred_check
                _
              $region64: #{variational_linear_forward.3} parent=39 // pred_check_branch
                %338 = sbr.rel target = $region66
              $region65: #{variational_linear_forward.3} parent=39 // pred_region
                _
              $region66: #{variational_linear_forward.3} parent=39 // pred_fallthru
                _
            $region40: #{variational_linear_forward.3} parent=35 // pred_fallthru
              _
            // Predicated region
            $region41: #{variational_linear_forward.3} parent=35 // pred_check
              _
            $region42: #{variational_linear_forward.3} parent=35 // pred_check_branch
              %284 = sbr.rel target = $region44
            $region43: #{variational_linear_forward.3} parent=35 // pred_region
              %s286 = ssub.s32 256, 1
              loop: start=0, step=1, limit=1
              $region45: #{variational_linear_forward.3} parent=43 // loop_pre_header
                _
              $region46: #{variational_linear_forward.3} parent=43 // loop_header
                %s288 = sphi 0, %s292
                %p289 = scmp.ge.s32.totalorder %s288, 1
                %s293 = sphi %s278, %s278
                %s294 = sphi %s273, %s273
              $region47: #{variational_linear_forward.3} parent=43 // loop_header_branch
                %291 = sbr.rel (%p289) target = $region51
              $region48: #{variational_linear_forward.3} parent=43 // loop_body
                %v295 = vld [vmem:[%s293] sm:%s286]
                %296 = vst [vmem:[%s294] sm:%s286] %v295
                %v297 = vld [vmem:[%s293 + $0x38] sm:%s286]
                %298 = vst [vmem:[%s294 + $0x8] sm:%s286] %v297
                %v299 = vld [vmem:[%s293 + $0x70] sm:%s286]
                %300 = vst [vmem:[%s294 + $0x10] sm:%s286] %v299
                %v301 = vld [vmem:[%s293 + $0xa8] sm:%s286]
                %302 = vst [vmem:[%s294 + $0x18] sm:%s286] %v301
                %v303 = vld [vmem:[%s293 + $0xe0] sm:%s286]
                %304 = vst [vmem:[%s294 + $0x20] sm:%s286] %v303
                %v305 = vld [vmem:[%s293 + $0x118] sm:%s286]
                %306 = vst [vmem:[%s294 + $0x28] sm:%s286] %v305
                %v307 = vld [vmem:[%s293 + $0x150] sm:%s286]
                %308 = vst [vmem:[%s294 + $0x30] sm:%s286] %v307
                %v309 = vld [vmem:[%s293 + $0x188] sm:%s286]
                %310 = vst [vmem:[%s294 + $0x38] sm:%s286] %v309
              $region49: #{variational_linear_forward.3} parent=43 // loop_footer
                %s292 = sadd.s32 1, %s288
              $region50: #{variational_linear_forward.3} parent=43 // loop_footer_branch
                %287 = sbr.rel target = $region46
              $region51: #{variational_linear_forward.3} parent=43 // loop_exit
                _
            $region44: #{variational_linear_forward.3} parent=35 // pred_fallthru
              _
          $region36: #{variational_linear_forward.3} parent=31 // pred_fallthru
            _
          %339 = vnop
        $region32: #{variational_linear_forward.3} parent=27 // pred_fallthru
          _
        // Predicated region
        $region67: #{variational_linear_forward.3} parent=27 // pred_check
          %p340 = pneg %p82
        $region68: #{variational_linear_forward.3} parent=27 // pred_check_branch
          %342 = sbr.rel (%p340) target = $region70
        $region69: #{variational_linear_forward.3} parent=27 // pred_region
          %s343 = sand.u32 %s72, 1
          %s344 = sand.u32 %s72, 1
          %s345 = smul.addr %s344, 128
          %s346 = scalar_lea.vmem [#allocation5], %s345
          %s347 = smul.u32 16, %s21
          %s348 = smul.addr %s347, 7
          %s349 = sadd.s32 %s22, %s348
          %s350 = smul.addr %s349, 8
          %s351 = scalar_lea.vmem %s1, %s350
          // Predicated region
          $region71: #{variational_linear_forward.3} parent=69 // pred_check
            _
          $region72: #{variational_linear_forward.3} parent=69 // pred_check_branch
            %353 = sbr.rel (0) target = $region74
          $region73: #{variational_linear_forward.3} parent=69 // pred_region
            // Predicated region
            $region75: #{variational_linear_forward.3} parent=73 // pred_check
              _
            $region76: #{variational_linear_forward.3} parent=73 // pred_check_branch
              %355 = sbr.rel (0) target = $region78
            $region77: #{variational_linear_forward.3} parent=73 // pred_region
              // Predicated region
              $region90: #{variational_linear_forward.3} parent=77 // pred_check
                _
              $region91: #{variational_linear_forward.3} parent=77 // pred_check_branch
                %401 = sbr.rel (0) target = $region93
              $region92: #{variational_linear_forward.3} parent=77 // pred_region
                loop: start=0, step=1, limit=1
                $region94: #{variational_linear_forward.3} parent=92 // loop_pre_header
                  _
                $region95: #{variational_linear_forward.3} parent=92 // loop_header
                  %s403 = sphi 0, %s407
                  %p404 = scmp.ge.s32.totalorder %s403, 1
                  %s408 = sphi %s351, %s351
                  %s409 = sphi %s346, %s346
                $region96: #{variational_linear_forward.3} parent=92 // loop_header_branch
                  %406 = sbr.rel (%p404) target = $region100
                $region97: #{variational_linear_forward.3} parent=92 // loop_body
                  %v410 = vld [vmem:[%s408] sm:$0xff]
                  %411 = vst [vmem:[%s409] sm:$0xff] %v410
                  %v412 = vld [vmem:[%s408 + $0x38] sm:$0xff]
                  %413 = vst [vmem:[%s409 + $0x8] sm:$0xff] %v412
                  %v414 = vld [vmem:[%s408 + $0x70] sm:$0xff]
                  %415 = vst [vmem:[%s409 + $0x10] sm:$0xff] %v414
                  %v416 = vld [vmem:[%s408 + $0xa8] sm:$0xff]
                  %417 = vst [vmem:[%s409 + $0x18] sm:$0xff] %v416
                  %v418 = vld [vmem:[%s408 + $0xe0] sm:$0xff]
                  %419 = vst [vmem:[%s409 + $0x20] sm:$0xff] %v418
                  %v420 = vld [vmem:[%s408 + $0x118] sm:$0xff]
                  %421 = vst [vmem:[%s409 + $0x28] sm:$0xff] %v420
                  %v422 = vld [vmem:[%s408 + $0x150] sm:$0xff]
                  %423 = vst [vmem:[%s409 + $0x30] sm:$0xff] %v422
                  %v424 = vld [vmem:[%s408 + $0x188] sm:$0xff]
                  %425 = vst [vmem:[%s409 + $0x38] sm:$0xff] %v424
                  %v426 = vld [vmem:[%s408 + $0x1c0] sm:$0xff]
                  %427 = vst [vmem:[%s409 + $0x40] sm:$0xff] %v426
                  %v428 = vld [vmem:[%s408 + $0x1f8] sm:$0xff]
                  %429 = vst [vmem:[%s409 + $0x48] sm:$0xff] %v428
                  %v430 = vld [vmem:[%s408 + $0x230] sm:$0xff]
                  %431 = vst [vmem:[%s409 + $0x50] sm:$0xff] %v430
                  %v432 = vld [vmem:[%s408 + $0x268] sm:$0xff]
                  %433 = vst [vmem:[%s409 + $0x58] sm:$0xff] %v432
                  %v434 = vld [vmem:[%s408 + $0x2a0] sm:$0xff]
                  %435 = vst [vmem:[%s409 + $0x60] sm:$0xff] %v434
                  %v436 = vld [vmem:[%s408 + $0x2d8] sm:$0xff]
                  %437 = vst [vmem:[%s409 + $0x68] sm:$0xff] %v436
                  %v438 = vld [vmem:[%s408 + $0x310] sm:$0xff]
                  %439 = vst [vmem:[%s409 + $0x70] sm:$0xff] %v438
                  %v440 = vld [vmem:[%s408 + $0x348] sm:$0xff]
                  %441 = vst [vmem:[%s409 + $0x78] sm:$0xff] %v440
                $region98: #{variational_linear_forward.3} parent=92 // loop_footer
                  %s407 = sadd.s32 1, %s403
                $region99: #{variational_linear_forward.3} parent=92 // loop_footer_branch
                  %402 = sbr.rel target = $region95
                $region100: #{variational_linear_forward.3} parent=92 // loop_exit
                  _
              $region93: #{variational_linear_forward.3} parent=77 // pred_fallthru
                _
              // Predicated region
              $region101: #{variational_linear_forward.3} parent=77 // pred_check
                _
              $region102: #{variational_linear_forward.3} parent=77 // pred_check_branch
                %443 = sbr.rel target = $region104
              $region103: #{variational_linear_forward.3} parent=77 // pred_region
                _
              $region104: #{variational_linear_forward.3} parent=77 // pred_fallthru
                _
            $region78: #{variational_linear_forward.3} parent=73 // pred_fallthru
              _
            // Predicated region
            $region79: #{variational_linear_forward.3} parent=73 // pred_check
              _
            $region80: #{variational_linear_forward.3} parent=73 // pred_check_branch
              %357 = sbr.rel target = $region82
            $region81: #{variational_linear_forward.3} parent=73 // pred_region
              %s359 = ssub.s32 256, 1
              loop: start=0, step=1, limit=1
              $region83: #{variational_linear_forward.3} parent=81 // loop_pre_header
                _
              $region84: #{variational_linear_forward.3} parent=81 // loop_header
                %s361 = sphi 0, %s365
                %p362 = scmp.ge.s32.totalorder %s361, 1
                %s366 = sphi %s351, %s351
                %s367 = sphi %s346, %s346
              $region85: #{variational_linear_forward.3} parent=81 // loop_header_branch
                %364 = sbr.rel (%p362) target = $region89
              $region86: #{variational_linear_forward.3} parent=81 // loop_body
                %v368 = vld [vmem:[%s366] sm:%s359]
                %369 = vst [vmem:[%s367] sm:%s359] %v368
                %v370 = vld [vmem:[%s366 + $0x38] sm:%s359]
                %371 = vst [vmem:[%s367 + $0x8] sm:%s359] %v370
                %v372 = vld [vmem:[%s366 + $0x70] sm:%s359]
                %373 = vst [vmem:[%s367 + $0x10] sm:%s359] %v372
                %v374 = vld [vmem:[%s366 + $0xa8] sm:%s359]
                %375 = vst [vmem:[%s367 + $0x18] sm:%s359] %v374
                %v376 = vld [vmem:[%s366 + $0xe0] sm:%s359]
                %377 = vst [vmem:[%s367 + $0x20] sm:%s359] %v376
                %v378 = vld [vmem:[%s366 + $0x118] sm:%s359]
                %379 = vst [vmem:[%s367 + $0x28] sm:%s359] %v378
                %v380 = vld [vmem:[%s366 + $0x150] sm:%s359]
                %381 = vst [vmem:[%s367 + $0x30] sm:%s359] %v380
                %v382 = vld [vmem:[%s366 + $0x188] sm:%s359]
                %383 = vst [vmem:[%s367 + $0x38] sm:%s359] %v382
                %v384 = vld [vmem:[%s366 + $0x1c0] sm:%s359]
                %385 = vst [vmem:[%s367 + $0x40] sm:%s359] %v384
                %v386 = vld [vmem:[%s366 + $0x1f8] sm:%s359]
                %387 = vst [vmem:[%s367 + $0x48] sm:%s359] %v386
                %v388 = vld [vmem:[%s366 + $0x230] sm:%s359]
                %389 = vst [vmem:[%s367 + $0x50] sm:%s359] %v388
                %v390 = vld [vmem:[%s366 + $0x268] sm:%s359]
                %391 = vst [vmem:[%s367 + $0x58] sm:%s359] %v390
                %v392 = vld [vmem:[%s366 + $0x2a0] sm:%s359]
                %393 = vst [vmem:[%s367 + $0x60] sm:%s359] %v392
                %v394 = vld [vmem:[%s366 + $0x2d8] sm:%s359]
                %395 = vst [vmem:[%s367 + $0x68] sm:%s359] %v394
                %v396 = vld [vmem:[%s366 + $0x310] sm:%s359]
                %397 = vst [vmem:[%s367 + $0x70] sm:%s359] %v396
                %v398 = vld [vmem:[%s366 + $0x348] sm:%s359]
                %399 = vst [vmem:[%s367 + $0x78] sm:%s359] %v398
              $region87: #{variational_linear_forward.3} parent=81 // loop_footer
                %s365 = sadd.s32 1, %s361
              $region88: #{variational_linear_forward.3} parent=81 // loop_footer_branch
                %360 = sbr.rel target = $region84
              $region89: #{variational_linear_forward.3} parent=81 // loop_exit
                _
            $region82: #{variational_linear_forward.3} parent=73 // pred_fallthru
              _
          $region74: #{variational_linear_forward.3} parent=69 // pred_fallthru
            _
          %444 = vnop
        $region70: #{variational_linear_forward.3} parent=27 // pred_fallthru
          _
        // Predicated region
        $region105: #{variational_linear_forward.3} parent=27 // pred_check
          %p445 = pneg %p110
        $region106: #{variational_linear_forward.3} parent=27 // pred_check_branch
          %447 = sbr.rel (%p445) target = $region108
        $region107: #{variational_linear_forward.3} parent=27 // pred_region
          %s448 = sand.u32 %s100, 1
          %s449 = sand.u32 %s100, 1
          %s450 = smul.addr %s449, 128
          %s451 = scalar_lea.vmem [#allocation6], %s450
          %s452 = smul.u32 16, %s21
          %s453 = smul.addr %s452, 7
          %s454 = sadd.s32 %s22, %s453
          %s455 = smul.addr %s454, 8
          %s456 = scalar_lea.vmem %s2, %s455
          // Predicated region
          $region109: #{variational_linear_forward.3} parent=107 // pred_check
            _
          $region110: #{variational_linear_forward.3} parent=107 // pred_check_branch
            %458 = sbr.rel (0) target = $region112
          $region111: #{variational_linear_forward.3} parent=107 // pred_region
            // Predicated region
            $region113: #{variational_linear_forward.3} parent=111 // pred_check
              _
            $region114: #{variational_linear_forward.3} parent=111 // pred_check_branch
              %460 = sbr.rel (0) target = $region116
            $region115: #{variational_linear_forward.3} parent=111 // pred_region
              // Predicated region
              $region128: #{variational_linear_forward.3} parent=115 // pred_check
                _
              $region129: #{variational_linear_forward.3} parent=115 // pred_check_branch
                %506 = sbr.rel (0) target = $region131
              $region130: #{variational_linear_forward.3} parent=115 // pred_region
                loop: start=0, step=1, limit=1
                $region132: #{variational_linear_forward.3} parent=130 // loop_pre_header
                  _
                $region133: #{variational_linear_forward.3} parent=130 // loop_header
                  %s508 = sphi 0, %s512
                  %p509 = scmp.ge.s32.totalorder %s508, 1
                  %s513 = sphi %s456, %s456
                  %s514 = sphi %s451, %s451
                $region134: #{variational_linear_forward.3} parent=130 // loop_header_branch
                  %511 = sbr.rel (%p509) target = $region138
                $region135: #{variational_linear_forward.3} parent=130 // loop_body
                  %v515 = vld [vmem:[%s513] sm:$0xff]
                  %516 = vst [vmem:[%s514] sm:$0xff] %v515
                  %v517 = vld [vmem:[%s513 + $0x38] sm:$0xff]
                  %518 = vst [vmem:[%s514 + $0x8] sm:$0xff] %v517
                  %v519 = vld [vmem:[%s513 + $0x70] sm:$0xff]
                  %520 = vst [vmem:[%s514 + $0x10] sm:$0xff] %v519
                  %v521 = vld [vmem:[%s513 + $0xa8] sm:$0xff]
                  %522 = vst [vmem:[%s514 + $0x18] sm:$0xff] %v521
                  %v523 = vld [vmem:[%s513 + $0xe0] sm:$0xff]
                  %524 = vst [vmem:[%s514 + $0x20] sm:$0xff] %v523
                  %v525 = vld [vmem:[%s513 + $0x118] sm:$0xff]
                  %526 = vst [vmem:[%s514 + $0x28] sm:$0xff] %v525
                  %v527 = vld [vmem:[%s513 + $0x150] sm:$0xff]
                  %528 = vst [vmem:[%s514 + $0x30] sm:$0xff] %v527
                  %v529 = vld [vmem:[%s513 + $0x188] sm:$0xff]
                  %530 = vst [vmem:[%s514 + $0x38] sm:$0xff] %v529
                  %v531 = vld [vmem:[%s513 + $0x1c0] sm:$0xff]
                  %532 = vst [vmem:[%s514 + $0x40] sm:$0xff] %v531
                  %v533 = vld [vmem:[%s513 + $0x1f8] sm:$0xff]
                  %534 = vst [vmem:[%s514 + $0x48] sm:$0xff] %v533
                  %v535 = vld [vmem:[%s513 + $0x230] sm:$0xff]
                  %536 = vst [vmem:[%s514 + $0x50] sm:$0xff] %v535
                  %v537 = vld [vmem:[%s513 + $0x268] sm:$0xff]
                  %538 = vst [vmem:[%s514 + $0x58] sm:$0xff] %v537
                  %v539 = vld [vmem:[%s513 + $0x2a0] sm:$0xff]
                  %540 = vst [vmem:[%s514 + $0x60] sm:$0xff] %v539
                  %v541 = vld [vmem:[%s513 + $0x2d8] sm:$0xff]
                  %542 = vst [vmem:[%s514 + $0x68] sm:$0xff] %v541
                  %v543 = vld [vmem:[%s513 + $0x310] sm:$0xff]
                  %544 = vst [vmem:[%s514 + $0x70] sm:$0xff] %v543
                  %v545 = vld [vmem:[%s513 + $0x348] sm:$0xff]
                  %546 = vst [vmem:[%s514 + $0x78] sm:$0xff] %v545
                $region136: #{variational_linear_forward.3} parent=130 // loop_footer
                  %s512 = sadd.s32 1, %s508
                $region137: #{variational_linear_forward.3} parent=130 // loop_footer_branch
                  %507 = sbr.rel target = $region133
                $region138: #{variational_linear_forward.3} parent=130 // loop_exit
                  _
              $region131: #{variational_linear_forward.3} parent=115 // pred_fallthru
                _
              // Predicated region
              $region139: #{variational_linear_forward.3} parent=115 // pred_check
                _
              $region140: #{variational_linear_forward.3} parent=115 // pred_check_branch
                %548 = sbr.rel target = $region142
              $region141: #{variational_linear_forward.3} parent=115 // pred_region
                _
              $region142: #{variational_linear_forward.3} parent=115 // pred_fallthru
                _
            $region116: #{variational_linear_forward.3} parent=111 // pred_fallthru
              _
            // Predicated region
            $region117: #{variational_linear_forward.3} parent=111 // pred_check
              _
            $region118: #{variational_linear_forward.3} parent=111 // pred_check_branch
              %462 = sbr.rel target = $region120
            $region119: #{variational_linear_forward.3} parent=111 // pred_region
              %s464 = ssub.s32 256, 1
              loop: start=0, step=1, limit=1
              $region121: #{variational_linear_forward.3} parent=119 // loop_pre_header
                _
              $region122: #{variational_linear_forward.3} parent=119 // loop_header
                %s466 = sphi 0, %s470
                %p467 = scmp.ge.s32.totalorder %s466, 1
                %s471 = sphi %s456, %s456
                %s472 = sphi %s451, %s451
              $region123: #{variational_linear_forward.3} parent=119 // loop_header_branch
                %469 = sbr.rel (%p467) target = $region127
              $region124: #{variational_linear_forward.3} parent=119 // loop_body
                %v473 = vld [vmem:[%s471] sm:%s464]
                %474 = vst [vmem:[%s472] sm:%s464] %v473
                %v475 = vld [vmem:[%s471 + $0x38] sm:%s464]
                %476 = vst [vmem:[%s472 + $0x8] sm:%s464] %v475
                %v477 = vld [vmem:[%s471 + $0x70] sm:%s464]
                %478 = vst [vmem:[%s472 + $0x10] sm:%s464] %v477
                %v479 = vld [vmem:[%s471 + $0xa8] sm:%s464]
                %480 = vst [vmem:[%s472 + $0x18] sm:%s464] %v479
                %v481 = vld [vmem:[%s471 + $0xe0] sm:%s464]
                %482 = vst [vmem:[%s472 + $0x20] sm:%s464] %v481
                %v483 = vld [vmem:[%s471 + $0x118] sm:%s464]
                %484 = vst [vmem:[%s472 + $0x28] sm:%s464] %v483
                %v485 = vld [vmem:[%s471 + $0x150] sm:%s464]
                %486 = vst [vmem:[%s472 + $0x30] sm:%s464] %v485
                %v487 = vld [vmem:[%s471 + $0x188] sm:%s464]
                %488 = vst [vmem:[%s472 + $0x38] sm:%s464] %v487
                %v489 = vld [vmem:[%s471 + $0x1c0] sm:%s464]
                %490 = vst [vmem:[%s472 + $0x40] sm:%s464] %v489
                %v491 = vld [vmem:[%s471 + $0x1f8] sm:%s464]
                %492 = vst [vmem:[%s472 + $0x48] sm:%s464] %v491
                %v493 = vld [vmem:[%s471 + $0x230] sm:%s464]
                %494 = vst [vmem:[%s472 + $0x50] sm:%s464] %v493
                %v495 = vld [vmem:[%s471 + $0x268] sm:%s464]
                %496 = vst [vmem:[%s472 + $0x58] sm:%s464] %v495
                %v497 = vld [vmem:[%s471 + $0x2a0] sm:%s464]
                %498 = vst [vmem:[%s472 + $0x60] sm:%s464] %v497
                %v499 = vld [vmem:[%s471 + $0x2d8] sm:%s464]
                %500 = vst [vmem:[%s472 + $0x68] sm:%s464] %v499
                %v501 = vld [vmem:[%s471 + $0x310] sm:%s464]
                %502 = vst [vmem:[%s472 + $0x70] sm:%s464] %v501
                %v503 = vld [vmem:[%s471 + $0x348] sm:%s464]
                %504 = vst [vmem:[%s472 + $0x78] sm:%s464] %v503
              $region125: #{variational_linear_forward.3} parent=119 // loop_footer
                %s470 = sadd.s32 1, %s466
              $region126: #{variational_linear_forward.3} parent=119 // loop_footer_branch
                %465 = sbr.rel target = $region122
              $region127: #{variational_linear_forward.3} parent=119 // loop_exit
                _
            $region120: #{variational_linear_forward.3} parent=111 // pred_fallthru
              _
          $region112: #{variational_linear_forward.3} parent=107 // pred_fallthru
            _
          %549 = vnop
        $region108: #{variational_linear_forward.3} parent=27 // pred_fallthru
          _
      $region28: #{variational_linear_forward.3} parent=5 // pred_fallthru
        _
      %p550 = scmp.le.s32.totalorder 1, %s13
      %p551 = scmp.lt.s32.totalorder %s13, 8
      %p552 = pnand %p550, %p551
      %p553 = pneg %p552
      // Predicated region
      $region143: #{variational_linear_forward.3} parent=5 // pred_check
        _
      $region144: #{variational_linear_forward.3} parent=5 // pred_check_branch
        %555 = sbr.rel (%p552) target = $region146
      $region145: #{variational_linear_forward.3} parent=5 // pred_region
        %s556 = ssub.s32 %s13, 1
        %s557 = sand.u32 %s47, 1
        %s558 = sand.u32 %s47, 1
        %s559 = smul.addr %s558, 64
        %s560 = scalar_lea.vmem [#allocation4], %s559
        // Predicated region
        $region147: #{variational_linear_forward.3} parent=145 // pred_check
          %p561 = pneg %p60
        $region148: #{variational_linear_forward.3} parent=145 // pred_check_branch
          %563 = sbr.rel (%p561) target = $region150
        $region149: #{variational_linear_forward.3} parent=145 // pred_region
          _
        $region150: #{variational_linear_forward.3} parent=145 // pred_fallthru
          _
        %s564 = sand.u32 %s75, 1
        %s565 = sand.u32 %s75, 1
        %s566 = smul.addr %s565, 128
        %s567 = scalar_lea.vmem [#allocation5], %s566
        // Predicated region
        $region151: #{variational_linear_forward.3} parent=145 // pred_check
          %p568 = pneg %p88
        $region152: #{variational_linear_forward.3} parent=145 // pred_check_branch
          %570 = sbr.rel (%p568) target = $region154
        $region153: #{variational_linear_forward.3} parent=145 // pred_region
          _
        $region154: #{variational_linear_forward.3} parent=145 // pred_fallthru
          _
        %s571 = sand.u32 %s103, 1
        %s572 = sand.u32 %s103, 1
        %s573 = smul.addr %s572, 128
        %s574 = scalar_lea.vmem [#allocation6], %s573
        // Predicated region
        $region155: #{variational_linear_forward.3} parent=145 // pred_check
          %p575 = pneg %p116
        $region156: #{variational_linear_forward.3} parent=145 // pred_check_branch
          %577 = sbr.rel (%p575) target = $region158
        $region157: #{variational_linear_forward.3} parent=145 // pred_region
          _
        $region158: #{variational_linear_forward.3} parent=145 // pred_fallthru
          _
        %s578 = sand.u32 %s47, 1
        %s579 = sand.u32 %s47, 1
        %s580 = smul.addr %s579, 64
        %s581 = scalar_lea.vmem [#allocation4], %s580
        %p582 = pneg %p60
        %p583 = pneg %p57
        %s584 = sand.u32 %s75, 1
        %s585 = sand.u32 %s75, 1
        %s586 = smul.addr %s585, 128
        %s587 = scalar_lea.vmem [#allocation5], %s586
        %p588 = pneg %p88
        %p589 = pneg %p85
        %s590 = sand.u32 %s103, 1
        %s591 = sand.u32 %s103, 1
        %s592 = smul.addr %s591, 128
        %s593 = scalar_lea.vmem [#allocation6], %s592
        %p594 = pneg %p116
        %p595 = pneg %p113
        %p596 = scmp.lt.s32.totalorder %s24, 0
        %s597 = scalar_select %p596, %s24, 0
        %s598 = scalar_lea.vmem %s3, %s597
        %p599 = pneg %p142
        %p600 = pneg %p139
        %p601 = scmp.lt.s32.totalorder %s24, 0
        %s602 = scalar_select %p601, %s24, 0
        %s603 = scalar_lea.vmem %s4, %s602
        %p604 = pneg %p168
        %p605 = pneg %p165
        %s606 = smul.u32 8, %s23
        %p607 = scmp.lt.s32.totalorder %s606, 7
        %s608 = scalar_select %p607, %s606, 7
        %p609 = scmp.lt.s32.totalorder %s24, 0
        %s610 = scalar_select %p609, %s24, 0
        %s611 = sadd.s32 %s610, %s608
        %s612 = smul.addr %s611, 8
        %s613 = scalar_lea.vmem %s5, %s612
        %p614 = pneg %p196
        %p615 = pneg %p193
        %p616 = pneg %p224
        %p617 = pneg %p221
        %s618 = smul.u32 8, %s23
        %s619 = smul.u32 16, %s24
        %s620 = smul.u32 16, %s24
        %p621 = scmp.lt.s32.totalorder %s24, 0
        %s622 = scalar_select %p621, %s24, 0
        %s623 = scalar_lea.vmem %s3, %s622
        %p624 = scmp.lt.s32.totalorder %s24, 0
        %s625 = scalar_select %p624, %s24, 0
        %s626 = scalar_lea.vmem %s4, %s625
        %s627 = smul.u32 8, %s23
        %p628 = scmp.lt.s32.totalorder %s627, 7
        %s629 = scalar_select %p628, %s627, 7
        %p630 = scmp.lt.s32.totalorder %s24, 0
        %s631 = scalar_select %p630, %s24, 0
        %s632 = sadd.s32 %s631, %s629
        %s633 = smul.addr %s632, 8
        %s634 = scalar_lea.vmem %s5, %s633
        %s635 = smul.u32 8, %s23
        %s636 = smul.u32 8, %s23
        %p637 = scmp.eq.s32.totalorder %s25, 0
        // Predicated region
        $region159: #{variational_linear_forward.3} parent=145 // pred_check
          %p638 = pneg %p637
        $region160: #{variational_linear_forward.3} parent=145 // pred_check_branch
          %640 = sbr.rel (%p638) target = $region162
        $region161: #{variational_linear_forward.3} parent=145 // pred_region
          %641 = vst [vmem:[#allocation2] sm:$0xff] 0.0
          %642 = vst [vmem:[#allocation2 + $0x8] sm:$0xff] 0.0
          %643 = vst [vmem:[#allocation2 + $0x10] sm:$0xff] 0.0
          %644 = vst [vmem:[#allocation2 + $0x18] sm:$0xff] 0.0
          %645 = vst [vmem:[#allocation2 + $0x20] sm:$0xff] 0.0
          %646 = vst [vmem:[#allocation2 + $0x28] sm:$0xff] 0.0
          %647 = vst [vmem:[#allocation2 + $0x30] sm:$0xff] 0.0
          %648 = vst [vmem:[#allocation2 + $0x38] sm:$0xff] 0.0
          %649 = vst [vmem:[#allocation3] sm:$0xff] 0.0
          %650 = vst [vmem:[#allocation3 + $0x8] sm:$0xff] 0.0
          %651 = vst [vmem:[#allocation3 + $0x10] sm:$0xff] 0.0
          %652 = vst [vmem:[#allocation3 + $0x18] sm:$0xff] 0.0
          %653 = vst [vmem:[#allocation3 + $0x20] sm:$0xff] 0.0
          %654 = vst [vmem:[#allocation3 + $0x28] sm:$0xff] 0.0
          %655 = vst [vmem:[#allocation3 + $0x30] sm:$0xff] 0.0
          %656 = vst [vmem:[#allocation3 + $0x38] sm:$0xff] 0.0
        $region162: #{variational_linear_forward.3} parent=145 // pred_fallthru
          _
        %v657 = vld [vmem:[%s560] sm:$0xff]
        %v658 = vld [vmem:[%s560 + $0x8] sm:$0xff]
        %v659 = vld [vmem:[%s560 + $0x10] sm:$0xff]
        %v660 = vld [vmem:[%s560 + $0x18] sm:$0xff]
        %v661 = vld [vmem:[%s560 + $0x20] sm:$0xff]
        %v662 = vld [vmem:[%s560 + $0x28] sm:$0xff]
        %v663 = vld [vmem:[%s560 + $0x30] sm:$0xff]
        %v664 = vld [vmem:[%s560 + $0x38] sm:$0xff]
        %v665 = vld [vmem:[#allocation2] sm:$0xff]
        %v666 = vld [vmem:[#allocation2 + $0x8] sm:$0xff]
        %v667 = vld [vmem:[#allocation2 + $0x10] sm:$0xff]
        %v668 = vld [vmem:[#allocation2 + $0x18] sm:$0xff]
        %v669 = vld [vmem:[#allocation2 + $0x20] sm:$0xff]
        %v670 = vld [vmem:[#allocation2 + $0x28] sm:$0xff]
        %v671 = vld [vmem:[#allocation2 + $0x30] sm:$0xff]
        %v672 = vld [vmem:[#allocation2 + $0x38] sm:$0xff]
        %v673 = vld [vmem:[%s567] sm:$0xff]
        %v674 = vld [vmem:[%s567 + $0x8] sm:$0xff]
        %v675 = vld [vmem:[%s567 + $0x10] sm:$0xff]
        %v676 = vld [vmem:[%s567 + $0x18] sm:$0xff]
        %v677 = vld [vmem:[%s567 + $0x20] sm:$0xff]
        %v678 = vld [vmem:[%s567 + $0x28] sm:$0xff]
        %v679 = vld [vmem:[%s567 + $0x30] sm:$0xff]
        %v680 = vld [vmem:[%s567 + $0x38] sm:$0xff]
        %v681 = vld [vmem:[%s567 + $0x40] sm:$0xff]
        %v682 = vld [vmem:[%s567 + $0x48] sm:$0xff]
        %v683 = vld [vmem:[%s567 + $0x50] sm:$0xff]
        %v684 = vld [vmem:[%s567 + $0x58] sm:$0xff]
        %v685 = vld [vmem:[%s567 + $0x60] sm:$0xff]
        %v686 = vld [vmem:[%s567 + $0x68] sm:$0xff]
        %v687 = vld [vmem:[%s567 + $0x70] sm:$0xff]
        %v688 = vld [vmem:[%s567 + $0x78] sm:$0xff]
        %689 = vmatprep.subr.mxu0 0.0
        %690 = vmatpush1.xpose.msra.mxu0 %v688
        %691 = vmatprep.subr.mxu0 0.0
        %692 = vmatpush1.xpose.msra.mxu0 %v687
        %693 = vmatprep.subr.mxu0 0.0
        %694 = vmatpush1.xpose.msra.mxu0 %v686
        %695 = vmatprep.subr.mxu0 0.0
        %696 = vmatpush1.xpose.msra.mxu0 %v685
        %697 = vmatprep.subr.mxu0 0.0
        %698 = vmatpush1.xpose.msra.mxu0 %v684
        %699 = vmatprep.subr.mxu0 0.0
        %700 = vmatpush1.xpose.msra.mxu0 %v683
        %701 = vmatprep.subr.mxu0 0.0
        %702 = vmatpush1.xpose.msra.mxu0 %v682
        %703 = vmatprep.subr.mxu0 0.0
        %704 = vmatpush1.xpose.msra.mxu0 %v681
        %705 = vmatprep.subr.mxu0 0.0
        %706 = vmatpush1.xpose.msra.mxu0 %v680
        %707 = vmatprep.subr.mxu0 0.0
        %708 = vmatpush1.xpose.msra.mxu0 %v679
        %709 = vmatprep.subr.mxu0 0.0
        %710 = vmatpush1.xpose.msra.mxu0 %v678
        %711 = vmatprep.subr.mxu0 0.0
        %712 = vmatpush1.xpose.msra.mxu0 %v677
        %713 = vmatprep.subr.mxu0 0.0
        %714 = vmatpush1.xpose.msra.mxu0 %v676
        %715 = vmatprep.subr.mxu0 0.0
        %716 = vmatpush1.xpose.msra.mxu0 %v675
        %717 = vmatprep.subr.mxu0 0.0
        %718 = vmatpush1.xpose.msra.mxu0 %v674
        %719 = vmatprep.subr.mxu0 0.0
        %720 = vmatpush1.xpose.msra.mxu0 %v673
        %721 = vmatprep.subr.mxu0 0.0
        %722 = vmatpush2.xpose.msra.mxu0 0.0
        %723 = vmatprep.subr.mxu0 0.0
        %724 = vmatpush2.xpose.msra.mxu0 0.0
        %725 = vmatprep.subr.mxu0 0.0
        %726 = vmatpush2.xpose.msra.mxu0 0.0
        %727 = vmatprep.subr.mxu0 0.0
        %728 = vmatpush2.xpose.msra.mxu0 0.0
        %729 = vmatprep.subr.mxu0 0.0
        %730 = vmatpush2.xpose.msra.mxu0 0.0
        %731 = vmatprep.subr.mxu0 0.0
        %732 = vmatpush2.xpose.msra.mxu0 0.0
        %733 = vmatprep.subr.mxu0 0.0
        %734 = vmatpush2.xpose.msra.mxu0 0.0
        %735 = vmatprep.subr.mxu0 0.0
        %736 = vmatpush2.xpose.msra.mxu0 0.0
        %737 = vmatprep.subr.mxu0 0.0
        %738 = vmatpush2.xpose.msra.mxu0 0.0
        %739 = vmatprep.subr.mxu0 0.0
        %740 = vmatpush2.xpose.msra.mxu0 0.0
        %741 = vmatprep.subr.mxu0 0.0
        %742 = vmatpush2.xpose.msra.mxu0 0.0
        %743 = vmatprep.subr.mxu0 0.0
        %744 = vmatpush2.xpose.msra.mxu0 0.0
        %745 = vmatprep.subr.mxu0 0.0
        %746 = vmatpush2.xpose.msra.mxu0 0.0
        %747 = vmatprep.subr.mxu0 0.0
        %748 = vmatpush2.xpose.msra.mxu0 0.0
        %749 = vmatprep.subr.mxu0 0.0
        %750 = vmatpush2.xpose.msra.mxu0 0.0
        %751 = vmatprep.subr.mxu0 0.0
        %752 = vmatpush2.xpose.msra.mxu0 0.0
        %753 = vmatprep.mubr.f32.mxu0 0.0
        %754 = vmatmul.mubr.f32.gmra.mxu0 %v657
        %v755 = vpop.f32.mrf.mxu0
        %v756 = vadd.f32 0.0, %v755
        %v757 = vpop.f32.mrf.mxu0
        %758 = vmatprep.mubr.f32.mxu0 0.0
        %759 = vmatmul.mubr.f32.gmra.mxu0 %v658
        %v760 = vpop.f32.mrf.mxu0
        %v761 = vadd.f32 0.0, %v760
        %v762 = vpop.f32.mrf.mxu0
        %763 = vmatprep.mubr.f32.mxu0 0.0
        %764 = vmatmul.mubr.f32.gmra.mxu0 %v659
        %v765 = vpop.f32.mrf.mxu0
        %v766 = vadd.f32 0.0, %v765
        %v767 = vpop.f32.mrf.mxu0
        %768 = vmatprep.mubr.f32.mxu0 0.0
        %769 = vmatmul.mubr.f32.gmra.mxu0 %v660
        %v770 = vpop.f32.mrf.mxu0
        %v771 = vadd.f32 0.0, %v770
        %v772 = vpop.f32.mrf.mxu0
        %773 = vmatprep.mubr.f32.mxu0 0.0
        %774 = vmatmul.mubr.f32.gmra.mxu0 %v661
        %v775 = vpop.f32.mrf.mxu0
        %v776 = vadd.f32 0.0, %v775
        %v777 = vpop.f32.mrf.mxu0
        %778 = vmatprep.mubr.f32.mxu0 0.0
        %779 = vmatmul.mubr.f32.gmra.mxu0 %v662
        %v780 = vpop.f32.mrf.mxu0
        %v781 = vadd.f32 0.0, %v780
        %v782 = vpop.f32.mrf.mxu0
        %783 = vmatprep.mubr.f32.mxu0 0.0
        %784 = vmatmul.mubr.f32.gmra.mxu0 %v663
        %v785 = vpop.f32.mrf.mxu0
        %v786 = vadd.f32 0.0, %v785
        %v787 = vpop.f32.mrf.mxu0
        %788 = vmatprep.mubr.f32.mxu0 0.0
        %789 = vmatmul.mubr.f32.gmra.mxu0 %v664
        %v790 = vpop.f32.mrf.mxu0
        %v791 = vadd.f32 0.0, %v790
        %v792 = vpop.f32.mrf.mxu0
        %793 = vdwg.mxu0
        %v794 = vadd.f32 %v665, %v756
        %v795 = vadd.f32 %v666, %v761
        %v796 = vadd.f32 %v667, %v766
        %v797 = vadd.f32 %v668, %v771
        %v798 = vadd.f32 %v669, %v776
        %v799 = vadd.f32 %v670, %v781
        %v800 = vadd.f32 %v671, %v786
        %v801 = vadd.f32 %v672, %v791
        %802 = vst [vmem:[#allocation2] sm:$0xff] %v794
        %803 = vst [vmem:[#allocation2 + $0x8] sm:$0xff] %v795
        %804 = vst [vmem:[#allocation2 + $0x10] sm:$0xff] %v796
        %805 = vst [vmem:[#allocation2 + $0x18] sm:$0xff] %v797
        %806 = vst [vmem:[#allocation2 + $0x20] sm:$0xff] %v798
        %807 = vst [vmem:[#allocation2 + $0x28] sm:$0xff] %v799
        %808 = vst [vmem:[#allocation2 + $0x30] sm:$0xff] %v800
        %809 = vst [vmem:[#allocation2 + $0x38] sm:$0xff] %v801
        %v810 = vld [vmem:[#allocation3] sm:$0xff]
        %v811 = vld [vmem:[#allocation3 + $0x8] sm:$0xff]
        %v812 = vld [vmem:[#allocation3 + $0x10] sm:$0xff]
        %v813 = vld [vmem:[#allocation3 + $0x18] sm:$0xff]
        %v814 = vld [vmem:[#allocation3 + $0x20] sm:$0xff]
        %v815 = vld [vmem:[#allocation3 + $0x28] sm:$0xff]
        %v816 = vld [vmem:[#allocation3 + $0x30] sm:$0xff]
        %v817 = vld [vmem:[#allocation3 + $0x38] sm:$0xff]
        %v818 = vmul.f32 %v657, %v657
        %v819 = vmul.f32 %v658, %v658
        %v820 = vmul.f32 %v659, %v659
        %v821 = vmul.f32 %v660, %v660
        %v822 = vmul.f32 %v661, %v661
        %v823 = vmul.f32 %v662, %v662
        %v824 = vmul.f32 %v663, %v663
        %v825 = vmul.f32 %v664, %v664
        %v826 = vld [vmem:[%s574] sm:$0xff]
        %v827 = vld [vmem:[%s574 + $0x8] sm:$0xff]
        %v828 = vld [vmem:[%s574 + $0x10] sm:$0xff]
        %v829 = vld [vmem:[%s574 + $0x18] sm:$0xff]
        %v830 = vld [vmem:[%s574 + $0x20] sm:$0xff]
        %v831 = vld [vmem:[%s574 + $0x28] sm:$0xff]
        %v832 = vld [vmem:[%s574 + $0x30] sm:$0xff]
        %v833 = vld [vmem:[%s574 + $0x38] sm:$0xff]
        %v834 = vld [vmem:[%s574 + $0x40] sm:$0xff]
        %v835 = vld [vmem:[%s574 + $0x48] sm:$0xff]
        %v836 = vld [vmem:[%s574 + $0x50] sm:$0xff]
        %v837 = vld [vmem:[%s574 + $0x58] sm:$0xff]
        %v838 = vld [vmem:[%s574 + $0x60] sm:$0xff]
        %v839 = vld [vmem:[%s574 + $0x68] sm:$0xff]
        %v840 = vld [vmem:[%s574 + $0x70] sm:$0xff]
        %v841 = vld [vmem:[%s574 + $0x78] sm:$0xff]
        %842 = vmatprep.subr.mxu0 0.0
        %843 = vmatpush1.xpose.msra.mxu0 %v841
        %844 = vmatprep.subr.mxu0 0.0
        %845 = vmatpush1.xpose.msra.mxu0 %v840
        %846 = vmatprep.subr.mxu0 0.0
        %847 = vmatpush1.xpose.msra.mxu0 %v839
        %848 = vmatprep.subr.mxu0 0.0
        %849 = vmatpush1.xpose.msra.mxu0 %v838
        %850 = vmatprep.subr.mxu0 0.0
        %851 = vmatpush1.xpose.msra.mxu0 %v837
        %852 = vmatprep.subr.mxu0 0.0
        %853 = vmatpush1.xpose.msra.mxu0 %v836
        %854 = vmatprep.subr.mxu0 0.0
        %855 = vmatpush1.xpose.msra.mxu0 %v835
        %856 = vmatprep.subr.mxu0 0.0
        %857 = vmatpush1.xpose.msra.mxu0 %v834
        %858 = vmatprep.subr.mxu0 0.0
        %859 = vmatpush1.xpose.msra.mxu0 %v833
        %860 = vmatprep.subr.mxu0 0.0
        %861 = vmatpush1.xpose.msra.mxu0 %v832
        %862 = vmatprep.subr.mxu0 0.0
        %863 = vmatpush1.xpose.msra.mxu0 %v831
        %864 = vmatprep.subr.mxu0 0.0
        %865 = vmatpush1.xpose.msra.mxu0 %v830
        %866 = vmatprep.subr.mxu0 0.0
        %867 = vmatpush1.xpose.msra.mxu0 %v829
        %868 = vmatprep.subr.mxu0 0.0
        %869 = vmatpush1.xpose.msra.mxu0 %v828
        %870 = vmatprep.subr.mxu0 0.0
        %871 = vmatpush1.xpose.msra.mxu0 %v827
        %872 = vmatprep.subr.mxu0 0.0
        %873 = vmatpush1.xpose.msra.mxu0 %v826
        %874 = vmatprep.subr.mxu0 0.0
        %875 = vmatpush2.xpose.msra.mxu0 0.0
        %876 = vmatprep.subr.mxu0 0.0
        %877 = vmatpush2.xpose.msra.mxu0 0.0
        %878 = vmatprep.subr.mxu0 0.0
        %879 = vmatpush2.xpose.msra.mxu0 0.0
        %880 = vmatprep.subr.mxu0 0.0
        %881 = vmatpush2.xpose.msra.mxu0 0.0
        %882 = vmatprep.subr.mxu0 0.0
        %883 = vmatpush2.xpose.msra.mxu0 0.0
        %884 = vmatprep.subr.mxu0 0.0
        %885 = vmatpush2.xpose.msra.mxu0 0.0
        %886 = vmatprep.subr.mxu0 0.0
        %887 = vmatpush2.xpose.msra.mxu0 0.0
        %888 = vmatprep.subr.mxu0 0.0
        %889 = vmatpush2.xpose.msra.mxu0 0.0
        %890 = vmatprep.subr.mxu0 0.0
        %891 = vmatpush2.xpose.msra.mxu0 0.0
        %892 = vmatprep.subr.mxu0 0.0
        %893 = vmatpush2.xpose.msra.mxu0 0.0
        %894 = vmatprep.subr.mxu0 0.0
        %895 = vmatpush2.xpose.msra.mxu0 0.0
        %896 = vmatprep.subr.mxu0 0.0
        %897 = vmatpush2.xpose.msra.mxu0 0.0
        %898 = vmatprep.subr.mxu0 0.0
        %899 = vmatpush2.xpose.msra.mxu0 0.0
        %900 = vmatprep.subr.mxu0 0.0
        %901 = vmatpush2.xpose.msra.mxu0 0.0
        %902 = vmatprep.subr.mxu0 0.0
        %903 = vmatpush2.xpose.msra.mxu0 0.0
        %904 = vmatprep.subr.mxu0 0.0
        %905 = vmatpush2.xpose.msra.mxu0 0.0
        %906 = vmatprep.mubr.f32.mxu0 0.0
        %907 = vmatmul.mubr.f32.gmra.mxu0 %v818
        %v908 = vpop.f32.mrf.mxu0
        %v909 = vadd.f32 0.0, %v908
        %v910 = vpop.f32.mrf.mxu0
        %911 = vmatprep.mubr.f32.mxu0 0.0
        %912 = vmatmul.mubr.f32.gmra.mxu0 %v819
        %v913 = vpop.f32.mrf.mxu0
        %v914 = vadd.f32 0.0, %v913
        %v915 = vpop.f32.mrf.mxu0
        %916 = vmatprep.mubr.f32.mxu0 0.0
        %917 = vmatmul.mubr.f32.gmra.mxu0 %v820
        %v918 = vpop.f32.mrf.mxu0
        %v919 = vadd.f32 0.0, %v918
        %v920 = vpop.f32.mrf.mxu0
        %921 = vmatprep.mubr.f32.mxu0 0.0
        %922 = vmatmul.mubr.f32.gmra.mxu0 %v821
        %v923 = vpop.f32.mrf.mxu0
        %v924 = vadd.f32 0.0, %v923
        %v925 = vpop.f32.mrf.mxu0
        %926 = vmatprep.mubr.f32.mxu0 0.0
        %927 = vmatmul.mubr.f32.gmra.mxu0 %v822
        %v928 = vpop.f32.mrf.mxu0
        %v929 = vadd.f32 0.0, %v928
        %v930 = vpop.f32.mrf.mxu0
        %931 = vmatprep.mubr.f32.mxu0 0.0
        %932 = vmatmul.mubr.f32.gmra.mxu0 %v823
        %v933 = vpop.f32.mrf.mxu0
        %v934 = vadd.f32 0.0, %v933
        %v935 = vpop.f32.mrf.mxu0
        %936 = vmatprep.mubr.f32.mxu0 0.0
        %937 = vmatmul.mubr.f32.gmra.mxu0 %v824
        %v938 = vpop.f32.mrf.mxu0
        %v939 = vadd.f32 0.0, %v938
        %v940 = vpop.f32.mrf.mxu0
        %941 = vmatprep.mubr.f32.mxu0 0.0
        %942 = vmatmul.mubr.f32.gmra.mxu0 %v825
        %v943 = vpop.f32.mrf.mxu0
        %v944 = vadd.f32 0.0, %v943
        %v945 = vpop.f32.mrf.mxu0
        %946 = vdwg.mxu0
        %v947 = vadd.f32 %v810, %v909
        %v948 = vadd.f32 %v811, %v914
        %v949 = vadd.f32 %v812, %v919
        %v950 = vadd.f32 %v813, %v924
        %v951 = vadd.f32 %v814, %v929
        %v952 = vadd.f32 %v815, %v934
        %v953 = vadd.f32 %v816, %v939
        %v954 = vadd.f32 %v817, %v944
        %955 = vst [vmem:[#allocation3] sm:$0xff] %v947
        %956 = vst [vmem:[#allocation3 + $0x8] sm:$0xff] %v948
        %957 = vst [vmem:[#allocation3 + $0x10] sm:$0xff] %v949
        %958 = vst [vmem:[#allocation3 + $0x18] sm:$0xff] %v950
        %959 = vst [vmem:[#allocation3 + $0x20] sm:$0xff] %v951
        %960 = vst [vmem:[#allocation3 + $0x28] sm:$0xff] %v952
        %961 = vst [vmem:[#allocation3 + $0x30] sm:$0xff] %v953
        %962 = vst [vmem:[#allocation3 + $0x38] sm:$0xff] %v954
        %p963 = scmp.eq.s32.totalorder %s25, 6
        // Predicated region
        $region163: #{variational_linear_forward.3} parent=145 // pred_check
          %p964 = pneg %p963
        $region164: #{variational_linear_forward.3} parent=145 // pred_check_branch
          %966 = sbr.rel (%p964) target = $region166
        $region165: #{variational_linear_forward.3} parent=145 // pred_region
          %v967 = vld [vmem:[#allocation2] sm:$0xff]
          %v968 = vld [vmem:[#allocation2 + $0x8] sm:$0xff]
          %v969 = vld [vmem:[#allocation2 + $0x10] sm:$0xff]
          %v970 = vld [vmem:[#allocation2 + $0x18] sm:$0xff]
          %v971 = vld [vmem:[#allocation2 + $0x20] sm:$0xff]
          %v972 = vld [vmem:[#allocation2 + $0x28] sm:$0xff]
          %v973 = vld [vmem:[#allocation2 + $0x30] sm:$0xff]
          %v974 = vld [vmem:[#allocation2 + $0x38] sm:$0xff]
          %v975 = vld [vmem:[%s623] sm:$0x1]
          %v977 = vlaneseq
          %v978 = vshrl.u32 %v977, 7
          %v979 = vsub.s32 0, %v978
          %v980 = vrot.slane %v975, %v979
          %v982 = vadd.f32 %v967, %v980
          %v983 = vadd.f32 %v968, %v980
          %v984 = vadd.f32 %v969, %v980
          %v985 = vadd.f32 %v970, %v980
          %v986 = vadd.f32 %v971, %v980
          %v987 = vadd.f32 %v972, %v980
          %v988 = vadd.f32 %v973, %v980
          %v989 = vadd.f32 %v974, %v980
          %v990 = vld [vmem:[#allocation3] sm:$0xff]
          %v991 = vld [vmem:[#allocation3 + $0x8] sm:$0xff]
          %v992 = vld [vmem:[#allocation3 + $0x10] sm:$0xff]
          %v993 = vld [vmem:[#allocation3 + $0x18] sm:$0xff]
          %v994 = vld [vmem:[#allocation3 + $0x20] sm:$0xff]
          %v995 = vld [vmem:[#allocation3 + $0x28] sm:$0xff]
          %v996 = vld [vmem:[#allocation3 + $0x30] sm:$0xff]
          %v997 = vld [vmem:[#allocation3 + $0x38] sm:$0xff]
          %v998 = vld [vmem:[%s626] sm:$0x1]
          %v1000 = vlaneseq
          %v1001 = vshrl.u32 %v1000, 7
          %v1002 = vsub.s32 0, %v1001
          %v1003 = vrot.slane %v998, %v1002
          %v1005 = vadd.f32 %v990, %v1003
          %v1006 = vadd.f32 %v991, %v1003
          %v1007 = vadd.f32 %v992, %v1003
          %v1008 = vadd.f32 %v993, %v1003
          %v1009 = vadd.f32 %v994, %v1003
          %v1010 = vadd.f32 %v995, %v1003
          %v1011 = vadd.f32 %v996, %v1003
          %v1012 = vadd.f32 %v997, %v1003
          %v1013 = vadd.f32 %v1005, 1e-16
          %v1014 = vadd.f32 %v1006, 1e-16
          %v1015 = vadd.f32 %v1007, 1e-16
          %v1016 = vadd.f32 %v1008, 1e-16
          %v1017 = vadd.f32 %v1009, 1e-16
          %v1018 = vadd.f32 %v1010, 1e-16
          %v1019 = vadd.f32 %v1011, 1e-16
          %v1020 = vadd.f32 %v1012, 1e-16
          %v1021 = vrsqrt.pop %v1013
          %v1022 = vmul.f32 %v1013, %v1021
          %vm1023 = vcmp.eq.f32.partialorder %v1013, inf
          %v1024 = vsel %vm1023, %v1013, %v1022
          %vm1025 = vcmp.eq.f32.partialorder %v1013, 0.0
          %v1026 = vand.u32 %v1013, 2147483648
          %v1027 = vsel %vm1025, %v1026, %v1024
          %v1028 = vrsqrt.pop %v1014
          %v1029 = vmul.f32 %v1014, %v1028
          %vm1030 = vcmp.eq.f32.partialorder %v1014, inf
          %v1031 = vsel %vm1030, %v1014, %v1029
          %vm1032 = vcmp.eq.f32.partialorder %v1014, 0.0
          %v1033 = vand.u32 %v1014, 2147483648
          %v1034 = vsel %vm1032, %v1033, %v1031
          %v1035 = vrsqrt.pop %v1015
          %v1036 = vmul.f32 %v1015, %v1035
          %vm1037 = vcmp.eq.f32.partialorder %v1015, inf
          %v1038 = vsel %vm1037, %v1015, %v1036
          %vm1039 = vcmp.eq.f32.partialorder %v1015, 0.0
          %v1040 = vand.u32 %v1015, 2147483648
          %v1041 = vsel %vm1039, %v1040, %v1038
          %v1042 = vrsqrt.pop %v1016
          %v1043 = vmul.f32 %v1016, %v1042
          %vm1044 = vcmp.eq.f32.partialorder %v1016, inf
          %v1045 = vsel %vm1044, %v1016, %v1043
          %vm1046 = vcmp.eq.f32.partialorder %v1016, 0.0
          %v1047 = vand.u32 %v1016, 2147483648
          %v1048 = vsel %vm1046, %v1047, %v1045
          %v1049 = vrsqrt.pop %v1017
          %v1050 = vmul.f32 %v1017, %v1049
          %vm1051 = vcmp.eq.f32.partialorder %v1017, inf
          %v1052 = vsel %vm1051, %v1017, %v1050
          %vm1053 = vcmp.eq.f32.partialorder %v1017, 0.0
          %v1054 = vand.u32 %v1017, 2147483648
          %v1055 = vsel %vm1053, %v1054, %v1052
          %v1056 = vrsqrt.pop %v1018
          %v1057 = vmul.f32 %v1018, %v1056
          %vm1058 = vcmp.eq.f32.partialorder %v1018, inf
          %v1059 = vsel %vm1058, %v1018, %v1057
          %vm1060 = vcmp.eq.f32.partialorder %v1018, 0.0
          %v1061 = vand.u32 %v1018, 2147483648
          %v1062 = vsel %vm1060, %v1061, %v1059
          %v1063 = vrsqrt.pop %v1019
          %v1064 = vmul.f32 %v1019, %v1063
          %vm1065 = vcmp.eq.f32.partialorder %v1019, inf
          %v1066 = vsel %vm1065, %v1019, %v1064
          %vm1067 = vcmp.eq.f32.partialorder %v1019, 0.0
          %v1068 = vand.u32 %v1019, 2147483648
          %v1069 = vsel %vm1067, %v1068, %v1066
          %v1070 = vrsqrt.pop %v1020
          %v1071 = vmul.f32 %v1020, %v1070
          %vm1072 = vcmp.eq.f32.partialorder %v1020, inf
          %v1073 = vsel %vm1072, %v1020, %v1071
          %vm1074 = vcmp.eq.f32.partialorder %v1020, 0.0
          %v1075 = vand.u32 %v1020, 2147483648
          %v1076 = vsel %vm1074, %v1075, %v1073
          %v1077 = vld [vmem:[%s634] sm:$0xff]
          %v1078 = vld [vmem:[%s634 + $0x8] sm:$0xff]
          %v1079 = vld [vmem:[%s634 + $0x10] sm:$0xff]
          %v1080 = vld [vmem:[%s634 + $0x18] sm:$0xff]
          %v1081 = vld [vmem:[%s634 + $0x20] sm:$0xff]
          %v1082 = vld [vmem:[%s634 + $0x28] sm:$0xff]
          %v1083 = vld [vmem:[%s634 + $0x30] sm:$0xff]
          %v1084 = vld [vmem:[%s634 + $0x38] sm:$0xff]
          %v1085 = vmul.f32 %v1027, %v1077
          %v1086 = vmul.f32 %v1034, %v1078
          %v1087 = vmul.f32 %v1041, %v1079
          %v1088 = vmul.f32 %v1048, %v1080
          %v1089 = vmul.f32 %v1055, %v1081
          %v1090 = vmul.f32 %v1062, %v1082
          %v1091 = vmul.f32 %v1069, %v1083
          %v1092 = vmul.f32 %v1076, %v1084
          %v1093 = vadd.f32 %v982, %v1085
          %v1094 = vadd.f32 %v983, %v1086
          %v1095 = vadd.f32 %v984, %v1087
          %v1096 = vadd.f32 %v985, %v1088
          %v1097 = vadd.f32 %v986, %v1089
          %v1098 = vadd.f32 %v987, %v1090
          %v1099 = vadd.f32 %v988, %v1091
          %v1100 = vadd.f32 %v989, %v1092
          %1101 = vst [vmem:[#allocation7] sm:$0xff] %v1093
          %1102 = vst [vmem:[#allocation7 + $0x8] sm:$0xff] %v1094
          %1103 = vst [vmem:[#allocation7 + $0x10] sm:$0xff] %v1095
          %1104 = vst [vmem:[#allocation7 + $0x18] sm:$0xff] %v1096
          %1105 = vst [vmem:[#allocation7 + $0x20] sm:$0xff] %v1097
          %1106 = vst [vmem:[#allocation7 + $0x28] sm:$0xff] %v1098
          %1107 = vst [vmem:[#allocation7 + $0x30] sm:$0xff] %v1099
          %1108 = vst [vmem:[#allocation7 + $0x38] sm:$0xff] %v1100
        $region166: #{variational_linear_forward.3} parent=145 // pred_fallthru
          _
        // Predicated region
        $region167: #{variational_linear_forward.3} parent=145 // pred_check
          %p1109 = pneg %p221
        $region168: #{variational_linear_forward.3} parent=145 // pred_check_branch
          %1111 = sbr.rel (%p1109) target = $region170
        $region169: #{variational_linear_forward.3} parent=145 // pred_region
          %s1112 = smul.u32 8, %s23
          %s1114 = ssub.s32 1024, 1024
          %1115 = vsyncadd [#allocation8], %s1114
          %s1116 = sadd.s32 %s24, %s1112
          %s1117 = smul.addr %s1116, 128
          %s1118 = scalar_lea.hbm %s6, %s1117
          %s1119 = sshll.u32 [#allocation7], 4
          %s1120 = int_to_ptr.vmem [resolvable:$true] %s1119
          %1125 = dma.vmem_to_hbm [thread:$0]  %s1120, 1024, %s1118, [#allocation8], 128, 128, 8
        $region170: #{variational_linear_forward.3} parent=145 // pred_fallthru
          _
        // Predicated region
        $region171: #{variational_linear_forward.3} parent=145 // pred_check
          %p1126 = pneg %p221
        $region172: #{variational_linear_forward.3} parent=145 // pred_check_branch
          %1128 = sbr.rel (%p1126) target = $region174
        $region173: #{variational_linear_forward.3} parent=145 // pred_region
          %1129 = dma.done [#allocation8], 1024
        $region174: #{variational_linear_forward.3} parent=145 // pred_fallthru
          _
      $region146: #{variational_linear_forward.3} parent=5 // pred_fallthru
        _
      %p1130 = scmp.le.s32.totalorder 2, %s13
      // Predicated region
      $region175: #{variational_linear_forward.3} parent=5 // pred_check
        %p1131 = pneg %p1130
      $region176: #{variational_linear_forward.3} parent=5 // pred_check_branch
        %1133 = sbr.rel (%p1131) target = $region178
      $region177: #{variational_linear_forward.3} parent=5 // pred_region
        %s1134 = ssub.s32 %s13, 2
      $region178: #{variational_linear_forward.3} parent=5 // pred_fallthru
        _
    $region6: #{variational_linear_forward.3} parent=1 // loop_footer
      %s17 = sadd.s32 1, %s13
    $region7: #{variational_linear_forward.3} parent=1 // loop_footer_branch
      %12 = sbr.rel target = $region3
    $region8: #{variational_linear_forward.3} parent=1 // loop_exit
      _
    %1135 = vsyncpa [#allocation8], 1
    %s1136 = scalar_lea.sflag [#allocation8], 1
    %1137 = vsyncpa %s1136, 1

// kernel: variational_linear_forward.2
$region0: #{variational_linear_forward.2}
  #allocation0 [shape = 'u32[]', space=smem, size = 0x4, offset = 0x4, fixed_abs, tag = 'smem constant byte address 0x4 - core index']
  #allocation1 [shape = 'u32[144,128]{1,0:T(1,128)}', space=vmem, size = 0x12000, scoped, tag = 'internal scratch']
  %s0 = inlined_call_operand.vmem [shape: f32[128,896], index: 0, kind: input, shape index: {}]
  %s1 = inlined_call_operand.vmem [shape: f32[1,128], index: 1, kind: input, shape index: {}]
  %s2 = inlined_call_operand.vmem [shape: f32[128,896], index: 2, kind: output, shape index: {0}]
  %s3 = inlined_call_operand.vmem [shape: f32[1,128], index: 3, kind: output, shape index: {1}]
  %4 = xla_tuple %s2, %s3
  %s5 = sld [smem:[#allocation0]]
  $region26: #{variational_linear_forward.2} parent=0
    _
  %s7 = ssub.s32 1, %s5
  %s8 = scalar_select 0, %s7, %s5
  // Predicated region
  $region2: #{variational_linear_forward.2} parent=0 // pred_check
    _
  $region3: #{variational_linear_forward.2} parent=0 // pred_check_branch
    %10 = sbr.rel (0) target = $region5
  $region4: #{variational_linear_forward.2} parent=0 // pred_region
    _
  $region5: #{variational_linear_forward.2} parent=0 // pred_fallthru
    _
  // Predicated region
  $region6: #{variational_linear_forward.2} parent=0 // pred_check
    _
  $region7: #{variational_linear_forward.2} parent=0 // pred_check_branch
    %12 = sbr.rel (0) target = $region9
  $region8: #{variational_linear_forward.2} parent=0 // pred_region
    _
  $region9: #{variational_linear_forward.2} parent=0 // pred_fallthru
    _
  %v13 = vld [vmem:[%s0] sm:$0xff]
  %v14 = vld [vmem:[%s0 + $0x8] sm:$0xff]
  %v15 = vld [vmem:[%s0 + $0x10] sm:$0xff]
  %v16 = vld [vmem:[%s0 + $0x18] sm:$0xff]
  %v17 = vld [vmem:[%s0 + $0x20] sm:$0xff]
  %v18 = vld [vmem:[%s0 + $0x28] sm:$0xff]
  %v19 = vld [vmem:[%s0 + $0x30] sm:$0xff]
  %v20 = vld [vmem:[%s0 + $0x38] sm:$0xff]
  %v21 = vld [vmem:[%s0 + $0x40] sm:$0xff]
  %v22 = vld [vmem:[%s0 + $0x48] sm:$0xff]
  %v23 = vld [vmem:[%s0 + $0x50] sm:$0xff]
  %v24 = vld [vmem:[%s0 + $0x58] sm:$0xff]
  %v25 = vld [vmem:[%s0 + $0x60] sm:$0xff]
  %v26 = vld [vmem:[%s0 + $0x68] sm:$0xff]
  %v27 = vld [vmem:[%s0 + $0x70] sm:$0xff]
  %v28 = vld [vmem:[%s0 + $0x78] sm:$0xff]
  %v29 = vld [vmem:[%s0 + $0x80] sm:$0xff]
  %v30 = vld [vmem:[%s0 + $0x88] sm:$0xff]
  %v31 = vld [vmem:[%s0 + $0x90] sm:$0xff]
  %v32 = vld [vmem:[%s0 + $0x98] sm:$0xff]
  %v33 = vld [vmem:[%s0 + $0xa0] sm:$0xff]
  %v34 = vld [vmem:[%s0 + $0xa8] sm:$0xff]
  %v35 = vld [vmem:[%s0 + $0xb0] sm:$0xff]
  %v36 = vld [vmem:[%s0 + $0xb8] sm:$0xff]
  %v37 = vld [vmem:[%s0 + $0xc0] sm:$0xff]
  %v38 = vld [vmem:[%s0 + $0xc8] sm:$0xff]
  %v39 = vld [vmem:[%s0 + $0xd0] sm:$0xff]
  %v40 = vld [vmem:[%s0 + $0xd8] sm:$0xff]
  %v41 = vld [vmem:[%s0 + $0xe0] sm:$0xff]
  %v42 = vld [vmem:[%s0 + $0xe8] sm:$0xff]
  %v43 = vld [vmem:[%s0 + $0xf0] sm:$0xff]
  %v44 = vld [vmem:[%s0 + $0xf8] sm:$0xff]
  %v45 = vld [vmem:[%s0 + $0x100] sm:$0xff]
  %v46 = vld [vmem:[%s0 + $0x108] sm:$0xff]
  %v47 = vld [vmem:[%s0 + $0x110] sm:$0xff]
  %v48 = vld [vmem:[%s0 + $0x118] sm:$0xff]
  %v49 = vld [vmem:[%s0 + $0x120] sm:$0xff]
  %v50 = vld [vmem:[%s0 + $0x128] sm:$0xff]
  %v51 = vld [vmem:[%s0 + $0x130] sm:$0xff]
  %v52 = vld [vmem:[%s0 + $0x138] sm:$0xff]
  %v53 = vld [vmem:[%s0 + $0x140] sm:$0xff]
  %v54 = vld [vmem:[%s0 + $0x148] sm:$0xff]
  %v55 = vld [vmem:[%s0 + $0x150] sm:$0xff]
  %v56 = vld [vmem:[%s0 + $0x158] sm:$0xff]
  %v57 = vld [vmem:[%s0 + $0x160] sm:$0xff]
  %v58 = vld [vmem:[%s0 + $0x168] sm:$0xff]
  %v59 = vld [vmem:[%s0 + $0x170] sm:$0xff]
  %v60 = vld [vmem:[%s0 + $0x178] sm:$0xff]
  %v61 = vld [vmem:[%s0 + $0x180] sm:$0xff]
  %v62 = vld [vmem:[%s0 + $0x188] sm:$0xff]
  %v63 = vld [vmem:[%s0 + $0x190] sm:$0xff]
  %v64 = vld [vmem:[%s0 + $0x198] sm:$0xff]
  %v65 = vld [vmem:[%s0 + $0x1a0] sm:$0xff]
  %v66 = vld [vmem:[%s0 + $0x1a8] sm:$0xff]
  %v67 = vld [vmem:[%s0 + $0x1b0] sm:$0xff]
  %v68 = vld [vmem:[%s0 + $0x1b8] sm:$0xff]
  %v69 = vld [vmem:[%s0 + $0x1c0] sm:$0xff]
  %v70 = vld [vmem:[%s0 + $0x1c8] sm:$0xff]
  %v71 = vld [vmem:[%s0 + $0x1d0] sm:$0xff]
  %v72 = vld [vmem:[%s0 + $0x1d8] sm:$0xff]
  %v73 = vld [vmem:[%s0 + $0x1e0] sm:$0xff]
  %v74 = vld [vmem:[%s0 + $0x1e8] sm:$0xff]
  %v75 = vld [vmem:[%s0 + $0x1f0] sm:$0xff]
  %v76 = vld [vmem:[%s0 + $0x1f8] sm:$0xff]
  %v77 = vld [vmem:[%s0 + $0x200] sm:$0xff]
  %v78 = vld [vmem:[%s0 + $0x208] sm:$0xff]
  %v79 = vld [vmem:[%s0 + $0x210] sm:$0xff]
  %v80 = vld [vmem:[%s0 + $0x218] sm:$0xff]
  %v81 = vld [vmem:[%s0 + $0x220] sm:$0xff]
  %v82 = vld [vmem:[%s0 + $0x228] sm:$0xff]
  %v83 = vld [vmem:[%s0 + $0x230] sm:$0xff]
  %v84 = vld [vmem:[%s0 + $0x238] sm:$0xff]
  %v85 = vld [vmem:[%s0 + $0x240] sm:$0xff]
  %v86 = vld [vmem:[%s0 + $0x248] sm:$0xff]
  %v87 = vld [vmem:[%s0 + $0x250] sm:$0xff]
  %v88 = vld [vmem:[%s0 + $0x258] sm:$0xff]
  %v89 = vld [vmem:[%s0 + $0x260] sm:$0xff]
  %v90 = vld [vmem:[%s0 + $0x268] sm:$0xff]
  %v91 = vld [vmem:[%s0 + $0x270] sm:$0xff]
  %v92 = vld [vmem:[%s0 + $0x278] sm:$0xff]
  %v93 = vld [vmem:[%s0 + $0x280] sm:$0xff]
  %v94 = vld [vmem:[%s0 + $0x288] sm:$0xff]
  %v95 = vld [vmem:[%s0 + $0x290] sm:$0xff]
  %v96 = vld [vmem:[%s0 + $0x298] sm:$0xff]
  %v97 = vld [vmem:[%s0 + $0x2a0] sm:$0xff]
  %v98 = vld [vmem:[%s0 + $0x2a8] sm:$0xff]
  %v99 = vld [vmem:[%s0 + $0x2b0] sm:$0xff]
  %v100 = vld [vmem:[%s0 + $0x2b8] sm:$0xff]
  %v101 = vld [vmem:[%s0 + $0x2c0] sm:$0xff]
  %v102 = vld [vmem:[%s0 + $0x2c8] sm:$0xff]
  %v103 = vld [vmem:[%s0 + $0x2d0] sm:$0xff]
  %v104 = vld [vmem:[%s0 + $0x2d8] sm:$0xff]
  %v105 = vld [vmem:[%s0 + $0x2e0] sm:$0xff]
  %v106 = vld [vmem:[%s0 + $0x2e8] sm:$0xff]
  %v107 = vld [vmem:[%s0 + $0x2f0] sm:$0xff]
  %v108 = vld [vmem:[%s0 + $0x2f8] sm:$0xff]
  %v109 = vld [vmem:[%s0 + $0x300] sm:$0xff]
  %v110 = vld [vmem:[%s0 + $0x308] sm:$0xff]
  %v111 = vld [vmem:[%s0 + $0x310] sm:$0xff]
  %v112 = vld [vmem:[%s0 + $0x318] sm:$0xff]
  %v113 = vld [vmem:[%s0 + $0x320] sm:$0xff]
  %v114 = vld [vmem:[%s0 + $0x328] sm:$0xff]
  %v115 = vld [vmem:[%s0 + $0x330] sm:$0xff]
  %v116 = vld [vmem:[%s0 + $0x338] sm:$0xff]
  %v117 = vld [vmem:[%s0 + $0x340] sm:$0xff]
  %v118 = vld [vmem:[%s0 + $0x348] sm:$0xff]
  %v119 = vld [vmem:[%s0 + $0x350] sm:$0xff]
  %v120 = vld [vmem:[%s0 + $0x358] sm:$0xff]
  %v121 = vld [vmem:[%s0 + $0x360] sm:$0xff]
  %v122 = vld [vmem:[%s0 + $0x368] sm:$0xff]
  %v123 = vld [vmem:[%s0 + $0x370] sm:$0xff]
  %v124 = vld [vmem:[%s0 + $0x378] sm:$0xff]
  %v125 = vmax.f32 %v13, 0.0
  %v126 = vmax.f32 %v14, 0.0
  %v127 = vmax.f32 %v15, 0.0
  %v128 = vmax.f32 %v16, 0.0
  %v129 = vmax.f32 %v17, 0.0
  %v130 = vmax.f32 %v18, 0.0
  %v131 = vmax.f32 %v19, 0.0
  %v132 = vmax.f32 %v20, 0.0
  %v133 = vmax.f32 %v21, 0.0
  %v134 = vmax.f32 %v22, 0.0
  %v135 = vmax.f32 %v23, 0.0
  %v136 = vmax.f32 %v24, 0.0
  %v137 = vmax.f32 %v25, 0.0
  %v138 = vmax.f32 %v26, 0.0
  %v139 = vmax.f32 %v27, 0.0
  %v140 = vmax.f32 %v28, 0.0
  %v141 = vmax.f32 %v29, 0.0
  %v142 = vmax.f32 %v30, 0.0
  %v143 = vmax.f32 %v31, 0.0
  %v144 = vmax.f32 %v32, 0.0
  %v145 = vmax.f32 %v33, 0.0
  %v146 = vmax.f32 %v34, 0.0
  %v147 = vmax.f32 %v35, 0.0
  %v148 = vmax.f32 %v36, 0.0
  %v149 = vmax.f32 %v37, 0.0
  %v150 = vmax.f32 %v38, 0.0
  %v151 = vmax.f32 %v39, 0.0
  %v152 = vmax.f32 %v40, 0.0
  %v153 = vmax.f32 %v41, 0.0
  %v154 = vmax.f32 %v42, 0.0
  %v155 = vmax.f32 %v43, 0.0
  %v156 = vmax.f32 %v44, 0.0
  %v157 = vmax.f32 %v45, 0.0
  %v158 = vmax.f32 %v46, 0.0
  %v159 = vmax.f32 %v47, 0.0
  %v160 = vmax.f32 %v48, 0.0
  %v161 = vmax.f32 %v49, 0.0
  %v162 = vmax.f32 %v50, 0.0
  %v163 = vmax.f32 %v51, 0.0
  %v164 = vmax.f32 %v52, 0.0
  %v165 = vmax.f32 %v53, 0.0
  %v166 = vmax.f32 %v54, 0.0
  %v167 = vmax.f32 %v55, 0.0
  %v168 = vmax.f32 %v56, 0.0
  %v169 = vmax.f32 %v57, 0.0
  %v170 = vmax.f32 %v58, 0.0
  %v171 = vmax.f32 %v59, 0.0
  %v172 = vmax.f32 %v60, 0.0
  %v173 = vmax.f32 %v61, 0.0
  %v174 = vmax.f32 %v62, 0.0
  %v175 = vmax.f32 %v63, 0.0
  %v176 = vmax.f32 %v64, 0.0
  %v177 = vmax.f32 %v65, 0.0
  %v178 = vmax.f32 %v66, 0.0
  %v179 = vmax.f32 %v67, 0.0
  %v180 = vmax.f32 %v68, 0.0
  %v181 = vmax.f32 %v69, 0.0
  %v182 = vmax.f32 %v70, 0.0
  %v183 = vmax.f32 %v71, 0.0
  %v184 = vmax.f32 %v72, 0.0
  %v185 = vmax.f32 %v73, 0.0
  %v186 = vmax.f32 %v74, 0.0
  %v187 = vmax.f32 %v75, 0.0
  %v188 = vmax.f32 %v76, 0.0
  %v189 = vmax.f32 %v77, 0.0
  %v190 = vmax.f32 %v78, 0.0
  %v191 = vmax.f32 %v79, 0.0
  %v192 = vmax.f32 %v80, 0.0
  %v193 = vmax.f32 %v81, 0.0
  %v194 = vmax.f32 %v82, 0.0
  %v195 = vmax.f32 %v83, 0.0
  %v196 = vmax.f32 %v84, 0.0
  %v197 = vmax.f32 %v85, 0.0
  %v198 = vmax.f32 %v86, 0.0
  %v199 = vmax.f32 %v87, 0.0
  %v200 = vmax.f32 %v88, 0.0
  %v201 = vmax.f32 %v89, 0.0
  %v202 = vmax.f32 %v90, 0.0
  %v203 = vmax.f32 %v91, 0.0
  %v204 = vmax.f32 %v92, 0.0
  %v205 = vmax.f32 %v93, 0.0
  %v206 = vmax.f32 %v94, 0.0
  %v207 = vmax.f32 %v95, 0.0
  %v208 = vmax.f32 %v96, 0.0
  %v209 = vmax.f32 %v97, 0.0
  %v210 = vmax.f32 %v98, 0.0
  %v211 = vmax.f32 %v99, 0.0
  %v212 = vmax.f32 %v100, 0.0
  %v213 = vmax.f32 %v101, 0.0
  %v214 = vmax.f32 %v102, 0.0
  %v215 = vmax.f32 %v103, 0.0
  %v216 = vmax.f32 %v104, 0.0
  %v217 = vmax.f32 %v105, 0.0
  %v218 = vmax.f32 %v106, 0.0
  %v219 = vmax.f32 %v107, 0.0
  %v220 = vmax.f32 %v108, 0.0
  %v221 = vmax.f32 %v109, 0.0
  %v222 = vmax.f32 %v110, 0.0
  %v223 = vmax.f32 %v111, 0.0
  %v224 = vmax.f32 %v112, 0.0
  %v225 = vmax.f32 %v113, 0.0
  %v226 = vmax.f32 %v114, 0.0
  %v227 = vmax.f32 %v115, 0.0
  %v228 = vmax.f32 %v116, 0.0
  %v229 = vmax.f32 %v117, 0.0
  %v230 = vmax.f32 %v118, 0.0
  %v231 = vmax.f32 %v119, 0.0
  %v232 = vmax.f32 %v120, 0.0
  %v233 = vmax.f32 %v121, 0.0
  %v234 = vmax.f32 %v122, 0.0
  %v235 = vmax.f32 %v123, 0.0
  %v236 = vmax.f32 %v124, 0.0
  %v237 = vand.u32 2147483647, %v13
  %v238 = vand.u32 2147483647, %v14
  %v239 = vand.u32 2147483647, %v15
  %v240 = vand.u32 2147483647, %v16
  %v241 = vand.u32 2147483647, %v17
  %v242 = vand.u32 2147483647, %v18
  %v243 = vand.u32 2147483647, %v19
  %v244 = vand.u32 2147483647, %v20
  %v245 = vand.u32 2147483647, %v21
  %v246 = vand.u32 2147483647, %v22
  %v247 = vand.u32 2147483647, %v23
  %v248 = vand.u32 2147483647, %v24
  %v249 = vand.u32 2147483647, %v25
  %v250 = vand.u32 2147483647, %v26
  %v251 = vand.u32 2147483647, %v27
  %v252 = vand.u32 2147483647, %v28
  %v253 = vand.u32 2147483647, %v29
  %v254 = vand.u32 2147483647, %v30
  %v255 = vand.u32 2147483647, %v31
  %v256 = vand.u32 2147483647, %v32
  %v257 = vand.u32 2147483647, %v33
  %v258 = vand.u32 2147483647, %v34
  %v259 = vand.u32 2147483647, %v35
  %v260 = vand.u32 2147483647, %v36
  %v261 = vand.u32 2147483647, %v37
  %v262 = vand.u32 2147483647, %v38
  %v263 = vand.u32 2147483647, %v39
  %v264 = vand.u32 2147483647, %v40
  %v265 = vand.u32 2147483647, %v41
  %v266 = vand.u32 2147483647, %v42
  %v267 = vand.u32 2147483647, %v43
  %v268 = vand.u32 2147483647, %v44
  %v269 = vand.u32 2147483647, %v45
  %v270 = vand.u32 2147483647, %v46
  %v271 = vand.u32 2147483647, %v47
  %v272 = vand.u32 2147483647, %v48
  %v273 = vand.u32 2147483647, %v49
  %v274 = vand.u32 2147483647, %v50
  %v275 = vand.u32 2147483647, %v51
  %v276 = vand.u32 2147483647, %v52
  %v277 = vand.u32 2147483647, %v53
  %v278 = vand.u32 2147483647, %v54
  %v279 = vand.u32 2147483647, %v55
  %v280 = vand.u32 2147483647, %v56
  %v281 = vand.u32 2147483647, %v57
  %v282 = vand.u32 2147483647, %v58
  %v283 = vand.u32 2147483647, %v59
  %v284 = vand.u32 2147483647, %v60
  %v285 = vand.u32 2147483647, %v61
  %v286 = vand.u32 2147483647, %v62
  %v287 = vand.u32 2147483647, %v63
  %v288 = vand.u32 2147483647, %v64
  %v289 = vand.u32 2147483647, %v65
  %v290 = vand.u32 2147483647, %v66
  %v291 = vand.u32 2147483647, %v67
  %v292 = vand.u32 2147483647, %v68
  %v293 = vand.u32 2147483647, %v69
  %v294 = vand.u32 2147483647, %v70
  %v295 = vand.u32 2147483647, %v71
  %v296 = vand.u32 2147483647, %v72
  %v297 = vand.u32 2147483647, %v73
  %v298 = vand.u32 2147483647, %v74
  %v299 = vand.u32 2147483647, %v75
  %v300 = vand.u32 2147483647, %v76
  %v301 = vand.u32 2147483647, %v77
  %v302 = vand.u32 2147483647, %v78
  %v303 = vand.u32 2147483647, %v79
  %v304 = vand.u32 2147483647, %v80
  %v305 = vand.u32 2147483647, %v81
  %v306 = vand.u32 2147483647, %v82
  %v307 = vand.u32 2147483647, %v83
  %v308 = vand.u32 2147483647, %v84
  %v309 = vand.u32 2147483647, %v85
  %v310 = vand.u32 2147483647, %v86
  %v311 = vand.u32 2147483647, %v87
  %v312 = vand.u32 2147483647, %v88
  %v313 = vand.u32 2147483647, %v89
  %v314 = vand.u32 2147483647, %v90
  %v315 = vand.u32 2147483647, %v91
  %v316 = vand.u32 2147483647, %v92
  %v317 = vand.u32 2147483647, %v93
  %v318 = vand.u32 2147483647, %v94
  %v319 = vand.u32 2147483647, %v95
  %v320 = vand.u32 2147483647, %v96
  %v321 = vand.u32 2147483647, %v97
  %v322 = vand.u32 2147483647, %v98
  %v323 = vand.u32 2147483647, %v99
  %v324 = vand.u32 2147483647, %v100
  %v325 = vand.u32 2147483647, %v101
  %v326 = vand.u32 2147483647, %v102
  %v327 = vand.u32 2147483647, %v103
  %v328 = vand.u32 2147483647, %v104
  %v329 = vand.u32 2147483647, %v105
  %v330 = vand.u32 2147483647, %v106
  %v331 = vand.u32 2147483647, %v107
  %v332 = vand.u32 2147483647, %v108
  %v333 = vand.u32 2147483647, %v109
  %v334 = vand.u32 2147483647, %v110
  %v335 = vand.u32 2147483647, %v111
  %v336 = vand.u32 2147483647, %v112
  %v337 = vand.u32 2147483647, %v113
  %v338 = vand.u32 2147483647, %v114
  %v339 = vand.u32 2147483647, %v115
  %v340 = vand.u32 2147483647, %v116
  %v341 = vand.u32 2147483647, %v117
  %v342 = vand.u32 2147483647, %v118
  %v343 = vand.u32 2147483647, %v119
  %v344 = vand.u32 2147483647, %v120
  %v345 = vand.u32 2147483647, %v121
  %v346 = vand.u32 2147483647, %v122
  %v347 = vand.u32 2147483647, %v123
  %v348 = vand.u32 2147483647, %v124
  %v349 = vsub.f32 0.0, %v237
  %v350 = vsub.f32 0.0, %v238
  %v351 = vsub.f32 0.0, %v239
  %v352 = vsub.f32 0.0, %v240
  %v353 = vsub.f32 0.0, %v241
  %v354 = vsub.f32 0.0, %v242
  %v355 = vsub.f32 0.0, %v243
  %v356 = vsub.f32 0.0, %v244
  %v357 = vsub.f32 0.0, %v245
  %v358 = vsub.f32 0.0, %v246
  %v359 = vsub.f32 0.0, %v247
  %v360 = vsub.f32 0.0, %v248
  %v361 = vsub.f32 0.0, %v249
  %v362 = vsub.f32 0.0, %v250
  %v363 = vsub.f32 0.0, %v251
  %v364 = vsub.f32 0.0, %v252
  %v365 = vsub.f32 0.0, %v253
  %v366 = vsub.f32 0.0, %v254
  %v367 = vsub.f32 0.0, %v255
  %v368 = vsub.f32 0.0, %v256
  %v369 = vsub.f32 0.0, %v257
  %v370 = vsub.f32 0.0, %v258
  %v371 = vsub.f32 0.0, %v259
  %v372 = vsub.f32 0.0, %v260
  %v373 = vsub.f32 0.0, %v261
  %v374 = vsub.f32 0.0, %v262
  %v375 = vsub.f32 0.0, %v263
  %v376 = vsub.f32 0.0, %v264
  %v377 = vsub.f32 0.0, %v265
  %v378 = vsub.f32 0.0, %v266
  %v379 = vsub.f32 0.0, %v267
  %v380 = vsub.f32 0.0, %v268
  %v381 = vsub.f32 0.0, %v269
  %v382 = vsub.f32 0.0, %v270
  %v383 = vsub.f32 0.0, %v271
  %v384 = vsub.f32 0.0, %v272
  %v385 = vsub.f32 0.0, %v273
  %v386 = vsub.f32 0.0, %v274
  %v387 = vsub.f32 0.0, %v275
  %v388 = vsub.f32 0.0, %v276
  %v389 = vsub.f32 0.0, %v277
  %v390 = vsub.f32 0.0, %v278
  %v391 = vsub.f32 0.0, %v279
  %v392 = vsub.f32 0.0, %v280
  %v393 = vsub.f32 0.0, %v281
  %v394 = vsub.f32 0.0, %v282
  %v395 = vsub.f32 0.0, %v283
  %v396 = vsub.f32 0.0, %v284
  %v397 = vsub.f32 0.0, %v285
  %v398 = vsub.f32 0.0, %v286
  %v399 = vsub.f32 0.0, %v287
  %v400 = vsub.f32 0.0, %v288
  %v401 = vsub.f32 0.0, %v289
  %v402 = vsub.f32 0.0, %v290
  %v403 = vsub.f32 0.0, %v291
  %v404 = vsub.f32 0.0, %v292
  %v405 = vsub.f32 0.0, %v293
  %v406 = vsub.f32 0.0, %v294
  %v407 = vsub.f32 0.0, %v295
  %v408 = vsub.f32 0.0, %v296
  %v409 = vsub.f32 0.0, %v297
  %v410 = vsub.f32 0.0, %v298
  %v411 = vsub.f32 0.0, %v299
  %v412 = vsub.f32 0.0, %v300
  %v413 = vsub.f32 0.0, %v301
  %v414 = vsub.f32 0.0, %v302
  %v415 = vsub.f32 0.0, %v303
  %v416 = vsub.f32 0.0, %v304
  %v417 = vsub.f32 0.0, %v305
  %v418 = vsub.f32 0.0, %v306
  %v419 = vsub.f32 0.0, %v307
  %v420 = vsub.f32 0.0, %v308
  %v421 = vsub.f32 0.0, %v309
  %v422 = vsub.f32 0.0, %v310
  %v423 = vsub.f32 0.0, %v311
  %v424 = vsub.f32 0.0, %v312
  %v425 = vsub.f32 0.0, %v313
  %v426 = vsub.f32 0.0, %v314
  %v427 = vsub.f32 0.0, %v315
  %v428 = vsub.f32 0.0, %v316
  %v429 = vsub.f32 0.0, %v317
  %v430 = vsub.f32 0.0, %v318
  %v431 = vsub.f32 0.0, %v319
  %v432 = vsub.f32 0.0, %v320
  %v433 = vsub.f32 0.0, %v321
  %v434 = vsub.f32 0.0, %v322
  %v435 = vsub.f32 0.0, %v323
  %v436 = vsub.f32 0.0, %v324
  %v437 = vsub.f32 0.0, %v325
  %v438 = vsub.f32 0.0, %v326
  %v439 = vsub.f32 0.0, %v327
  %v440 = vsub.f32 0.0, %v328
  %v441 = vsub.f32 0.0, %v329
  %v442 = vsub.f32 0.0, %v330
  %v443 = vsub.f32 0.0, %v331
  %v444 = vsub.f32 0.0, %v332
  %v445 = vsub.f32 0.0, %v333
  %v446 = vsub.f32 0.0, %v334
  %v447 = vsub.f32 0.0, %v335
  %v448 = vsub.f32 0.0, %v336
  %v449 = vsub.f32 0.0, %v337
  %v450 = vsub.f32 0.0, %v338
  %v451 = vsub.f32 0.0, %v339
  %v452 = vsub.f32 0.0, %v340
  %v453 = vsub.f32 0.0, %v341
  %v454 = vsub.f32 0.0, %v342
  %v455 = vsub.f32 0.0, %v343
  %v456 = vsub.f32 0.0, %v344
  %v457 = vsub.f32 0.0, %v345
  %v458 = vsub.f32 0.0, %v346
  %v459 = vsub.f32 0.0, %v347
  %v460 = vsub.f32 0.0, %v348
  %v461 = vmul.f32 %v349, 1.442695
  %v462 = vpow.pop %v461
  %v463 = vmul.f32 %v350, 1.442695
  %v464 = vpow.pop %v463
  %v465 = vmul.f32 %v351, 1.442695
  %v466 = vpow.pop %v465
  %v467 = vmul.f32 %v352, 1.442695
  %v468 = vpow.pop %v467
  %v469 = vmul.f32 %v353, 1.442695
  %v470 = vpow.pop %v469
  %v471 = vmul.f32 %v354, 1.442695
  %v472 = vpow.pop %v471
  %v473 = vmul.f32 %v355, 1.442695
  %v474 = vpow.pop %v473
  %v475 = vmul.f32 %v356, 1.442695
  %v476 = vpow.pop %v475
  %v477 = vmul.f32 %v357, 1.442695
  %v478 = vpow.pop %v477
  %v479 = vmul.f32 %v358, 1.442695
  %v480 = vpow.pop %v479
  %v481 = vmul.f32 %v359, 1.442695
  %v482 = vpow.pop %v481
  %v483 = vmul.f32 %v360, 1.442695
  %v484 = vpow.pop %v483
  %v485 = vmul.f32 %v361, 1.442695
  %v486 = vpow.pop %v485
  %v487 = vmul.f32 %v362, 1.442695
  %v488 = vpow.pop %v487
  %v489 = vmul.f32 %v363, 1.442695
  %v490 = vpow.pop %v489
  %v491 = vmul.f32 %v364, 1.442695
  %v492 = vpow.pop %v491
  %v493 = vmul.f32 %v365, 1.442695
  %v494 = vpow.pop %v493
  %v495 = vmul.f32 %v366, 1.442695
  %v496 = vpow.pop %v495
  %v497 = vmul.f32 %v367, 1.442695
  %v498 = vpow.pop %v497
  %v499 = vmul.f32 %v368, 1.442695
  %v500 = vpow.pop %v499
  %v501 = vmul.f32 %v369, 1.442695
  %v502 = vpow.pop %v501
  %v503 = vmul.f32 %v370, 1.442695
  %v504 = vpow.pop %v503
  %v505 = vmul.f32 %v371, 1.442695
  %v506 = vpow.pop %v505
  %v507 = vmul.f32 %v372, 1.442695
  %v508 = vpow.pop %v507
  %v509 = vmul.f32 %v373, 1.442695
  %v510 = vpow.pop %v509
  %v511 = vmul.f32 %v374, 1.442695
  %v512 = vpow.pop %v511
  %v513 = vmul.f32 %v375, 1.442695
  %v514 = vpow.pop %v513
  %v515 = vmul.f32 %v376, 1.442695
  %v516 = vpow.pop %v515
  %v517 = vmul.f32 %v377, 1.442695
  %v518 = vpow.pop %v517
  %v519 = vmul.f32 %v378, 1.442695
  %v520 = vpow.pop %v519
  %v521 = vmul.f32 %v379, 1.442695
  %v522 = vpow.pop %v521
  %v523 = vmul.f32 %v380, 1.442695
  %v524 = vpow.pop %v523
  %v525 = vmul.f32 %v381, 1.442695
  %v526 = vpow.pop %v525
  %v527 = vmul.f32 %v382, 1.442695
  %v528 = vpow.pop %v527
  %v529 = vmul.f32 %v383, 1.442695
  %v530 = vpow.pop %v529
  %v531 = vmul.f32 %v384, 1.442695
  %v532 = vpow.pop %v531
  %v533 = vmul.f32 %v385, 1.442695
  %v534 = vpow.pop %v533
  %v535 = vmul.f32 %v386, 1.442695
  %v536 = vpow.pop %v535
  %v537 = vmul.f32 %v387, 1.442695
  %v538 = vpow.pop %v537
  %v539 = vmul.f32 %v388, 1.442695
  %v540 = vpow.pop %v539
  %v541 = vmul.f32 %v389, 1.442695
  %v542 = vpow.pop %v541
  %v543 = vmul.f32 %v390, 1.442695
  %v544 = vpow.pop %v543
  %v545 = vmul.f32 %v391, 1.442695
  %v546 = vpow.pop %v545
  %v547 = vmul.f32 %v392, 1.442695
  %v548 = vpow.pop %v547
  %v549 = vmul.f32 %v393, 1.442695
  %v550 = vpow.pop %v549
  %v551 = vmul.f32 %v394, 1.442695
  %v552 = vpow.pop %v551
  %v553 = vmul.f32 %v395, 1.442695
  %v554 = vpow.pop %v553
  %v555 = vmul.f32 %v396, 1.442695
  %v556 = vpow.pop %v555
  %v557 = vmul.f32 %v397, 1.442695
  %v558 = vpow.pop %v557
  %v559 = vmul.f32 %v398, 1.442695
  %v560 = vpow.pop %v559
  %v561 = vmul.f32 %v399, 1.442695
  %v562 = vpow.pop %v561
  %v563 = vmul.f32 %v400, 1.442695
  %v564 = vpow.pop %v563
  %v565 = vmul.f32 %v401, 1.442695
  %v566 = vpow.pop %v565
  %v567 = vmul.f32 %v402, 1.442695
  %v568 = vpow.pop %v567
  %v569 = vmul.f32 %v403, 1.442695
  %v570 = vpow.pop %v569
  %v571 = vmul.f32 %v404, 1.442695
  %v572 = vpow.pop %v571
  %v573 = vmul.f32 %v405, 1.442695
  %v574 = vpow.pop %v573
  %v575 = vmul.f32 %v406, 1.442695
  %v576 = vpow.pop %v575
  %v577 = vmul.f32 %v407, 1.442695
  %v578 = vpow.pop %v577
  %v579 = vmul.f32 %v408, 1.442695
  %v580 = vpow.pop %v579
  %v581 = vmul.f32 %v409, 1.442695
  %v582 = vpow.pop %v581
  %v583 = vmul.f32 %v410, 1.442695
  %v584 = vpow.pop %v583
  %v585 = vmul.f32 %v411, 1.442695
  %v586 = vpow.pop %v585
  %v587 = vmul.f32 %v412, 1.442695
  %v588 = vpow.pop %v587
  %v589 = vmul.f32 %v413, 1.442695
  %v590 = vpow.pop %v589
  %v591 = vmul.f32 %v414, 1.442695
  %v592 = vpow.pop %v591
  %v593 = vmul.f32 %v415, 1.442695
  %v594 = vpow.pop %v593
  %v595 = vmul.f32 %v416, 1.442695
  %v596 = vpow.pop %v595
  %v597 = vmul.f32 %v417, 1.442695
  %v598 = vpow.pop %v597
  %v599 = vmul.f32 %v418, 1.442695
  %v600 = vpow.pop %v599
  %v601 = vmul.f32 %v419, 1.442695
  %v602 = vpow.pop %v601
  %v603 = vmul.f32 %v420, 1.442695
  %v604 = vpow.pop %v603
  %v605 = vmul.f32 %v421, 1.442695
  %v606 = vpow.pop %v605
  %v607 = vmul.f32 %v422, 1.442695
  %v608 = vpow.pop %v607
  %v609 = vmul.f32 %v423, 1.442695
  %v610 = vpow.pop %v609
  %v611 = vmul.f32 %v424, 1.442695
  %v612 = vpow.pop %v611
  %v613 = vmul.f32 %v425, 1.442695
  %v614 = vpow.pop %v613
  %v615 = vmul.f32 %v426, 1.442695
  %v616 = vpow.pop %v615
  %v617 = vmul.f32 %v427, 1.442695
  %v618 = vpow.pop %v617
  %v619 = vmul.f32 %v428, 1.442695
  %v620 = vpow.pop %v619
  %v621 = vmul.f32 %v429, 1.442695
  %v622 = vpow.pop %v621
  %v623 = vmul.f32 %v430, 1.442695
  %v624 = vpow.pop %v623
  %v625 = vmul.f32 %v431, 1.442695
  %v626 = vpow.pop %v625
  %v627 = vmul.f32 %v432, 1.442695
  %v628 = vpow.pop %v627
  %v629 = vmul.f32 %v433, 1.442695
  %v630 = vpow.pop %v629
  %v631 = vmul.f32 %v434, 1.442695
  %v632 = vpow.pop %v631
  %v633 = vmul.f32 %v435, 1.442695
  %v634 = vpow.pop %v633
  %v635 = vmul.f32 %v436, 1.442695
  %v636 = vpow.pop %v635
  %v637 = vmul.f32 %v437, 1.442695
  %v638 = vpow.pop %v637
  %v639 = vmul.f32 %v438, 1.442695
  %v640 = vpow.pop %v639
  %v641 = vmul.f32 %v439, 1.442695
  %v642 = vpow.pop %v641
  %v643 = vmul.f32 %v440, 1.442695
  %v644 = vpow.pop %v643
  %v645 = vmul.f32 %v441, 1.442695
  %v646 = vpow.pop %v645
  %v647 = vmul.f32 %v442, 1.442695
  %v648 = vpow.pop %v647
  %v649 = vmul.f32 %v443, 1.442695
  %v650 = vpow.pop %v649
  %v651 = vmul.f32 %v444, 1.442695
  %v652 = vpow.pop %v651
  %v653 = vmul.f32 %v445, 1.442695
  %v654 = vpow.pop %v653
  %v655 = vmul.f32 %v446, 1.442695
  %v656 = vpow.pop %v655
  %v657 = vmul.f32 %v447, 1.442695
  %v658 = vpow.pop %v657
  %v659 = vmul.f32 %v448, 1.442695
  %v660 = vpow.pop %v659
  %v661 = vmul.f32 %v449, 1.442695
  %v662 = vpow.pop %v661
  %v663 = vmul.f32 %v450, 1.442695
  %v664 = vpow.pop %v663
  %v665 = vmul.f32 %v451, 1.442695
  %v666 = vpow.pop %v665
  %v667 = vmul.f32 %v452, 1.442695
  %v668 = vpow.pop %v667
  %v669 = vmul.f32 %v453, 1.442695
  %v670 = vpow.pop %v669
  %v671 = vmul.f32 %v454, 1.442695
  %v672 = vpow.pop %v671
  %v673 = vmul.f32 %v455, 1.442695
  %v674 = vpow.pop %v673
  %v675 = vmul.f32 %v456, 1.442695
  %v676 = vpow.pop %v675
  %v677 = vmul.f32 %v457, 1.442695
  %v678 = vpow.pop %v677
  %v679 = vmul.f32 %v458, 1.442695
  %v680 = vpow.pop %v679
  %v681 = vmul.f32 %v459, 1.442695
  %v682 = vpow.pop %v681
  %v683 = vmul.f32 %v460, 1.442695
  %v684 = vpow.pop %v683
  %v685 = vadd.f32 %v462, 1.0
  %v686 = vlog2.pop %v685
  %v687 = vmul.f32 %v686, 0.6931472
  %v688 = vmul.f32 -0.5, %v462
  %v689 = vadd.f32 %v688, 1.0
  %v690 = vmul.f32 %v689, %v462
  %v691 = vand.u32 2147483647, %v462
  %vm692 = vcmp.lt.f32.partialorder %v691, 0.0004427343
  %v693 = vsel %vm692, %v690, %v687
  %v694 = vadd.f32 %v464, 1.0
  %v695 = vlog2.pop %v694
  %v696 = vmul.f32 %v695, 0.6931472
  %v697 = vmul.f32 -0.5, %v464
  %v698 = vadd.f32 %v697, 1.0
  %v699 = vmul.f32 %v698, %v464
  %v700 = vand.u32 2147483647, %v464
  %vm701 = vcmp.lt.f32.partialorder %v700, 0.0004427343
  %v702 = vsel %vm701, %v699, %v696
  %v703 = vadd.f32 %v466, 1.0
  %v704 = vlog2.pop %v703
  %v705 = vmul.f32 %v704, 0.6931472
  %v706 = vmul.f32 -0.5, %v466
  %v707 = vadd.f32 %v706, 1.0
  %v708 = vmul.f32 %v707, %v466
  %v709 = vand.u32 2147483647, %v466
  %vm710 = vcmp.lt.f32.partialorder %v709, 0.0004427343
  %v711 = vsel %vm710, %v708, %v705
  %v712 = vadd.f32 %v468, 1.0
  %v713 = vlog2.pop %v712
  %v714 = vmul.f32 %v713, 0.6931472
  %v715 = vmul.f32 -0.5, %v468
  %v716 = vadd.f32 %v715, 1.0
  %v717 = vmul.f32 %v716, %v468
  %v718 = vand.u32 2147483647, %v468
  %vm719 = vcmp.lt.f32.partialorder %v718, 0.0004427343
  %v720 = vsel %vm719, %v717, %v714
  %v721 = vadd.f32 %v470, 1.0
  %v722 = vlog2.pop %v721
  %v723 = vmul.f32 %v722, 0.6931472
  %v724 = vmul.f32 -0.5, %v470
  %v725 = vadd.f32 %v724, 1.0
  %v726 = vmul.f32 %v725, %v470
  %v727 = vand.u32 2147483647, %v470
  %vm728 = vcmp.lt.f32.partialorder %v727, 0.0004427343
  %v729 = vsel %vm728, %v726, %v723
  %v730 = vadd.f32 %v472, 1.0
  %v731 = vlog2.pop %v730
  %v732 = vmul.f32 %v731, 0.6931472
  %v733 = vmul.f32 -0.5, %v472
  %v734 = vadd.f32 %v733, 1.0
  %v735 = vmul.f32 %v734, %v472
  %v736 = vand.u32 2147483647, %v472
  %vm737 = vcmp.lt.f32.partialorder %v736, 0.0004427343
  %v738 = vsel %vm737, %v735, %v732
  %v739 = vadd.f32 %v474, 1.0
  %v740 = vlog2.pop %v739
  %v741 = vmul.f32 %v740, 0.6931472
  %v742 = vmul.f32 -0.5, %v474
  %v743 = vadd.f32 %v742, 1.0
  %v744 = vmul.f32 %v743, %v474
  %v745 = vand.u32 2147483647, %v474
  %vm746 = vcmp.lt.f32.partialorder %v745, 0.0004427343
  %v747 = vsel %vm746, %v744, %v741
  %v748 = vadd.f32 %v476, 1.0
  %v749 = vlog2.pop %v748
  %v750 = vmul.f32 %v749, 0.6931472
  %v751 = vmul.f32 -0.5, %v476
  %v752 = vadd.f32 %v751, 1.0
  %v753 = vmul.f32 %v752, %v476
  %v754 = vand.u32 2147483647, %v476
  %vm755 = vcmp.lt.f32.partialorder %v754, 0.0004427343
  %v756 = vsel %vm755, %v753, %v750
  %v757 = vadd.f32 %v478, 1.0
  %v758 = vlog2.pop %v757
  %v759 = vmul.f32 %v758, 0.6931472
  %v760 = vmul.f32 -0.5, %v478
  %v761 = vadd.f32 %v760, 1.0
  %v762 = vmul.f32 %v761, %v478
  %v763 = vand.u32 2147483647, %v478
  %vm764 = vcmp.lt.f32.partialorder %v763, 0.0004427343
  %v765 = vsel %vm764, %v762, %v759
  %v766 = vadd.f32 %v480, 1.0
  %v767 = vlog2.pop %v766
  %v768 = vmul.f32 %v767, 0.6931472
  %v769 = vmul.f32 -0.5, %v480
  %v770 = vadd.f32 %v769, 1.0
  %v771 = vmul.f32 %v770, %v480
  %v772 = vand.u32 2147483647, %v480
  %vm773 = vcmp.lt.f32.partialorder %v772, 0.0004427343
  %v774 = vsel %vm773, %v771, %v768
  %v775 = vadd.f32 %v482, 1.0
  %v776 = vlog2.pop %v775
  %v777 = vmul.f32 %v776, 0.6931472
  %v778 = vmul.f32 -0.5, %v482
  %v779 = vadd.f32 %v778, 1.0
  %v780 = vmul.f32 %v779, %v482
  %v781 = vand.u32 2147483647, %v482
  %vm782 = vcmp.lt.f32.partialorder %v781, 0.0004427343
  %v783 = vsel %vm782, %v780, %v777
  %v784 = vadd.f32 %v484, 1.0
  %v785 = vlog2.pop %v784
  %v786 = vmul.f32 %v785, 0.6931472
  %v787 = vmul.f32 -0.5, %v484
  %v788 = vadd.f32 %v787, 1.0
  %v789 = vmul.f32 %v788, %v484
  %v790 = vand.u32 2147483647, %v484
  %vm791 = vcmp.lt.f32.partialorder %v790, 0.0004427343
  %v792 = vsel %vm791, %v789, %v786
  %v793 = vadd.f32 %v486, 1.0
  %v794 = vlog2.pop %v793
  %v795 = vmul.f32 %v794, 0.6931472
  %v796 = vmul.f32 -0.5, %v486
  %v797 = vadd.f32 %v796, 1.0
  %v798 = vmul.f32 %v797, %v486
  %v799 = vand.u32 2147483647, %v486
  %vm800 = vcmp.lt.f32.partialorder %v799, 0.0004427343
  %v801 = vsel %vm800, %v798, %v795
  %v802 = vadd.f32 %v488, 1.0
  %v803 = vlog2.pop %v802
  %v804 = vmul.f32 %v803, 0.6931472
  %v805 = vmul.f32 -0.5, %v488
  %v806 = vadd.f32 %v805, 1.0
  %v807 = vmul.f32 %v806, %v488
  %v808 = vand.u32 2147483647, %v488
  %vm809 = vcmp.lt.f32.partialorder %v808, 0.0004427343
  %v810 = vsel %vm809, %v807, %v804
  %v811 = vadd.f32 %v490, 1.0
  %v812 = vlog2.pop %v811
  %v813 = vmul.f32 %v812, 0.6931472
  %v814 = vmul.f32 -0.5, %v490
  %v815 = vadd.f32 %v814, 1.0
  %v816 = vmul.f32 %v815, %v490
  %v817 = vand.u32 2147483647, %v490
  %vm818 = vcmp.lt.f32.partialorder %v817, 0.0004427343
  %v819 = vsel %vm818, %v816, %v813
  %v820 = vadd.f32 %v492, 1.0
  %v821 = vlog2.pop %v820
  %v822 = vmul.f32 %v821, 0.6931472
  %v823 = vmul.f32 -0.5, %v492
  %v824 = vadd.f32 %v823, 1.0
  %v825 = vmul.f32 %v824, %v492
  %v826 = vand.u32 2147483647, %v492
  %vm827 = vcmp.lt.f32.partialorder %v826, 0.0004427343
  %v828 = vsel %vm827, %v825, %v822
  %v829 = vadd.f32 %v494, 1.0
  %v830 = vlog2.pop %v829
  %v831 = vmul.f32 %v830, 0.6931472
  %v832 = vmul.f32 -0.5, %v494
  %v833 = vadd.f32 %v832, 1.0
  %v834 = vmul.f32 %v833, %v494
  %v835 = vand.u32 2147483647, %v494
  %vm836 = vcmp.lt.f32.partialorder %v835, 0.0004427343
  %v837 = vsel %vm836, %v834, %v831
  %v838 = vadd.f32 %v496, 1.0
  %v839 = vlog2.pop %v838
  %v840 = vmul.f32 %v839, 0.6931472
  %v841 = vmul.f32 -0.5, %v496
  %v842 = vadd.f32 %v841, 1.0
  %v843 = vmul.f32 %v842, %v496
  %v844 = vand.u32 2147483647, %v496
  %vm845 = vcmp.lt.f32.partialorder %v844, 0.0004427343
  %v846 = vsel %vm845, %v843, %v840
  %v847 = vadd.f32 %v498, 1.0
  %v848 = vlog2.pop %v847
  %v849 = vmul.f32 %v848, 0.6931472
  %v850 = vmul.f32 -0.5, %v498
  %v851 = vadd.f32 %v850, 1.0
  %v852 = vmul.f32 %v851, %v498
  %v853 = vand.u32 2147483647, %v498
  %vm854 = vcmp.lt.f32.partialorder %v853, 0.0004427343
  %v855 = vsel %vm854, %v852, %v849
  %v856 = vadd.f32 %v500, 1.0
  %v857 = vlog2.pop %v856
  %v858 = vmul.f32 %v857, 0.6931472
  %v859 = vmul.f32 -0.5, %v500
  %v860 = vadd.f32 %v859, 1.0
  %v861 = vmul.f32 %v860, %v500
  %v862 = vand.u32 2147483647, %v500
  %vm863 = vcmp.lt.f32.partialorder %v862, 0.0004427343
  %v864 = vsel %vm863, %v861, %v858
  %v865 = vadd.f32 %v502, 1.0
  %v866 = vlog2.pop %v865
  %v867 = vmul.f32 %v866, 0.6931472
  %v868 = vmul.f32 -0.5, %v502
  %v869 = vadd.f32 %v868, 1.0
  %v870 = vmul.f32 %v869, %v502
  %v871 = vand.u32 2147483647, %v502
  %vm872 = vcmp.lt.f32.partialorder %v871, 0.0004427343
  %v873 = vsel %vm872, %v870, %v867
  %v874 = vadd.f32 %v504, 1.0
  %v875 = vlog2.pop %v874
  %v876 = vmul.f32 %v875, 0.6931472
  %v877 = vmul.f32 -0.5, %v504
  %v878 = vadd.f32 %v877, 1.0
  %v879 = vmul.f32 %v878, %v504
  %v880 = vand.u32 2147483647, %v504
  %vm881 = vcmp.lt.f32.partialorder %v880, 0.0004427343
  %v882 = vsel %vm881, %v879, %v876
  %v883 = vadd.f32 %v506, 1.0
  %v884 = vlog2.pop %v883
  %v885 = vmul.f32 %v884, 0.6931472
  %v886 = vmul.f32 -0.5, %v506
  %v887 = vadd.f32 %v886, 1.0
  %v888 = vmul.f32 %v887, %v506
  %v889 = vand.u32 2147483647, %v506
  %vm890 = vcmp.lt.f32.partialorder %v889, 0.0004427343
  %v891 = vsel %vm890, %v888, %v885
  %v892 = vadd.f32 %v508, 1.0
  %v893 = vlog2.pop %v892
  %v894 = vmul.f32 %v893, 0.6931472
  %v895 = vmul.f32 -0.5, %v508
  %v896 = vadd.f32 %v895, 1.0
  %v897 = vmul.f32 %v896, %v508
  %v898 = vand.u32 2147483647, %v508
  %vm899 = vcmp.lt.f32.partialorder %v898, 0.0004427343
  %v900 = vsel %vm899, %v897, %v894
  %v901 = vadd.f32 %v510, 1.0
  %v902 = vlog2.pop %v901
  %v903 = vmul.f32 %v902, 0.6931472
  %v904 = vmul.f32 -0.5, %v510
  %v905 = vadd.f32 %v904, 1.0
  %v906 = vmul.f32 %v905, %v510
  %v907 = vand.u32 2147483647, %v510
  %vm908 = vcmp.lt.f32.partialorder %v907, 0.0004427343
  %v909 = vsel %vm908, %v906, %v903
  %v910 = vadd.f32 %v512, 1.0
  %v911 = vlog2.pop %v910
  %v912 = vmul.f32 %v911, 0.6931472
  %v913 = vmul.f32 -0.5, %v512
  %v914 = vadd.f32 %v913, 1.0
  %v915 = vmul.f32 %v914, %v512
  %v916 = vand.u32 2147483647, %v512
  %vm917 = vcmp.lt.f32.partialorder %v916, 0.0004427343
  %v918 = vsel %vm917, %v915, %v912
  %v919 = vadd.f32 %v514, 1.0
  %v920 = vlog2.pop %v919
  %v921 = vmul.f32 %v920, 0.6931472
  %v922 = vmul.f32 -0.5, %v514
  %v923 = vadd.f32 %v922, 1.0
  %v924 = vmul.f32 %v923, %v514
  %v925 = vand.u32 2147483647, %v514
  %vm926 = vcmp.lt.f32.partialorder %v925, 0.0004427343
  %v927 = vsel %vm926, %v924, %v921
  %v928 = vadd.f32 %v516, 1.0
  %v929 = vlog2.pop %v928
  %v930 = vmul.f32 %v929, 0.6931472
  %v931 = vmul.f32 -0.5, %v516
  %v932 = vadd.f32 %v931, 1.0
  %v933 = vmul.f32 %v932, %v516
  %v934 = vand.u32 2147483647, %v516
  %vm935 = vcmp.lt.f32.partialorder %v934, 0.0004427343
  %v936 = vsel %vm935, %v933, %v930
  %v937 = vadd.f32 %v518, 1.0
  %v938 = vlog2.pop %v937
  %v939 = vmul.f32 %v938, 0.6931472
  %v940 = vmul.f32 -0.5, %v518
  %v941 = vadd.f32 %v940, 1.0
  %v942 = vmul.f32 %v941, %v518
  %v943 = vand.u32 2147483647, %v518
  %vm944 = vcmp.lt.f32.partialorder %v943, 0.0004427343
  %v945 = vsel %vm944, %v942, %v939
  %v946 = vadd.f32 %v520, 1.0
  %v947 = vlog2.pop %v946
  %v948 = vmul.f32 %v947, 0.6931472
  %v949 = vmul.f32 -0.5, %v520
  %v950 = vadd.f32 %v949, 1.0
  %v951 = vmul.f32 %v950, %v520
  %v952 = vand.u32 2147483647, %v520
  %vm953 = vcmp.lt.f32.partialorder %v952, 0.0004427343
  %v954 = vsel %vm953, %v951, %v948
  %v955 = vadd.f32 %v522, 1.0
  %v956 = vlog2.pop %v955
  %v957 = vmul.f32 %v956, 0.6931472
  %v958 = vmul.f32 -0.5, %v522
  %v959 = vadd.f32 %v958, 1.0
  %v960 = vmul.f32 %v959, %v522
  %v961 = vand.u32 2147483647, %v522
  %vm962 = vcmp.lt.f32.partialorder %v961, 0.0004427343
  %v963 = vsel %vm962, %v960, %v957
  %v964 = vadd.f32 %v524, 1.0
  %v965 = vlog2.pop %v964
  %v966 = vmul.f32 %v965, 0.6931472
  %v967 = vmul.f32 -0.5, %v524
  %v968 = vadd.f32 %v967, 1.0
  %v969 = vmul.f32 %v968, %v524
  %v970 = vand.u32 2147483647, %v524
  %vm971 = vcmp.lt.f32.partialorder %v970, 0.0004427343
  %v972 = vsel %vm971, %v969, %v966
  %v973 = vadd.f32 %v526, 1.0
  %v974 = vlog2.pop %v973
  %v975 = vmul.f32 %v974, 0.6931472
  %v976 = vmul.f32 -0.5, %v526
  %v977 = vadd.f32 %v976, 1.0
  %v978 = vmul.f32 %v977, %v526
  %v979 = vand.u32 2147483647, %v526
  %vm980 = vcmp.lt.f32.partialorder %v979, 0.0004427343
  %v981 = vsel %vm980, %v978, %v975
  %v982 = vadd.f32 %v528, 1.0
  %v983 = vlog2.pop %v982
  %v984 = vmul.f32 %v983, 0.6931472
  %v985 = vmul.f32 -0.5, %v528
  %v986 = vadd.f32 %v985, 1.0
  %v987 = vmul.f32 %v986, %v528
  %v988 = vand.u32 2147483647, %v528
  %vm989 = vcmp.lt.f32.partialorder %v988, 0.0004427343
  %v990 = vsel %vm989, %v987, %v984
  %v991 = vadd.f32 %v530, 1.0
  %v992 = vlog2.pop %v991
  %v993 = vmul.f32 %v992, 0.6931472
  %v994 = vmul.f32 -0.5, %v530
  %v995 = vadd.f32 %v994, 1.0
  %v996 = vmul.f32 %v995, %v530
  %v997 = vand.u32 2147483647, %v530
  %vm998 = vcmp.lt.f32.partialorder %v997, 0.0004427343
  %v999 = vsel %vm998, %v996, %v993
  %v1000 = vadd.f32 %v532, 1.0
  %v1001 = vlog2.pop %v1000
  %v1002 = vmul.f32 %v1001, 0.6931472
  %v1003 = vmul.f32 -0.5, %v532
  %v1004 = vadd.f32 %v1003, 1.0
  %v1005 = vmul.f32 %v1004, %v532
  %v1006 = vand.u32 2147483647, %v532
  %vm1007 = vcmp.lt.f32.partialorder %v1006, 0.0004427343
  %v1008 = vsel %vm1007, %v1005, %v1002
  %v1009 = vadd.f32 %v534, 1.0
  %v1010 = vlog2.pop %v1009
  %v1011 = vmul.f32 %v1010, 0.6931472
  %v1012 = vmul.f32 -0.5, %v534
  %v1013 = vadd.f32 %v1012, 1.0
  %v1014 = vmul.f32 %v1013, %v534
  %v1015 = vand.u32 2147483647, %v534
  %vm1016 = vcmp.lt.f32.partialorder %v1015, 0.0004427343
  %v1017 = vsel %vm1016, %v1014, %v1011
  %v1018 = vadd.f32 %v536, 1.0
  %v1019 = vlog2.pop %v1018
  %v1020 = vmul.f32 %v1019, 0.6931472
  %v1021 = vmul.f32 -0.5, %v536
  %v1022 = vadd.f32 %v1021, 1.0
  %v1023 = vmul.f32 %v1022, %v536
  %v1024 = vand.u32 2147483647, %v536
  %vm1025 = vcmp.lt.f32.partialorder %v1024, 0.0004427343
  %v1026 = vsel %vm1025, %v1023, %v1020
  %v1027 = vadd.f32 %v538, 1.0
  %v1028 = vlog2.pop %v1027
  %v1029 = vmul.f32 %v1028, 0.6931472
  %v1030 = vmul.f32 -0.5, %v538
  %v1031 = vadd.f32 %v1030, 1.0
  %v1032 = vmul.f32 %v1031, %v538
  %v1033 = vand.u32 2147483647, %v538
  %vm1034 = vcmp.lt.f32.partialorder %v1033, 0.0004427343
  %v1035 = vsel %vm1034, %v1032, %v1029
  %v1036 = vadd.f32 %v540, 1.0
  %v1037 = vlog2.pop %v1036
  %v1038 = vmul.f32 %v1037, 0.6931472
  %v1039 = vmul.f32 -0.5, %v540
  %v1040 = vadd.f32 %v1039, 1.0
  %v1041 = vmul.f32 %v1040, %v540
  %v1042 = vand.u32 2147483647, %v540
  %vm1043 = vcmp.lt.f32.partialorder %v1042, 0.0004427343
  %v1044 = vsel %vm1043, %v1041, %v1038
  %v1045 = vadd.f32 %v542, 1.0
  %v1046 = vlog2.pop %v1045
  %v1047 = vmul.f32 %v1046, 0.6931472
  %v1048 = vmul.f32 -0.5, %v542
  %v1049 = vadd.f32 %v1048, 1.0
  %v1050 = vmul.f32 %v1049, %v542
  %v1051 = vand.u32 2147483647, %v542
  %vm1052 = vcmp.lt.f32.partialorder %v1051, 0.0004427343
  %v1053 = vsel %vm1052, %v1050, %v1047
  %v1054 = vadd.f32 %v544, 1.0
  %v1055 = vlog2.pop %v1054
  %v1056 = vmul.f32 %v1055, 0.6931472
  %v1057 = vmul.f32 -0.5, %v544
  %v1058 = vadd.f32 %v1057, 1.0
  %v1059 = vmul.f32 %v1058, %v544
  %v1060 = vand.u32 2147483647, %v544
  %vm1061 = vcmp.lt.f32.partialorder %v1060, 0.0004427343
  %v1062 = vsel %vm1061, %v1059, %v1056
  %v1063 = vadd.f32 %v546, 1.0
  %v1064 = vlog2.pop %v1063
  %v1065 = vmul.f32 %v1064, 0.6931472
  %v1066 = vmul.f32 -0.5, %v546
  %v1067 = vadd.f32 %v1066, 1.0
  %v1068 = vmul.f32 %v1067, %v546
  %v1069 = vand.u32 2147483647, %v546
  %vm1070 = vcmp.lt.f32.partialorder %v1069, 0.0004427343
  %v1071 = vsel %vm1070, %v1068, %v1065
  %v1072 = vadd.f32 %v548, 1.0
  %v1073 = vlog2.pop %v1072
  %v1074 = vmul.f32 %v1073, 0.6931472
  %v1075 = vmul.f32 -0.5, %v548
  %v1076 = vadd.f32 %v1075, 1.0
  %v1077 = vmul.f32 %v1076, %v548
  %v1078 = vand.u32 2147483647, %v548
  %vm1079 = vcmp.lt.f32.partialorder %v1078, 0.0004427343
  %v1080 = vsel %vm1079, %v1077, %v1074
  %v1081 = vadd.f32 %v550, 1.0
  %v1082 = vlog2.pop %v1081
  %v1083 = vmul.f32 %v1082, 0.6931472
  %v1084 = vmul.f32 -0.5, %v550
  %v1085 = vadd.f32 %v1084, 1.0
  %v1086 = vmul.f32 %v1085, %v550
  %v1087 = vand.u32 2147483647, %v550
  %vm1088 = vcmp.lt.f32.partialorder %v1087, 0.0004427343
  %v1089 = vsel %vm1088, %v1086, %v1083
  %v1090 = vadd.f32 %v552, 1.0
  %v1091 = vlog2.pop %v1090
  %v1092 = vmul.f32 %v1091, 0.6931472
  %v1093 = vmul.f32 -0.5, %v552
  %v1094 = vadd.f32 %v1093, 1.0
  %v1095 = vmul.f32 %v1094, %v552
  %v1096 = vand.u32 2147483647, %v552
  %vm1097 = vcmp.lt.f32.partialorder %v1096, 0.0004427343
  %v1098 = vsel %vm1097, %v1095, %v1092
  %v1099 = vadd.f32 %v554, 1.0
  %v1100 = vlog2.pop %v1099
  %v1101 = vmul.f32 %v1100, 0.6931472
  %v1102 = vmul.f32 -0.5, %v554
  %v1103 = vadd.f32 %v1102, 1.0
  %v1104 = vmul.f32 %v1103, %v554
  %v1105 = vand.u32 2147483647, %v554
  %vm1106 = vcmp.lt.f32.partialorder %v1105, 0.0004427343
  %v1107 = vsel %vm1106, %v1104, %v1101
  %v1108 = vadd.f32 %v556, 1.0
  %v1109 = vlog2.pop %v1108
  %v1110 = vmul.f32 %v1109, 0.6931472
  %v1111 = vmul.f32 -0.5, %v556
  %v1112 = vadd.f32 %v1111, 1.0
  %v1113 = vmul.f32 %v1112, %v556
  %v1114 = vand.u32 2147483647, %v556
  %vm1115 = vcmp.lt.f32.partialorder %v1114, 0.0004427343
  %v1116 = vsel %vm1115, %v1113, %v1110
  %v1117 = vadd.f32 %v558, 1.0
  %v1118 = vlog2.pop %v1117
  %v1119 = vmul.f32 %v1118, 0.6931472
  %v1120 = vmul.f32 -0.5, %v558
  %v1121 = vadd.f32 %v1120, 1.0
  %v1122 = vmul.f32 %v1121, %v558
  %v1123 = vand.u32 2147483647, %v558
  %vm1124 = vcmp.lt.f32.partialorder %v1123, 0.0004427343
  %v1125 = vsel %vm1124, %v1122, %v1119
  %v1126 = vadd.f32 %v560, 1.0
  %v1127 = vlog2.pop %v1126
  %v1128 = vmul.f32 %v1127, 0.6931472
  %v1129 = vmul.f32 -0.5, %v560
  %v1130 = vadd.f32 %v1129, 1.0
  %v1131 = vmul.f32 %v1130, %v560
  %v1132 = vand.u32 2147483647, %v560
  %vm1133 = vcmp.lt.f32.partialorder %v1132, 0.0004427343
  %v1134 = vsel %vm1133, %v1131, %v1128
  %v1135 = vadd.f32 %v562, 1.0
  %v1136 = vlog2.pop %v1135
  %v1137 = vmul.f32 %v1136, 0.6931472
  %v1138 = vmul.f32 -0.5, %v562
  %v1139 = vadd.f32 %v1138, 1.0
  %v1140 = vmul.f32 %v1139, %v562
  %v1141 = vand.u32 2147483647, %v562
  %vm1142 = vcmp.lt.f32.partialorder %v1141, 0.0004427343
  %v1143 = vsel %vm1142, %v1140, %v1137
  %v1144 = vadd.f32 %v564, 1.0
  %v1145 = vlog2.pop %v1144
  %v1146 = vmul.f32 %v1145, 0.6931472
  %v1147 = vmul.f32 -0.5, %v564
  %v1148 = vadd.f32 %v1147, 1.0
  %v1149 = vmul.f32 %v1148, %v564
  %v1150 = vand.u32 2147483647, %v564
  %vm1151 = vcmp.lt.f32.partialorder %v1150, 0.0004427343
  %v1152 = vsel %vm1151, %v1149, %v1146
  %v1153 = vadd.f32 %v566, 1.0
  %v1154 = vlog2.pop %v1153
  %v1155 = vmul.f32 %v1154, 0.6931472
  %v1156 = vmul.f32 -0.5, %v566
  %v1157 = vadd.f32 %v1156, 1.0
  %v1158 = vmul.f32 %v1157, %v566
  %v1159 = vand.u32 2147483647, %v566
  %vm1160 = vcmp.lt.f32.partialorder %v1159, 0.0004427343
  %v1161 = vsel %vm1160, %v1158, %v1155
  %v1162 = vadd.f32 %v568, 1.0
  %v1163 = vlog2.pop %v1162
  %v1164 = vmul.f32 %v1163, 0.6931472
  %v1165 = vmul.f32 -0.5, %v568
  %v1166 = vadd.f32 %v1165, 1.0
  %v1167 = vmul.f32 %v1166, %v568
  %v1168 = vand.u32 2147483647, %v568
  %vm1169 = vcmp.lt.f32.partialorder %v1168, 0.0004427343
  %v1170 = vsel %vm1169, %v1167, %v1164
  %v1171 = vadd.f32 %v570, 1.0
  %v1172 = vlog2.pop %v1171
  %v1173 = vmul.f32 %v1172, 0.6931472
  %v1174 = vmul.f32 -0.5, %v570
  %v1175 = vadd.f32 %v1174, 1.0
  %v1176 = vmul.f32 %v1175, %v570
  %v1177 = vand.u32 2147483647, %v570
  %vm1178 = vcmp.lt.f32.partialorder %v1177, 0.0004427343
  %v1179 = vsel %vm1178, %v1176, %v1173
  %v1180 = vadd.f32 %v572, 1.0
  %v1181 = vlog2.pop %v1180
  %v1182 = vmul.f32 %v1181, 0.6931472
  %v1183 = vmul.f32 -0.5, %v572
  %v1184 = vadd.f32 %v1183, 1.0
  %v1185 = vmul.f32 %v1184, %v572
  %v1186 = vand.u32 2147483647, %v572
  %vm1187 = vcmp.lt.f32.partialorder %v1186, 0.0004427343
  %v1188 = vsel %vm1187, %v1185, %v1182
  %v1189 = vadd.f32 %v574, 1.0
  %v1190 = vlog2.pop %v1189
  %v1191 = vmul.f32 %v1190, 0.6931472
  %v1192 = vmul.f32 -0.5, %v574
  %v1193 = vadd.f32 %v1192, 1.0
  %v1194 = vmul.f32 %v1193, %v574
  %v1195 = vand.u32 2147483647, %v574
  %vm1196 = vcmp.lt.f32.partialorder %v1195, 0.0004427343
  %v1197 = vsel %vm1196, %v1194, %v1191
  %v1198 = vadd.f32 %v576, 1.0
  %v1199 = vlog2.pop %v1198
  %v1200 = vmul.f32 %v1199, 0.6931472
  %v1201 = vmul.f32 -0.5, %v576
  %v1202 = vadd.f32 %v1201, 1.0
  %v1203 = vmul.f32 %v1202, %v576
  %v1204 = vand.u32 2147483647, %v576
  %vm1205 = vcmp.lt.f32.partialorder %v1204, 0.0004427343
  %v1206 = vsel %vm1205, %v1203, %v1200
  %v1207 = vadd.f32 %v578, 1.0
  %v1208 = vlog2.pop %v1207
  %v1209 = vmul.f32 %v1208, 0.6931472
  %v1210 = vmul.f32 -0.5, %v578
  %v1211 = vadd.f32 %v1210, 1.0
  %v1212 = vmul.f32 %v1211, %v578
  %v1213 = vand.u32 2147483647, %v578
  %vm1214 = vcmp.lt.f32.partialorder %v1213, 0.0004427343
  %v1215 = vsel %vm1214, %v1212, %v1209
  %v1216 = vadd.f32 %v580, 1.0
  %v1217 = vlog2.pop %v1216
  %v1218 = vmul.f32 %v1217, 0.6931472
  %v1219 = vmul.f32 -0.5, %v580
  %v1220 = vadd.f32 %v1219, 1.0
  %v1221 = vmul.f32 %v1220, %v580
  %v1222 = vand.u32 2147483647, %v580
  %vm1223 = vcmp.lt.f32.partialorder %v1222, 0.0004427343
  %v1224 = vsel %vm1223, %v1221, %v1218
  %v1225 = vadd.f32 %v582, 1.0
  %v1226 = vlog2.pop %v1225
  %v1227 = vmul.f32 %v1226, 0.6931472
  %v1228 = vmul.f32 -0.5, %v582
  %v1229 = vadd.f32 %v1228, 1.0
  %v1230 = vmul.f32 %v1229, %v582
  %v1231 = vand.u32 2147483647, %v582
  %vm1232 = vcmp.lt.f32.partialorder %v1231, 0.0004427343
  %v1233 = vsel %vm1232, %v1230, %v1227
  %v1234 = vadd.f32 %v584, 1.0
  %v1235 = vlog2.pop %v1234
  %v1236 = vmul.f32 %v1235, 0.6931472
  %v1237 = vmul.f32 -0.5, %v584
  %v1238 = vadd.f32 %v1237, 1.0
  %v1239 = vmul.f32 %v1238, %v584
  %v1240 = vand.u32 2147483647, %v584
  %vm1241 = vcmp.lt.f32.partialorder %v1240, 0.0004427343
  %v1242 = vsel %vm1241, %v1239, %v1236
  %v1243 = vadd.f32 %v586, 1.0
  %v1244 = vlog2.pop %v1243
  %v1245 = vmul.f32 %v1244, 0.6931472
  %v1246 = vmul.f32 -0.5, %v586
  %v1247 = vadd.f32 %v1246, 1.0
  %v1248 = vmul.f32 %v1247, %v586
  %v1249 = vand.u32 2147483647, %v586
  %vm1250 = vcmp.lt.f32.partialorder %v1249, 0.0004427343
  %v1251 = vsel %vm1250, %v1248, %v1245
  %v1252 = vadd.f32 %v588, 1.0
  %v1253 = vlog2.pop %v1252
  %v1254 = vmul.f32 %v1253, 0.6931472
  %v1255 = vmul.f32 -0.5, %v588
  %v1256 = vadd.f32 %v1255, 1.0
  %v1257 = vmul.f32 %v1256, %v588
  %v1258 = vand.u32 2147483647, %v588
  %vm1259 = vcmp.lt.f32.partialorder %v1258, 0.0004427343
  %v1260 = vsel %vm1259, %v1257, %v1254
  %v1261 = vadd.f32 %v590, 1.0
  %v1262 = vlog2.pop %v1261
  %v1263 = vmul.f32 %v1262, 0.6931472
  %v1264 = vmul.f32 -0.5, %v590
  %v1265 = vadd.f32 %v1264, 1.0
  %v1266 = vmul.f32 %v1265, %v590
  %v1267 = vand.u32 2147483647, %v590
  %vm1268 = vcmp.lt.f32.partialorder %v1267, 0.0004427343
  %v1269 = vsel %vm1268, %v1266, %v1263
  %v1270 = vadd.f32 %v592, 1.0
  %v1271 = vlog2.pop %v1270
  %v1272 = vmul.f32 %v1271, 0.6931472
  %v1273 = vmul.f32 -0.5, %v592
  %v1274 = vadd.f32 %v1273, 1.0
  %v1275 = vmul.f32 %v1274, %v592
  %v1276 = vand.u32 2147483647, %v592
  %vm1277 = vcmp.lt.f32.partialorder %v1276, 0.0004427343
  %v1278 = vsel %vm1277, %v1275, %v1272
  %v1279 = vadd.f32 %v594, 1.0
  %v1280 = vlog2.pop %v1279
  %v1281 = vmul.f32 %v1280, 0.6931472
  %v1282 = vmul.f32 -0.5, %v594
  %v1283 = vadd.f32 %v1282, 1.0
  %v1284 = vmul.f32 %v1283, %v594
  %v1285 = vand.u32 2147483647, %v594
  %vm1286 = vcmp.lt.f32.partialorder %v1285, 0.0004427343
  %v1287 = vsel %vm1286, %v1284, %v1281
  %v1288 = vadd.f32 %v596, 1.0
  %v1289 = vlog2.pop %v1288
  %v1290 = vmul.f32 %v1289, 0.6931472
  %v1291 = vmul.f32 -0.5, %v596
  %v1292 = vadd.f32 %v1291, 1.0
  %v1293 = vmul.f32 %v1292, %v596
  %v1294 = vand.u32 2147483647, %v596
  %vm1295 = vcmp.lt.f32.partialorder %v1294, 0.0004427343
  %v1296 = vsel %vm1295, %v1293, %v1290
  %v1297 = vadd.f32 %v598, 1.0
  %v1298 = vlog2.pop %v1297
  %v1299 = vmul.f32 %v1298, 0.6931472
  %v1300 = vmul.f32 -0.5, %v598
  %v1301 = vadd.f32 %v1300, 1.0
  %v1302 = vmul.f32 %v1301, %v598
  %v1303 = vand.u32 2147483647, %v598
  %vm1304 = vcmp.lt.f32.partialorder %v1303, 0.0004427343
  %v1305 = vsel %vm1304, %v1302, %v1299
  %v1306 = vadd.f32 %v600, 1.0
  %v1307 = vlog2.pop %v1306
  %v1308 = vmul.f32 %v1307, 0.6931472
  %v1309 = vmul.f32 -0.5, %v600
  %v1310 = vadd.f32 %v1309, 1.0
  %v1311 = vmul.f32 %v1310, %v600
  %v1312 = vand.u32 2147483647, %v600
  %vm1313 = vcmp.lt.f32.partialorder %v1312, 0.0004427343
  %v1314 = vsel %vm1313, %v1311, %v1308
  %v1315 = vadd.f32 %v602, 1.0
  %v1316 = vlog2.pop %v1315
  %v1317 = vmul.f32 %v1316, 0.6931472
  %v1318 = vmul.f32 -0.5, %v602
  %v1319 = vadd.f32 %v1318, 1.0
  %v1320 = vmul.f32 %v1319, %v602
  %v1321 = vand.u32 2147483647, %v602
  %vm1322 = vcmp.lt.f32.partialorder %v1321, 0.0004427343
  %v1323 = vsel %vm1322, %v1320, %v1317
  %v1324 = vadd.f32 %v604, 1.0
  %v1325 = vlog2.pop %v1324
  %v1326 = vmul.f32 %v1325, 0.6931472
  %v1327 = vmul.f32 -0.5, %v604
  %v1328 = vadd.f32 %v1327, 1.0
  %v1329 = vmul.f32 %v1328, %v604
  %v1330 = vand.u32 2147483647, %v604
  %vm1331 = vcmp.lt.f32.partialorder %v1330, 0.0004427343
  %v1332 = vsel %vm1331, %v1329, %v1326
  %v1333 = vadd.f32 %v606, 1.0
  %v1334 = vlog2.pop %v1333
  %v1335 = vmul.f32 %v1334, 0.6931472
  %v1336 = vmul.f32 -0.5, %v606
  %v1337 = vadd.f32 %v1336, 1.0
  %v1338 = vmul.f32 %v1337, %v606
  %v1339 = vand.u32 2147483647, %v606
  %vm1340 = vcmp.lt.f32.partialorder %v1339, 0.0004427343
  %v1341 = vsel %vm1340, %v1338, %v1335
  %v1342 = vadd.f32 %v608, 1.0
  %v1343 = vlog2.pop %v1342
  %v1344 = vmul.f32 %v1343, 0.6931472
  %v1345 = vmul.f32 -0.5, %v608
  %v1346 = vadd.f32 %v1345, 1.0
  %v1347 = vmul.f32 %v1346, %v608
  %v1348 = vand.u32 2147483647, %v608
  %vm1349 = vcmp.lt.f32.partialorder %v1348, 0.0004427343
  %v1350 = vsel %vm1349, %v1347, %v1344
  %v1351 = vadd.f32 %v610, 1.0
  %v1352 = vlog2.pop %v1351
  %v1353 = vmul.f32 %v1352, 0.6931472
  %v1354 = vmul.f32 -0.5, %v610
  %v1355 = vadd.f32 %v1354, 1.0
  %v1356 = vmul.f32 %v1355, %v610
  %v1357 = vand.u32 2147483647, %v610
  %vm1358 = vcmp.lt.f32.partialorder %v1357, 0.0004427343
  %v1359 = vsel %vm1358, %v1356, %v1353
  %v1360 = vadd.f32 %v612, 1.0
  %v1361 = vlog2.pop %v1360
  %v1362 = vmul.f32 %v1361, 0.6931472
  %v1363 = vmul.f32 -0.5, %v612
  %v1364 = vadd.f32 %v1363, 1.0
  %v1365 = vmul.f32 %v1364, %v612
  %v1366 = vand.u32 2147483647, %v612
  %vm1367 = vcmp.lt.f32.partialorder %v1366, 0.0004427343
  %v1368 = vsel %vm1367, %v1365, %v1362
  %v1369 = vadd.f32 %v614, 1.0
  %v1370 = vlog2.pop %v1369
  %v1371 = vmul.f32 %v1370, 0.6931472
  %v1372 = vmul.f32 -0.5, %v614
  %v1373 = vadd.f32 %v1372, 1.0
  %v1374 = vmul.f32 %v1373, %v614
  %v1375 = vand.u32 2147483647, %v614
  %vm1376 = vcmp.lt.f32.partialorder %v1375, 0.0004427343
  %v1377 = vsel %vm1376, %v1374, %v1371
  %v1378 = vadd.f32 %v616, 1.0
  %v1379 = vlog2.pop %v1378
  %v1380 = vmul.f32 %v1379, 0.6931472
  %v1381 = vmul.f32 -0.5, %v616
  %v1382 = vadd.f32 %v1381, 1.0
  %v1383 = vmul.f32 %v1382, %v616
  %v1384 = vand.u32 2147483647, %v616
  %vm1385 = vcmp.lt.f32.partialorder %v1384, 0.0004427343
  %v1386 = vsel %vm1385, %v1383, %v1380
  %v1387 = vadd.f32 %v618, 1.0
  %v1388 = vlog2.pop %v1387
  %v1389 = vmul.f32 %v1388, 0.6931472
  %v1390 = vmul.f32 -0.5, %v618
  %v1391 = vadd.f32 %v1390, 1.0
  %v1392 = vmul.f32 %v1391, %v618
  %v1393 = vand.u32 2147483647, %v618
  %vm1394 = vcmp.lt.f32.partialorder %v1393, 0.0004427343
  %v1395 = vsel %vm1394, %v1392, %v1389
  %v1396 = vadd.f32 %v620, 1.0
  %v1397 = vlog2.pop %v1396
  %v1398 = vmul.f32 %v1397, 0.6931472
  %v1399 = vmul.f32 -0.5, %v620
  %v1400 = vadd.f32 %v1399, 1.0
  %v1401 = vmul.f32 %v1400, %v620
  %v1402 = vand.u32 2147483647, %v620
  %vm1403 = vcmp.lt.f32.partialorder %v1402, 0.0004427343
  %v1404 = vsel %vm1403, %v1401, %v1398
  %v1405 = vadd.f32 %v622, 1.0
  %v1406 = vlog2.pop %v1405
  %v1407 = vmul.f32 %v1406, 0.6931472
  %v1408 = vmul.f32 -0.5, %v622
  %v1409 = vadd.f32 %v1408, 1.0
  %v1410 = vmul.f32 %v1409, %v622
  %v1411 = vand.u32 2147483647, %v622
  %vm1412 = vcmp.lt.f32.partialorder %v1411, 0.0004427343
  %v1413 = vsel %vm1412, %v1410, %v1407
  %v1414 = vadd.f32 %v624, 1.0
  %v1415 = vlog2.pop %v1414
  %v1416 = vmul.f32 %v1415, 0.6931472
  %v1417 = vmul.f32 -0.5, %v624
  %v1418 = vadd.f32 %v1417, 1.0
  %v1419 = vmul.f32 %v1418, %v624
  %v1420 = vand.u32 2147483647, %v624
  %vm1421 = vcmp.lt.f32.partialorder %v1420, 0.0004427343
  %v1422 = vsel %vm1421, %v1419, %v1416
  %v1423 = vadd.f32 %v626, 1.0
  %v1424 = vlog2.pop %v1423
  %v1425 = vmul.f32 %v1424, 0.6931472
  %v1426 = vmul.f32 -0.5, %v626
  %v1427 = vadd.f32 %v1426, 1.0
  %v1428 = vmul.f32 %v1427, %v626
  %v1429 = vand.u32 2147483647, %v626
  %vm1430 = vcmp.lt.f32.partialorder %v1429, 0.0004427343
  %v1431 = vsel %vm1430, %v1428, %v1425
  %v1432 = vadd.f32 %v628, 1.0
  %v1433 = vlog2.pop %v1432
  %v1434 = vmul.f32 %v1433, 0.6931472
  %v1435 = vmul.f32 -0.5, %v628
  %v1436 = vadd.f32 %v1435, 1.0
  %v1437 = vmul.f32 %v1436, %v628
  %v1438 = vand.u32 2147483647, %v628
  %vm1439 = vcmp.lt.f32.partialorder %v1438, 0.0004427343
  %v1440 = vsel %vm1439, %v1437, %v1434
  %v1441 = vadd.f32 %v630, 1.0
  %v1442 = vlog2.pop %v1441
  %v1443 = vmul.f32 %v1442, 0.6931472
  %v1444 = vmul.f32 -0.5, %v630
  %v1445 = vadd.f32 %v1444, 1.0
  %v1446 = vmul.f32 %v1445, %v630
  %v1447 = vand.u32 2147483647, %v630
  %vm1448 = vcmp.lt.f32.partialorder %v1447, 0.0004427343
  %v1449 = vsel %vm1448, %v1446, %v1443
  %v1450 = vadd.f32 %v632, 1.0
  %v1451 = vlog2.pop %v1450
  %v1452 = vmul.f32 %v1451, 0.6931472
  %v1453 = vmul.f32 -0.5, %v632
  %v1454 = vadd.f32 %v1453, 1.0
  %v1455 = vmul.f32 %v1454, %v632
  %v1456 = vand.u32 2147483647, %v632
  %vm1457 = vcmp.lt.f32.partialorder %v1456, 0.0004427343
  %v1458 = vsel %vm1457, %v1455, %v1452
  %v1459 = vadd.f32 %v634, 1.0
  %v1460 = vlog2.pop %v1459
  %v1461 = vmul.f32 %v1460, 0.6931472
  %v1462 = vmul.f32 -0.5, %v634
  %v1463 = vadd.f32 %v1462, 1.0
  %v1464 = vmul.f32 %v1463, %v634
  %v1465 = vand.u32 2147483647, %v634
  %vm1466 = vcmp.lt.f32.partialorder %v1465, 0.0004427343
  %v1467 = vsel %vm1466, %v1464, %v1461
  %v1468 = vadd.f32 %v636, 1.0
  %v1469 = vlog2.pop %v1468
  %v1470 = vmul.f32 %v1469, 0.6931472
  %v1471 = vmul.f32 -0.5, %v636
  %v1472 = vadd.f32 %v1471, 1.0
  %v1473 = vmul.f32 %v1472, %v636
  %v1474 = vand.u32 2147483647, %v636
  %vm1475 = vcmp.lt.f32.partialorder %v1474, 0.0004427343
  %v1476 = vsel %vm1475, %v1473, %v1470
  %v1477 = vadd.f32 %v638, 1.0
  %v1478 = vlog2.pop %v1477
  %v1479 = vmul.f32 %v1478, 0.6931472
  %v1480 = vmul.f32 -0.5, %v638
  %v1481 = vadd.f32 %v1480, 1.0
  %v1482 = vmul.f32 %v1481, %v638
  %v1483 = vand.u32 2147483647, %v638
  %vm1484 = vcmp.lt.f32.partialorder %v1483, 0.0004427343
  %v1485 = vsel %vm1484, %v1482, %v1479
  %v1486 = vadd.f32 %v640, 1.0
  %v1487 = vlog2.pop %v1486
  %v1488 = vmul.f32 %v1487, 0.6931472
  %v1489 = vmul.f32 -0.5, %v640
  %v1490 = vadd.f32 %v1489, 1.0
  %v1491 = vmul.f32 %v1490, %v640
  %v1492 = vand.u32 2147483647, %v640
  %vm1493 = vcmp.lt.f32.partialorder %v1492, 0.0004427343
  %v1494 = vsel %vm1493, %v1491, %v1488
  %v1495 = vadd.f32 %v642, 1.0
  %v1496 = vlog2.pop %v1495
  %v1497 = vmul.f32 %v1496, 0.6931472
  %v1498 = vmul.f32 -0.5, %v642
  %v1499 = vadd.f32 %v1498, 1.0
  %v1500 = vmul.f32 %v1499, %v642
  %v1501 = vand.u32 2147483647, %v642
  %vm1502 = vcmp.lt.f32.partialorder %v1501, 0.0004427343
  %v1503 = vsel %vm1502, %v1500, %v1497
  %v1504 = vadd.f32 %v644, 1.0
  %v1505 = vlog2.pop %v1504
  %v1506 = vmul.f32 %v1505, 0.6931472
  %v1507 = vmul.f32 -0.5, %v644
  %v1508 = vadd.f32 %v1507, 1.0
  %v1509 = vmul.f32 %v1508, %v644
  %v1510 = vand.u32 2147483647, %v644
  %vm1511 = vcmp.lt.f32.partialorder %v1510, 0.0004427343
  %v1512 = vsel %vm1511, %v1509, %v1506
  %v1513 = vadd.f32 %v646, 1.0
  %v1514 = vlog2.pop %v1513
  %v1515 = vmul.f32 %v1514, 0.6931472
  %v1516 = vmul.f32 -0.5, %v646
  %v1517 = vadd.f32 %v1516, 1.0
  %v1518 = vmul.f32 %v1517, %v646
  %v1519 = vand.u32 2147483647, %v646
  %vm1520 = vcmp.lt.f32.partialorder %v1519, 0.0004427343
  %v1521 = vsel %vm1520, %v1518, %v1515
  %v1522 = vadd.f32 %v648, 1.0
  %v1523 = vlog2.pop %v1522
  %v1524 = vmul.f32 %v1523, 0.6931472
  %v1525 = vmul.f32 -0.5, %v648
  %v1526 = vadd.f32 %v1525, 1.0
  %v1527 = vmul.f32 %v1526, %v648
  %v1528 = vand.u32 2147483647, %v648
  %vm1529 = vcmp.lt.f32.partialorder %v1528, 0.0004427343
  %v1530 = vsel %vm1529, %v1527, %v1524
  %v1531 = vadd.f32 %v650, 1.0
  %v1532 = vlog2.pop %v1531
  %v1533 = vmul.f32 %v1532, 0.6931472
  %v1534 = vmul.f32 -0.5, %v650
  %v1535 = vadd.f32 %v1534, 1.0
  %v1536 = vmul.f32 %v1535, %v650
  %v1537 = vand.u32 2147483647, %v650
  %vm1538 = vcmp.lt.f32.partialorder %v1537, 0.0004427343
  %v1539 = vsel %vm1538, %v1536, %v1533
  %v1540 = vadd.f32 %v652, 1.0
  %v1541 = vlog2.pop %v1540
  %v1542 = vmul.f32 %v1541, 0.6931472
  %v1543 = vmul.f32 -0.5, %v652
  %v1544 = vadd.f32 %v1543, 1.0
  %v1545 = vmul.f32 %v1544, %v652
  %v1546 = vand.u32 2147483647, %v652
  %vm1547 = vcmp.lt.f32.partialorder %v1546, 0.0004427343
  %v1548 = vsel %vm1547, %v1545, %v1542
  %v1549 = vadd.f32 %v654, 1.0
  %v1550 = vlog2.pop %v1549
  %v1551 = vmul.f32 %v1550, 0.6931472
  %v1552 = vmul.f32 -0.5, %v654
  %v1553 = vadd.f32 %v1552, 1.0
  %v1554 = vmul.f32 %v1553, %v654
  %v1555 = vand.u32 2147483647, %v654
  %vm1556 = vcmp.lt.f32.partialorder %v1555, 0.0004427343
  %v1557 = vsel %vm1556, %v1554, %v1551
  %v1558 = vadd.f32 %v656, 1.0
  %v1559 = vlog2.pop %v1558
  %v1560 = vmul.f32 %v1559, 0.6931472
  %v1561 = vmul.f32 -0.5, %v656
  %v1562 = vadd.f32 %v1561, 1.0
  %v1563 = vmul.f32 %v1562, %v656
  %v1564 = vand.u32 2147483647, %v656
  %vm1565 = vcmp.lt.f32.partialorder %v1564, 0.0004427343
  %v1566 = vsel %vm1565, %v1563, %v1560
  %v1567 = vadd.f32 %v658, 1.0
  %v1568 = vlog2.pop %v1567
  %v1569 = vmul.f32 %v1568, 0.6931472
  %v1570 = vmul.f32 -0.5, %v658
  %v1571 = vadd.f32 %v1570, 1.0
  %v1572 = vmul.f32 %v1571, %v658
  %v1573 = vand.u32 2147483647, %v658
  %vm1574 = vcmp.lt.f32.partialorder %v1573, 0.0004427343
  %v1575 = vsel %vm1574, %v1572, %v1569
  %v1576 = vadd.f32 %v660, 1.0
  %v1577 = vlog2.pop %v1576
  %v1578 = vmul.f32 %v1577, 0.6931472
  %v1579 = vmul.f32 -0.5, %v660
  %v1580 = vadd.f32 %v1579, 1.0
  %v1581 = vmul.f32 %v1580, %v660
  %v1582 = vand.u32 2147483647, %v660
  %vm1583 = vcmp.lt.f32.partialorder %v1582, 0.0004427343
  %v1584 = vsel %vm1583, %v1581, %v1578
  %v1585 = vadd.f32 %v662, 1.0
  %v1586 = vlog2.pop %v1585
  %v1587 = vmul.f32 %v1586, 0.6931472
  %v1588 = vmul.f32 -0.5, %v662
  %v1589 = vadd.f32 %v1588, 1.0
  %v1590 = vmul.f32 %v1589, %v662
  %v1591 = vand.u32 2147483647, %v662
  %vm1592 = vcmp.lt.f32.partialorder %v1591, 0.0004427343
  %v1593 = vsel %vm1592, %v1590, %v1587
  %v1594 = vadd.f32 %v664, 1.0
  %v1595 = vlog2.pop %v1594
  %v1596 = vmul.f32 %v1595, 0.6931472
  %v1597 = vmul.f32 -0.5, %v664
  %v1598 = vadd.f32 %v1597, 1.0
  %v1599 = vmul.f32 %v1598, %v664
  %v1600 = vand.u32 2147483647, %v664
  %vm1601 = vcmp.lt.f32.partialorder %v1600, 0.0004427343
  %v1602 = vsel %vm1601, %v1599, %v1596
  %v1603 = vadd.f32 %v666, 1.0
  %v1604 = vlog2.pop %v1603
  %v1605 = vmul.f32 %v1604, 0.6931472
  %v1606 = vmul.f32 -0.5, %v666
  %v1607 = vadd.f32 %v1606, 1.0
  %v1608 = vmul.f32 %v1607, %v666
  %v1609 = vand.u32 2147483647, %v666
  %vm1610 = vcmp.lt.f32.partialorder %v1609, 0.0004427343
  %v1611 = vsel %vm1610, %v1608, %v1605
  %v1612 = vadd.f32 %v668, 1.0
  %v1613 = vlog2.pop %v1612
  %v1614 = vmul.f32 %v1613, 0.6931472
  %v1615 = vmul.f32 -0.5, %v668
  %v1616 = vadd.f32 %v1615, 1.0
  %v1617 = vmul.f32 %v1616, %v668
  %v1618 = vand.u32 2147483647, %v668
  %vm1619 = vcmp.lt.f32.partialorder %v1618, 0.0004427343
  %v1620 = vsel %vm1619, %v1617, %v1614
  %v1621 = vadd.f32 %v670, 1.0
  %v1622 = vlog2.pop %v1621
  %v1623 = vmul.f32 %v1622, 0.6931472
  %v1624 = vmul.f32 -0.5, %v670
  %v1625 = vadd.f32 %v1624, 1.0
  %v1626 = vmul.f32 %v1625, %v670
  %v1627 = vand.u32 2147483647, %v670
  %vm1628 = vcmp.lt.f32.partialorder %v1627, 0.0004427343
  %v1629 = vsel %vm1628, %v1626, %v1623
  %v1630 = vadd.f32 %v672, 1.0
  %v1631 = vlog2.pop %v1630
  %v1632 = vmul.f32 %v1631, 0.6931472
  %v1633 = vmul.f32 -0.5, %v672
  %v1634 = vadd.f32 %v1633, 1.0
  %v1635 = vmul.f32 %v1634, %v672
  %v1636 = vand.u32 2147483647, %v672
  %vm1637 = vcmp.lt.f32.partialorder %v1636, 0.0004427343
  %v1638 = vsel %vm1637, %v1635, %v1632
  %v1639 = vadd.f32 %v674, 1.0
  %v1640 = vlog2.pop %v1639
  %v1641 = vmul.f32 %v1640, 0.6931472
  %v1642 = vmul.f32 -0.5, %v674
  %v1643 = vadd.f32 %v1642, 1.0
  %v1644 = vmul.f32 %v1643, %v674
  %v1645 = vand.u32 2147483647, %v674
  %vm1646 = vcmp.lt.f32.partialorder %v1645, 0.0004427343
  %v1647 = vsel %vm1646, %v1644, %v1641
  %v1648 = vadd.f32 %v676, 1.0
  %v1649 = vlog2.pop %v1648
  %v1650 = vmul.f32 %v1649, 0.6931472
  %v1651 = vmul.f32 -0.5, %v676
  %v1652 = vadd.f32 %v1651, 1.0
  %v1653 = vmul.f32 %v1652, %v676
  %v1654 = vand.u32 2147483647, %v676
  %vm1655 = vcmp.lt.f32.partialorder %v1654, 0.0004427343
  %v1656 = vsel %vm1655, %v1653, %v1650
  %v1657 = vadd.f32 %v678, 1.0
  %v1658 = vlog2.pop %v1657
  %v1659 = vmul.f32 %v1658, 0.6931472
  %v1660 = vmul.f32 -0.5, %v678
  %v1661 = vadd.f32 %v1660, 1.0
  %v1662 = vmul.f32 %v1661, %v678
  %v1663 = vand.u32 2147483647, %v678
  %vm1664 = vcmp.lt.f32.partialorder %v1663, 0.0004427343
  %v1665 = vsel %vm1664, %v1662, %v1659
  %v1666 = vadd.f32 %v680, 1.0
  %v1667 = vlog2.pop %v1666
  %v1668 = vmul.f32 %v1667, 0.6931472
  %v1669 = vmul.f32 -0.5, %v680
  %v1670 = vadd.f32 %v1669, 1.0
  %v1671 = vmul.f32 %v1670, %v680
  %v1672 = vand.u32 2147483647, %v680
  %vm1673 = vcmp.lt.f32.partialorder %v1672, 0.0004427343
  %v1674 = vsel %vm1673, %v1671, %v1668
  %v1675 = vadd.f32 %v682, 1.0
  %v1676 = vlog2.pop %v1675
  %v1677 = vmul.f32 %v1676, 0.6931472
  %v1678 = vmul.f32 -0.5, %v682
  %v1679 = vadd.f32 %v1678, 1.0
  %v1680 = vmul.f32 %v1679, %v682
  %v1681 = vand.u32 2147483647, %v682
  %vm1682 = vcmp.lt.f32.partialorder %v1681, 0.0004427343
  %v1683 = vsel %vm1682, %v1680, %v1677
  %v1684 = vadd.f32 %v684, 1.0
  %v1685 = vlog2.pop %v1684
  %v1686 = vmul.f32 %v1685, 0.6931472
  %v1687 = vmul.f32 -0.5, %v684
  %v1688 = vadd.f32 %v1687, 1.0
  %v1689 = vmul.f32 %v1688, %v684
  %v1690 = vand.u32 2147483647, %v684
  %vm1691 = vcmp.lt.f32.partialorder %v1690, 0.0004427343
  %v1692 = vsel %vm1691, %v1689, %v1686
  %v1693 = vadd.f32 %v125, %v693
  %v1694 = vadd.f32 %v126, %v702
  %v1695 = vadd.f32 %v127, %v711
  %v1696 = vadd.f32 %v128, %v720
  %v1697 = vadd.f32 %v129, %v729
  %v1698 = vadd.f32 %v130, %v738
  %v1699 = vadd.f32 %v131, %v747
  %v1700 = vadd.f32 %v132, %v756
  %v1701 = vadd.f32 %v133, %v765
  %v1702 = vadd.f32 %v134, %v774
  %v1703 = vadd.f32 %v135, %v783
  %v1704 = vadd.f32 %v136, %v792
  %v1705 = vadd.f32 %v137, %v801
  %v1706 = vadd.f32 %v138, %v810
  %v1707 = vadd.f32 %v139, %v819
  %v1708 = vadd.f32 %v140, %v828
  %v1709 = vadd.f32 %v141, %v837
  %v1710 = vadd.f32 %v142, %v846
  %v1711 = vadd.f32 %v143, %v855
  %v1712 = vadd.f32 %v144, %v864
  %v1713 = vadd.f32 %v145, %v873
  %v1714 = vadd.f32 %v146, %v882
  %v1715 = vadd.f32 %v147, %v891
  %v1716 = vadd.f32 %v148, %v900
  %v1717 = vadd.f32 %v149, %v909
  %v1718 = vadd.f32 %v150, %v918
  %v1719 = vadd.f32 %v151, %v927
  %v1720 = vadd.f32 %v152, %v936
  %v1721 = vadd.f32 %v153, %v945
  %v1722 = vadd.f32 %v154, %v954
  %v1723 = vadd.f32 %v155, %v963
  %v1724 = vadd.f32 %v156, %v972
  %v1725 = vadd.f32 %v157, %v981
  %v1726 = vadd.f32 %v158, %v990
  %v1727 = vadd.f32 %v159, %v999
  %v1728 = vadd.f32 %v160, %v1008
  %v1729 = vadd.f32 %v161, %v1017
  %v1730 = vadd.f32 %v162, %v1026
  %v1731 = vadd.f32 %v163, %v1035
  %v1732 = vadd.f32 %v164, %v1044
  %v1733 = vadd.f32 %v165, %v1053
  %v1734 = vadd.f32 %v166, %v1062
  %v1735 = vadd.f32 %v167, %v1071
  %v1736 = vadd.f32 %v168, %v1080
  %v1737 = vadd.f32 %v169, %v1089
  %v1738 = vadd.f32 %v170, %v1098
  %v1739 = vadd.f32 %v171, %v1107
  %v1740 = vadd.f32 %v172, %v1116
  %v1741 = vadd.f32 %v173, %v1125
  %v1742 = vadd.f32 %v174, %v1134
  %v1743 = vadd.f32 %v175, %v1143
  %v1744 = vadd.f32 %v176, %v1152
  %v1745 = vadd.f32 %v177, %v1161
  %v1746 = vadd.f32 %v178, %v1170
  %v1747 = vadd.f32 %v179, %v1179
  %v1748 = vadd.f32 %v180, %v1188
  %v1749 = vadd.f32 %v181, %v1197
  %v1750 = vadd.f32 %v182, %v1206
  %v1751 = vadd.f32 %v183, %v1215
  %v1752 = vadd.f32 %v184, %v1224
  %v1753 = vadd.f32 %v185, %v1233
  %v1754 = vadd.f32 %v186, %v1242
  %v1755 = vadd.f32 %v187, %v1251
  %v1756 = vadd.f32 %v188, %v1260
  %v1757 = vadd.f32 %v189, %v1269
  %v1758 = vadd.f32 %v190, %v1278
  %v1759 = vadd.f32 %v191, %v1287
  %v1760 = vadd.f32 %v192, %v1296
  %v1761 = vadd.f32 %v193, %v1305
  %v1762 = vadd.f32 %v194, %v1314
  %v1763 = vadd.f32 %v195, %v1323
  %v1764 = vadd.f32 %v196, %v1332
  %v1765 = vadd.f32 %v197, %v1341
  %v1766 = vadd.f32 %v198, %v1350
  %v1767 = vadd.f32 %v199, %v1359
  %v1768 = vadd.f32 %v200, %v1368
  %v1769 = vadd.f32 %v201, %v1377
  %v1770 = vadd.f32 %v202, %v1386
  %v1771 = vadd.f32 %v203, %v1395
  %v1772 = vadd.f32 %v204, %v1404
  %v1773 = vadd.f32 %v205, %v1413
  %v1774 = vadd.f32 %v206, %v1422
  %v1775 = vadd.f32 %v207, %v1431
  %v1776 = vadd.f32 %v208, %v1440
  %v1777 = vadd.f32 %v209, %v1449
  %v1778 = vadd.f32 %v210, %v1458
  %v1779 = vadd.f32 %v211, %v1467
  %v1780 = vadd.f32 %v212, %v1476
  %v1781 = vadd.f32 %v213, %v1485
  %v1782 = vadd.f32 %v214, %v1494
  %v1783 = vadd.f32 %v215, %v1503
  %v1784 = vadd.f32 %v216, %v1512
  %v1785 = vadd.f32 %v217, %v1521
  %v1786 = vadd.f32 %v218, %v1530
  %v1787 = vadd.f32 %v219, %v1539
  %v1788 = vadd.f32 %v220, %v1548
  %v1789 = vadd.f32 %v221, %v1557
  %v1790 = vadd.f32 %v222, %v1566
  %v1791 = vadd.f32 %v223, %v1575
  %v1792 = vadd.f32 %v224, %v1584
  %v1793 = vadd.f32 %v225, %v1593
  %v1794 = vadd.f32 %v226, %v1602
  %v1795 = vadd.f32 %v227, %v1611
  %v1796 = vadd.f32 %v228, %v1620
  %v1797 = vadd.f32 %v229, %v1629
  %v1798 = vadd.f32 %v230, %v1638
  %v1799 = vadd.f32 %v231, %v1647
  %v1800 = vadd.f32 %v232, %v1656
  %v1801 = vadd.f32 %v233, %v1665
  %v1802 = vadd.f32 %v234, %v1674
  %v1803 = vadd.f32 %v235, %v1683
  %v1804 = vadd.f32 %v236, %v1692
  %v1805 = vmul.f32 %v1693, %v1693
  %v1806 = vmul.f32 %v1694, %v1694
  %v1807 = vmul.f32 %v1695, %v1695
  %v1808 = vmul.f32 %v1696, %v1696
  %v1809 = vmul.f32 %v1697, %v1697
  %v1810 = vmul.f32 %v1698, %v1698
  %v1811 = vmul.f32 %v1699, %v1699
  %v1812 = vmul.f32 %v1700, %v1700
  %v1813 = vmul.f32 %v1701, %v1701
  %v1814 = vmul.f32 %v1702, %v1702
  %v1815 = vmul.f32 %v1703, %v1703
  %v1816 = vmul.f32 %v1704, %v1704
  %v1817 = vmul.f32 %v1705, %v1705
  %v1818 = vmul.f32 %v1706, %v1706
  %v1819 = vmul.f32 %v1707, %v1707
  %v1820 = vmul.f32 %v1708, %v1708
  %v1821 = vmul.f32 %v1709, %v1709
  %v1822 = vmul.f32 %v1710, %v1710
  %v1823 = vmul.f32 %v1711, %v1711
  %v1824 = vmul.f32 %v1712, %v1712
  %v1825 = vmul.f32 %v1713, %v1713
  %v1826 = vmul.f32 %v1714, %v1714
  %v1827 = vmul.f32 %v1715, %v1715
  %v1828 = vmul.f32 %v1716, %v1716
  %v1829 = vmul.f32 %v1717, %v1717
  %v1830 = vmul.f32 %v1718, %v1718
  %v1831 = vmul.f32 %v1719, %v1719
  %v1832 = vmul.f32 %v1720, %v1720
  %v1833 = vmul.f32 %v1721, %v1721
  %v1834 = vmul.f32 %v1722, %v1722
  %v1835 = vmul.f32 %v1723, %v1723
  %v1836 = vmul.f32 %v1724, %v1724
  %v1837 = vmul.f32 %v1725, %v1725
  %v1838 = vmul.f32 %v1726, %v1726
  %v1839 = vmul.f32 %v1727, %v1727
  %v1840 = vmul.f32 %v1728, %v1728
  %v1841 = vmul.f32 %v1729, %v1729
  %v1842 = vmul.f32 %v1730, %v1730
  %v1843 = vmul.f32 %v1731, %v1731
  %v1844 = vmul.f32 %v1732, %v1732
  %v1845 = vmul.f32 %v1733, %v1733
  %v1846 = vmul.f32 %v1734, %v1734
  %v1847 = vmul.f32 %v1735, %v1735
  %v1848 = vmul.f32 %v1736, %v1736
  %v1849 = vmul.f32 %v1737, %v1737
  %v1850 = vmul.f32 %v1738, %v1738
  %v1851 = vmul.f32 %v1739, %v1739
  %v1852 = vmul.f32 %v1740, %v1740
  %v1853 = vmul.f32 %v1741, %v1741
  %v1854 = vmul.f32 %v1742, %v1742
  %v1855 = vmul.f32 %v1743, %v1743
  %v1856 = vmul.f32 %v1744, %v1744
  %v1857 = vmul.f32 %v1745, %v1745
  %v1858 = vmul.f32 %v1746, %v1746
  %v1859 = vmul.f32 %v1747, %v1747
  %v1860 = vmul.f32 %v1748, %v1748
  %v1861 = vmul.f32 %v1749, %v1749
  %v1862 = vmul.f32 %v1750, %v1750
  %v1863 = vmul.f32 %v1751, %v1751
  %v1864 = vmul.f32 %v1752, %v1752
  %v1865 = vmul.f32 %v1753, %v1753
  %v1866 = vmul.f32 %v1754, %v1754
  %v1867 = vmul.f32 %v1755, %v1755
  %v1868 = vmul.f32 %v1756, %v1756
  %v1869 = vmul.f32 %v1757, %v1757
  %v1870 = vmul.f32 %v1758, %v1758
  %v1871 = vmul.f32 %v1759, %v1759
  %v1872 = vmul.f32 %v1760, %v1760
  %v1873 = vmul.f32 %v1761, %v1761
  %v1874 = vmul.f32 %v1762, %v1762
  %v1875 = vmul.f32 %v1763, %v1763
  %v1876 = vmul.f32 %v1764, %v1764
  %v1877 = vmul.f32 %v1765, %v1765
  %v1878 = vmul.f32 %v1766, %v1766
  %v1879 = vmul.f32 %v1767, %v1767
  %v1880 = vmul.f32 %v1768, %v1768
  %v1881 = vmul.f32 %v1769, %v1769
  %v1882 = vmul.f32 %v1770, %v1770
  %v1883 = vmul.f32 %v1771, %v1771
  %v1884 = vmul.f32 %v1772, %v1772
  %v1885 = vmul.f32 %v1773, %v1773
  %v1886 = vmul.f32 %v1774, %v1774
  %v1887 = vmul.f32 %v1775, %v1775
  %v1888 = vmul.f32 %v1776, %v1776
  %v1889 = vmul.f32 %v1777, %v1777
  %v1890 = vmul.f32 %v1778, %v1778
  %v1891 = vmul.f32 %v1779, %v1779
  %v1892 = vmul.f32 %v1780, %v1780
  %v1893 = vmul.f32 %v1781, %v1781
  %v1894 = vmul.f32 %v1782, %v1782
  %v1895 = vmul.f32 %v1783, %v1783
  %v1896 = vmul.f32 %v1784, %v1784
  %v1897 = vmul.f32 %v1785, %v1785
  %v1898 = vmul.f32 %v1786, %v1786
  %v1899 = vmul.f32 %v1787, %v1787
  %v1900 = vmul.f32 %v1788, %v1788
  %v1901 = vmul.f32 %v1789, %v1789
  %v1902 = vmul.f32 %v1790, %v1790
  %v1903 = vmul.f32 %v1791, %v1791
  %v1904 = vmul.f32 %v1792, %v1792
  %v1905 = vmul.f32 %v1793, %v1793
  %v1906 = vmul.f32 %v1794, %v1794
  %v1907 = vmul.f32 %v1795, %v1795
  %v1908 = vmul.f32 %v1796, %v1796
  %v1909 = vmul.f32 %v1797, %v1797
  %v1910 = vmul.f32 %v1798, %v1798
  %v1911 = vmul.f32 %v1799, %v1799
  %v1912 = vmul.f32 %v1800, %v1800
  %v1913 = vmul.f32 %v1801, %v1801
  %v1914 = vmul.f32 %v1802, %v1802
  %v1915 = vmul.f32 %v1803, %v1803
  %v1916 = vmul.f32 %v1804, %v1804
  %1917 = vst [vmem:[%s2] sm:$0xff] %v1805
  %1918 = vst [vmem:[%s2 + $0x8] sm:$0xff] %v1806
  %1919 = vst [vmem:[%s2 + $0x10] sm:$0xff] %v1807
  %1920 = vst [vmem:[%s2 + $0x18] sm:$0xff] %v1808
  %1921 = vst [vmem:[%s2 + $0x20] sm:$0xff] %v1809
  %1922 = vst [vmem:[%s2 + $0x28] sm:$0xff] %v1810
  %1923 = vst [vmem:[%s2 + $0x30] sm:$0xff] %v1811
  %1924 = vst [vmem:[%s2 + $0x38] sm:$0xff] %v1812
  %1925 = vst [vmem:[%s2 + $0x40] sm:$0xff] %v1813
  %1926 = vst [vmem:[%s2 + $0x48] sm:$0xff] %v1814
  %1927 = vst [vmem:[%s2 + $0x50] sm:$0xff] %v1815
  %1928 = vst [vmem:[%s2 + $0x58] sm:$0xff] %v1816
  %1929 = vst [vmem:[%s2 + $0x60] sm:$0xff] %v1817
  %1930 = vst [vmem:[%s2 + $0x68] sm:$0xff] %v1818
  %1931 = vst [vmem:[%s2 + $0x70] sm:$0xff] %v1819
  %1932 = vst [vmem:[%s2 + $0x78] sm:$0xff] %v1820
  %1933 = vst [vmem:[%s2 + $0x80] sm:$0xff] %v1821
  %1934 = vst [vmem:[%s2 + $0x88] sm:$0xff] %v1822
  %1935 = vst [vmem:[%s2 + $0x90] sm:$0xff] %v1823
  %1936 = vst [vmem:[%s2 + $0x98] sm:$0xff] %v1824
  %1937 = vst [vmem:[%s2 + $0xa0] sm:$0xff] %v1825
  %1938 = vst [vmem:[%s2 + $0xa8] sm:$0xff] %v1826
  %1939 = vst [vmem:[%s2 + $0xb0] sm:$0xff] %v1827
  %1940 = vst [vmem:[%s2 + $0xb8] sm:$0xff] %v1828
  %1941 = vst [vmem:[%s2 + $0xc0] sm:$0xff] %v1829
  %1942 = vst [vmem:[%s2 + $0xc8] sm:$0xff] %v1830
  %1943 = vst [vmem:[%s2 + $0xd0] sm:$0xff] %v1831
  %1944 = vst [vmem:[%s2 + $0xd8] sm:$0xff] %v1832
  %1945 = vst [vmem:[%s2 + $0xe0] sm:$0xff] %v1833
  %1946 = vst [vmem:[%s2 + $0xe8] sm:$0xff] %v1834
  %1947 = vst [vmem:[%s2 + $0xf0] sm:$0xff] %v1835
  %1948 = vst [vmem:[%s2 + $0xf8] sm:$0xff] %v1836
  %1949 = vst [vmem:[%s2 + $0x100] sm:$0xff] %v1837
  %1950 = vst [vmem:[%s2 + $0x108] sm:$0xff] %v1838
  %1951 = vst [vmem:[%s2 + $0x110] sm:$0xff] %v1839
  %1952 = vst [vmem:[%s2 + $0x118] sm:$0xff] %v1840
  %1953 = vst [vmem:[%s2 + $0x120] sm:$0xff] %v1841
  %1954 = vst [vmem:[%s2 + $0x128] sm:$0xff] %v1842
  %1955 = vst [vmem:[%s2 + $0x130] sm:$0xff] %v1843
  %1956 = vst [vmem:[%s2 + $0x138] sm:$0xff] %v1844
  %1957 = vst [vmem:[%s2 + $0x140] sm:$0xff] %v1845
  %1958 = vst [vmem:[%s2 + $0x148] sm:$0xff] %v1846
  %1959 = vst [vmem:[%s2 + $0x150] sm:$0xff] %v1847
  %1960 = vst [vmem:[%s2 + $0x158] sm:$0xff] %v1848
  %1961 = vst [vmem:[%s2 + $0x160] sm:$0xff] %v1849
  %1962 = vst [vmem:[%s2 + $0x168] sm:$0xff] %v1850
  %1963 = vst [vmem:[%s2 + $0x170] sm:$0xff] %v1851
  %1964 = vst [vmem:[%s2 + $0x178] sm:$0xff] %v1852
  %1965 = vst [vmem:[%s2 + $0x180] sm:$0xff] %v1853
  %1966 = vst [vmem:[%s2 + $0x188] sm:$0xff] %v1854
  %1967 = vst [vmem:[%s2 + $0x190] sm:$0xff] %v1855
  %1968 = vst [vmem:[%s2 + $0x198] sm:$0xff] %v1856
  %1969 = vst [vmem:[%s2 + $0x1a0] sm:$0xff] %v1857
  %1970 = vst [vmem:[%s2 + $0x1a8] sm:$0xff] %v1858
  %1971 = vst [vmem:[%s2 + $0x1b0] sm:$0xff] %v1859
  %1972 = vst [vmem:[%s2 + $0x1b8] sm:$0xff] %v1860
  %1973 = vst [vmem:[%s2 + $0x1c0] sm:$0xff] %v1861
  %1974 = vst [vmem:[%s2 + $0x1c8] sm:$0xff] %v1862
  %1975 = vst [vmem:[%s2 + $0x1d0] sm:$0xff] %v1863
  %1976 = vst [vmem:[%s2 + $0x1d8] sm:$0xff] %v1864
  %1977 = vst [vmem:[%s2 + $0x1e0] sm:$0xff] %v1865
  %1978 = vst [vmem:[%s2 + $0x1e8] sm:$0xff] %v1866
  %1979 = vst [vmem:[%s2 + $0x1f0] sm:$0xff] %v1867
  %1980 = vst [vmem:[%s2 + $0x1f8] sm:$0xff] %v1868
  %1981 = vst [vmem:[%s2 + $0x200] sm:$0xff] %v1869
  %1982 = vst [vmem:[%s2 + $0x208] sm:$0xff] %v1870
  %1983 = vst [vmem:[%s2 + $0x210] sm:$0xff] %v1871
  %1984 = vst [vmem:[%s2 + $0x218] sm:$0xff] %v1872
  %1985 = vst [vmem:[%s2 + $0x220] sm:$0xff] %v1873
  %1986 = vst [vmem:[%s2 + $0x228] sm:$0xff] %v1874
  %1987 = vst [vmem:[%s2 + $0x230] sm:$0xff] %v1875
  %1988 = vst [vmem:[%s2 + $0x238] sm:$0xff] %v1876
  %1989 = vst [vmem:[%s2 + $0x240] sm:$0xff] %v1877
  %1990 = vst [vmem:[%s2 + $0x248] sm:$0xff] %v1878
  %1991 = vst [vmem:[%s2 + $0x250] sm:$0xff] %v1879
  %1992 = vst [vmem:[%s2 + $0x258] sm:$0xff] %v1880
  %1993 = vst [vmem:[%s2 + $0x260] sm:$0xff] %v1881
  %1994 = vst [vmem:[%s2 + $0x268] sm:$0xff] %v1882
  %1995 = vst [vmem:[%s2 + $0x270] sm:$0xff] %v1883
  %1996 = vst [vmem:[%s2 + $0x278] sm:$0xff] %v1884
  %1997 = vst [vmem:[%s2 + $0x280] sm:$0xff] %v1885
  %1998 = vst [vmem:[%s2 + $0x288] sm:$0xff] %v1886
  %1999 = vst [vmem:[%s2 + $0x290] sm:$0xff] %v1887
  %2000 = vst [vmem:[%s2 + $0x298] sm:$0xff] %v1888
  %2001 = vst [vmem:[%s2 + $0x2a0] sm:$0xff] %v1889
  %2002 = vst [vmem:[%s2 + $0x2a8] sm:$0xff] %v1890
  %2003 = vst [vmem:[%s2 + $0x2b0] sm:$0xff] %v1891
  %2004 = vst [vmem:[%s2 + $0x2b8] sm:$0xff] %v1892
  %2005 = vst [vmem:[%s2 + $0x2c0] sm:$0xff] %v1893
  %2006 = vst [vmem:[%s2 + $0x2c8] sm:$0xff] %v1894
  %2007 = vst [vmem:[%s2 + $0x2d0] sm:$0xff] %v1895
  %2008 = vst [vmem:[%s2 + $0x2d8] sm:$0xff] %v1896
  %2009 = vst [vmem:[%s2 + $0x2e0] sm:$0xff] %v1897
  %2010 = vst [vmem:[%s2 + $0x2e8] sm:$0xff] %v1898
  %2011 = vst [vmem:[%s2 + $0x2f0] sm:$0xff] %v1899
  %2012 = vst [vmem:[%s2 + $0x2f8] sm:$0xff] %v1900
  %2013 = vst [vmem:[%s2 + $0x300] sm:$0xff] %v1901
  %2014 = vst [vmem:[%s2 + $0x308] sm:$0xff] %v1902
  %2015 = vst [vmem:[%s2 + $0x310] sm:$0xff] %v1903
  %2016 = vst [vmem:[%s2 + $0x318] sm:$0xff] %v1904
  %2017 = vst [vmem:[%s2 + $0x320] sm:$0xff] %v1905
  %2018 = vst [vmem:[%s2 + $0x328] sm:$0xff] %v1906
  %2019 = vst [vmem:[%s2 + $0x330] sm:$0xff] %v1907
  %2020 = vst [vmem:[%s2 + $0x338] sm:$0xff] %v1908
  %2021 = vst [vmem:[%s2 + $0x340] sm:$0xff] %v1909
  %2022 = vst [vmem:[%s2 + $0x348] sm:$0xff] %v1910
  %2023 = vst [vmem:[%s2 + $0x350] sm:$0xff] %v1911
  %2024 = vst [vmem:[%s2 + $0x358] sm:$0xff] %v1912
  %2025 = vst [vmem:[%s2 + $0x360] sm:$0xff] %v1913
  %2026 = vst [vmem:[%s2 + $0x368] sm:$0xff] %v1914
  %2027 = vst [vmem:[%s2 + $0x370] sm:$0xff] %v1915
  %2028 = vst [vmem:[%s2 + $0x378] sm:$0xff] %v1916
  %v2029 = vld [vmem:[%s1] sm:$0x1]
  %v2030 = vmax.f32 %v2029, 0.0
  %v2031 = vand.u32 2147483647, %v2029
  %v2032 = vsub.f32 0.0, %v2031
  %v2033 = vmul.f32 %v2032, 1.442695
  %v2034 = vpow.pop %v2033
  %v2035 = vadd.f32 %v2034, 1.0
  %v2036 = vlog2.pop %v2035
  %v2037 = vmul.f32 %v2036, 0.6931472
  %v2038 = vmul.f32 -0.5, %v2034
  %v2039 = vadd.f32 %v2038, 1.0
  %v2040 = vmul.f32 %v2039, %v2034
  %v2041 = vand.u32 2147483647, %v2034
  %vm2042 = vcmp.lt.f32.partialorder %v2041, 0.0004427343
  %v2043 = vsel %vm2042, %v2040, %v2037
  %v2044 = vadd.f32 %v2030, %v2043
  %v2045 = vmul.f32 %v2044, %v2044
  %2046 = vst [vmem:[%s3] sm:$0x1] %v2045
  // Predicated region
  $region10: #{variational_linear_forward.2} parent=0 // pred_check
    _
  $region11: #{variational_linear_forward.2} parent=0 // pred_check_branch
    %2048 = sbr.rel (0) target = $region13
  $region12: #{variational_linear_forward.2} parent=0 // pred_region
    _
  $region13: #{variational_linear_forward.2} parent=0 // pred_fallthru
    _
  // Predicated region
  $region14: #{variational_linear_forward.2} parent=0 // pred_check
    _
  $region15: #{variational_linear_forward.2} parent=0 // pred_check_branch
    %2050 = sbr.rel (0) target = $region17
  $region16: #{variational_linear_forward.2} parent=0 // pred_region
    _
  $region17: #{variational_linear_forward.2} parent=0 // pred_fallthru
    _
  // Predicated region
  $region18: #{variational_linear_forward.2} parent=0 // pred_check
    _
  $region19: #{variational_linear_forward.2} parent=0 // pred_check_branch
    %2052 = sbr.rel (0) target = $region21
  $region20: #{variational_linear_forward.2} parent=0 // pred_region
    _
  $region21: #{variational_linear_forward.2} parent=0 // pred_fallthru
    _
  // Predicated region
  $region22: #{variational_linear_forward.2} parent=0 // pred_check
    _
  $region23: #{variational_linear_forward.2} parent=0 // pred_check_branch
    %2054 = sbr.rel (0) target = $region25
  $region24: #{variational_linear_forward.2} parent=0 // pred_region
    _
  $region25: #{variational_linear_forward.2} parent=0 // pred_fallthru
    _

</llo_original>
